<compile_context>
chip_gen: v6e
topology: v6e:2x2x1
jax: 0.10.0
libtpu: 0.0.40
codegen_flags: <defaults>
</compile_context>

<pallas_src>
import functools

import jax
import jax.numpy as jnp
from jax import lax
from jax.experimental import pallas as pl
from jax.experimental.pallas import tpu as pltpu

_MIB = 1024 * 1024


# ---------------------------------------------------------------------------
# Generic fused 1x1-conv (+ bias) kernel, channels-first:  out = W @ x + b
#   x block: (1, Cin, tile_hw)  ->  out block: (1, Cout, tile_hw)   (lane-dense)
# ---------------------------------------------------------------------------
def _conv1x1_kernel(x_ref, w_ref, b_ref, o_ref):
    y = jnp.dot(w_ref[...], x_ref[0], preferred_element_type=jnp.float32)
    o_ref[0] = (y + b_ref[...]).astype(o_ref.dtype)


def _pick_conv_tile(n, cin, cout, itemsize, budget=8 * _MIB, cap=2048):
    """Largest lane tile <= cap that divides n, with double-buffered blocks under budget."""
    if n % 128 != 0:
        # TODO(synk): pad non-128-aligned H*W instead of taking one full-row block.
        return n
    per_lane = 2 * (cin + cout) * itemsize          # in + out blocks, double-buffered
    cap = min(cap, max(128, (budget // per_lane) // 128 * 128))
    if n <= cap:
        return n
    t = cap
    while n % t != 0:
        t -= 128
    return t


def conv1x1(x, w, b=None):
    """x: (B, Cin, HW), w: (Cout, Cin), b: (Cout,) or None  ->  (B, Cout, HW)."""
    B, Cin, N = x.shape
    Cout = w.shape[0]
    if b is None:
        b = jnp.zeros((Cout,), jnp.float32)
    b2 = jnp.asarray(b, jnp.float32).reshape(Cout, 1)
    itemsize = x.dtype.itemsize
    t = _pick_conv_tile(N, Cin, Cout, itemsize)
    grid = (B, N // t)
    flops = 2 * B * N * Cin * Cout
    bytes_accessed = itemsize * (B * Cin * N + Cout * Cin + B * Cout * N) + 4 * Cout
    # TODO(synk): pipeline_mode=pl.Buffered(3) on the activation input would deepen the DMA
    # pipeline of this tiny-compute kernel.
    return pl.pallas_call(
        _conv1x1_kernel,
        out_shape=jax.ShapeDtypeStruct((B, Cout, N), x.dtype),
        grid_spec=pltpu.PrefetchScalarGridSpec(
            num_scalar_prefetch=0,
            grid=grid,
            in_specs=[
                pl.BlockSpec((1, Cin, t), lambda i, j: (i, 0, j)),
                pl.BlockSpec((Cout, Cin), lambda i, j: (0, 0)),   # grid-invariant weight
                pl.BlockSpec((Cout, 1), lambda i, j: (0, 0)),     # grid-invariant bias
            ],
            out_specs=pl.BlockSpec((1, Cout, t), lambda i, j: (i, 0, j)),
        ),
        compiler_params=pltpu.CompilerParams(
            dimension_semantics=("parallel", "parallel"),
            vmem_limit_bytes=32 * _MIB),
        cost_estimate=pl.CostEstimate(
            flops=flops, transcendentals=0, bytes_accessed=bytes_accessed),
    )(x, w, b2)


# ---------------------------------------------------------------------------
# Fused ReLU linear attention kernels.
#   Per branch the folded weights are:
#     w_q  (heads*d,   Cin_b)   -> q rows of (self.linear o preceding 1x1 convs)
#     w_kv (heads*2d,  Cin_b)   -> k,v rows
#     w_comb (Cout, heads*d)    -> scale * W_proj_half @ W_down   (BN folded)
#     b_comb (Cout,)            -> bias carried once by branch 0
# ---------------------------------------------------------------------------
def _att_fused_kernel(*refs, heads, d, eps, has_acc):
    """Single pass per image: linear -> ReLU linear attention -> folded down/proj/BN."""
    if has_acc:
        (x_ref, wq_ref, bq_ref, wkv_ref, bkv_ref, wc_ref, bc_ref, acc_ref, o_ref) = refs
    else:
        (x_ref, wq_ref, bq_ref, wkv_ref, bkv_ref, wc_ref, bc_ref, o_ref) = refs
        acc_ref = None
    x = x_ref[0]                                                   # (Cin_b, HW)
    hw = x.shape[-1]
    tq = jnp.dot(wq_ref[...], x, preferred_element_type=jnp.float32) + bq_ref[...]
    tkv = jnp.dot(wkv_ref[...], x, preferred_element_type=jnp.float32) + bkv_ref[...]
    q = jnp.maximum(tq, 0.0).reshape(heads, d, hw)                 # kernel_func = ReLU
    tkv = tkv.reshape(heads, 2 * d, hw)
    k = jnp.maximum(tkv[:, :d, :], 0.0)
    v = tkv[:, d:, :]
    # Linear attention; the ones-column PyTorch pads onto v is carried as a k-row-sum, so no
    # sublane concatenate is needed.  (Contractions stay on MXU-friendly axes.)
    kv = jnp.einsum("hfn,hen->hfe", v, k, preferred_element_type=jnp.float32)    # (h, d, d)
    ksum = jnp.sum(k, axis=2, keepdims=True)                                     # (h, d, 1)
    num = jnp.einsum("hfe,hen->hfn", kv, q, preferred_element_type=jnp.float32)  # (h, d, hw)
    den = jnp.sum(q * ksum, axis=1, keepdims=True)                               # (h, 1, hw)
    # One reciprocal per lane instead of d divides (approx=True possible after tol re-check).
    att = (num * pl.reciprocal(den + eps, approx=False)).reshape(heads * d, hw)
    y = jnp.dot(wc_ref[...], att, preferred_element_type=jnp.float32) + bc_ref[...]
    if has_acc:
        y = y + acc_ref[0].astype(jnp.float32)
    o_ref[0] = y.astype(o_ref.dtype)


def _att_kv_accum_kernel(x_ref, wkv_ref, bkv_ref, kv_ref, ks_ref, *, heads, d):
    """Two-pass path, pass 1: accumulate kv = v k^T and ksum over HW tiles."""
    @pl.when(pl.program_id(1) == 0)
    def _():
        kv_ref[...] = jnp.zeros_like(kv_ref)
        ks_ref[...] = jnp.zeros_like(ks_ref)

    x = x_ref[0]                                                   # (Cin_b, thw)
    thw = x.shape[-1]
    tkv = (jnp.dot(wkv_ref[...], x, preferred_element_type=jnp.float32)
           + bkv_ref[...]).reshape(heads, 2 * d, thw)
    k = jnp.maximum(tkv[:, :d, :], 0.0)
    v = tkv[:, d:, :]
    kv_ref[0] += jnp.einsum("hfn,hen->hfe", v, k, preferred_element_type=jnp.float32)
    ks_ref[0] += jnp.sum(k, axis=2, keepdims=True)


def _att_apply_kernel(*refs, heads, d, eps, has_acc):
    """Two-pass path, pass 2: per-tile q, attention output, folded down/proj/BN."""
    if has_acc:
        (x_ref, kv_ref, ks_ref, wq_ref, bq_ref, wc_ref, bc_ref, acc_ref, o_ref) = refs
    else:
        (x_ref, kv_ref, ks_ref, wq_ref, bq_ref, wc_ref, bc_ref, o_ref) = refs
        acc_ref = None
    x = x_ref[0]
    thw = x.shape[-1]
    q = jnp.maximum(
        jnp.dot(wq_ref[...], x, preferred_element_type=jnp.float32) + bq_ref[...],
        0.0).reshape(heads, d, thw)
    kv = kv_ref[0]                    # (h, d, d)  f32
    ksum = ks_ref[0]                  # (h, d, 1)  f32
    num = jnp.einsum("hfe,hen->hfn", kv, q, preferred_element_type=jnp.float32)
    den = jnp.sum(q * ksum, axis=1, keepdims=True)
    att = (num * pl.reciprocal(den + eps, approx=False)).reshape(heads * d, thw)
    y = jnp.dot(wc_ref[...], att, preferred_element_type=jnp.float32) + bc_ref[...]
    if has_acc:
        y = y + acc_ref[0].astype(jnp.float32)
    o_ref[0] = y.astype(o_ref.dtype)


def _pick_att_tile(n, cin_b, cout, hd, itemsize, has_acc, max_tile_hw, budget=6 * _MIB):
    max_tile_hw = max(128, max_tile_hw // 128 * 128)
    per_lane = 2 * (cin_b + cout * (2 if has_acc else 1)) * itemsize + 4 * 4 * hd
    cap = max(128, min(max_tile_hw, (budget // per_lane) // 128 * 128))
    if n <= cap:
        return n
    t = cap
    while n % t != 0:
        t -= 128
    return t


def _att_single_pass(x, w_q, b_q, w_kv, b_kv, w_comb, b_comb, acc, *, heads, d, eps, vmem_est):
    B, Cin_b, N = x.shape
    Cout = w_comb.shape[0]
    hd = heads * d
    has_acc = acc is not None
    itemsize = x.dtype.itemsize
    kernel = functools.partial(_att_fused_kernel, heads=heads, d=d, eps=eps, has_acc=has_acc)
    in_specs = [
        pl.BlockSpec((1, Cin_b, N), lambda i: (i, 0, 0)),
        pl.BlockSpec((hd, Cin_b), lambda i: (0, 0)),
        pl.BlockSpec((hd, 1), lambda i: (0, 0)),
        pl.BlockSpec((2 * hd, Cin_b), lambda i: (0, 0)),
        pl.BlockSpec((2 * hd, 1), lambda i: (0, 0)),
        pl.BlockSpec((Cout, hd), lambda i: (0, 0)),
        pl.BlockSpec((Cout, 1), lambda i: (0, 0)),
    ]
    args = [x, w_q, b_q, w_kv, b_kv, w_comb, b_comb]
    if has_acc:
        # TODO(synk): input_output_aliases could reuse the acc buffer in place.
        in_specs.append(pl.BlockSpec((1, Cout, N), lambda i: (i, 0, 0)))
        args.append(acc)
    flops = 2 * B * N * (Cin_b * 3 * hd + 2 * hd * d + hd * Cout)
    bytes_accessed = (itemsize * (B * (Cin_b + Cout * (2 if has_acc else 1)) * N
                                  + w_q.size + w_kv.size + w_comb.size)
                      + 4 * (b_q.size + b_kv.size + b_comb.size))
    return pl.pallas_call(
        kernel,
        out_shape=jax.ShapeDtypeStruct((B, Cout, N), x.dtype),
        grid_spec=pltpu.PrefetchScalarGridSpec(
            num_scalar_prefetch=0,
            grid=(B,),
            in_specs=in_specs,
            out_specs=pl.BlockSpec((1, Cout, N), lambda i: (i, 0, 0)),
        ),
        compiler_params=pltpu.CompilerParams(
            dimension_semantics=("parallel",),
            vmem_limit_bytes=int(min(64 * _MIB, max(32 * _MIB, 2 * vmem_est)))),
        cost_estimate=pl.CostEstimate(
            flops=flops, transcendentals=0, bytes_accessed=bytes_accessed),
    )(*args)


def _att_two_pass(x, w_q, b_q, w_kv, b_kv, w_comb, b_comb, acc, *, heads, d, eps, max_tile_hw):
    B, Cin_b, N = x.shape
    Cout = w_comb.shape[0]
    hd = heads * d
    has_acc = acc is not None
    itemsize = x.dtype.itemsize
    t = _pick_att_tile(N, Cin_b, Cout, hd, itemsize, has_acc, max_tile_hw)
    T = N // t

    # ---- pass 1: accumulate kv and ksum over the HW reduction axis ----
    kv_flops = 2 * B * N * (Cin_b * 2 * hd + hd * d)
    kv_bytes = itemsize * (B * Cin_b * N + w_kv.size) + 4 * B * hd * (d + 1)
    kv, ks = pl.pallas_call(
        functools.partial(_att_kv_accum_kernel, heads=heads, d=d),
        out_shape=(jax.ShapeDtypeStruct((B, heads, d, d), jnp.float32),
                   jax.ShapeDtypeStruct((B, heads, d, 1), jnp.float32)),
        grid_spec=pltpu.PrefetchScalarGridSpec(
            num_scalar_prefetch=0,
            grid=(B, T),
            in_specs=[
                pl.BlockSpec((1, Cin_b, t), lambda i, j: (i, 0, j)),
                pl.BlockSpec((2 * hd, Cin_b), lambda i, j: (0, 0)),
                pl.BlockSpec((2 * hd, 1), lambda i, j: (0, 0)),
            ],
            out_specs=[
                pl.BlockSpec((1, heads, d, d), lambda i, j: (i, 0, 0, 0)),
                pl.BlockSpec((1, heads, d, 1), lambda i, j: (i, 0, 0, 0)),
            ],
        ),
        compiler_params=pltpu.CompilerParams(
            dimension_semantics=("parallel", "arbitrary"),
            vmem_limit_bytes=32 * _MIB),
        cost_estimate=pl.CostEstimate(
            flops=kv_flops, transcendentals=0, bytes_accessed=kv_bytes),
    )(x, w_kv, b_kv)

    # ---- pass 2: per-tile q / normalize / folded output weight ----
    kernel = functools.partial(_att_apply_kernel, heads=heads, d=d, eps=eps, has_acc=has_acc)
    in_specs = [
        pl.BlockSpec((1, Cin_b, t), lambda i, j: (i, 0, j)),
        pl.BlockSpec((1, heads, d, d), lambda i, j: (i, 0, 0, 0)),
        pl.BlockSpec((1, heads, d, 1), lambda i, j: (i, 0, 0, 0)),
        pl.BlockSpec((hd, Cin_b), lambda i, j: (0, 0)),
        pl.BlockSpec((hd, 1), lambda i, j: (0, 0)),
        pl.BlockSpec((Cout, hd), lambda i, j: (0, 0)),
        pl.BlockSpec((Cout, 1), lambda i, j: (0, 0)),
    ]
    args = [x, kv, ks, w_q, b_q, w_comb, b_comb]
    if has_acc:
        in_specs.append(pl.BlockSpec((1, Cout, t), lambda i, j: (i, 0, j)))
        args.append(acc)
    ap_flops = 2 * B * N * (Cin_b * hd + hd * d + hd * Cout)
    ap_bytes = (itemsize * (B * (Cin_b + Cout * (2 if has_acc else 1)) * N
                            + w_q.size + w_comb.size)
                + 4 * B * hd * (d + 1))
    return pl.pallas_call(
        kernel,
        out_shape=jax.ShapeDtypeStruct((B, Cout, N), x.dtype),
        grid_spec=pltpu.PrefetchScalarGridSpec(
            num_scalar_prefetch=0,
            grid=(B, T),
            in_specs=in_specs,
            out_specs=pl.BlockSpec((1, Cout, t), lambda i, j: (i, 0, j)),
        ),
        compiler_params=pltpu.CompilerParams(
            dimension_semantics=("parallel", "parallel"),
            vmem_limit_bytes=32 * _MIB),
        cost_estimate=pl.CostEstimate(
            flops=ap_flops, transcendentals=0, bytes_accessed=ap_bytes),
    )(*args)


def relu_linear_att_fused(x, w_q, b_q, w_kv, b_kv, w_comb, b_comb, *, heads, d, eps,
                          acc=None, force_two_pass=False, max_tile_hw=2048):
    """x: (B, Cin_b, HW) -> (B, Cout, HW) with linear_down/proj/BN folded into w_comb/b_comb."""
    B, Cin_b, N = x.shape
    Cout = w_comb.shape[0]
    hd = heads * d
    itemsize = x.dtype.itemsize
    b_q = jnp.asarray(b_q, jnp.float32).reshape(hd, 1)
    b_kv = jnp.asarray(b_kv, jnp.float32).reshape(2 * hd, 1)
    b_comb = jnp.asarray(b_comb, jnp.float32).reshape(Cout, 1)

    # Static estimate of the single-pass per-image VMEM footprint (f32 intermediates).
    est = (2 * N * (Cin_b + Cout * (2 if acc is not None else 1)) * itemsize
           + 4 * N * 6 * hd
           + itemsize * (w_q.size + w_kv.size + w_comb.size))
    use_single = (not force_two_pass) and est <= 24 * _MIB
    if N % 128 != 0:
        # TODO(synk): pad H*W to a lane multiple; until then fall back to the full-row kernel.
        use_single = True
    if use_single:
        return _att_single_pass(x, w_q, b_q, w_kv, b_kv, w_comb, b_comb, acc,
                                heads=heads, d=d, eps=eps, vmem_est=est)
    return _att_two_pass(x, w_q, b_q, w_kv, b_kv, w_comb, b_comb, acc,
                         heads=heads, d=d, eps=eps, max_tile_hw=max_tile_hw)


# ---------------------------------------------------------------------------
# Non-Pallas piece: 5x5 depthwise conv of the multi-scale aggregation branch.
# ---------------------------------------------------------------------------
def _depthwise_conv5x5(x_nchw, w_dw, *, highest=True):
    # TODO(synk): 5x5 depthwise conv needs spatial-halo BlockSpec plumbing in Pallas; it is a
    # tiny fraction of this block's FLOPs, so it is left to XLA here.
    C = x_nchw.shape[1]
    prec = jax.lax.Precision.HIGHEST if highest else jax.lax.Precision.DEFAULT
    return lax.conv_general_dilated(
        x_nchw, w_dw, window_strides=(1, 1), padding=((2, 2), (2, 2)),
        feature_group_count=C, dimension_numbers=("NCHW", "OIHW", "NCHW"),
        precision=prec)


# ---------------------------------------------------------------------------
# Full LiteMLAFix3 forward.
# ---------------------------------------------------------------------------
def lite_mla_forward(x, p, *, heads, dim=8, expand=8, eps=1e-15, bn_eps=1e-5,
                     force_two_pass=False, max_tile_hw=2048):
    """x: (B, Cin, H, W) NCHW -> (B, Cout, H, W)."""
    B, Cin, H, W = x.shape
    hw = H * W
    d = dim * expand
    cdtype = x.dtype
    f32 = jnp.float32
    hi = jax.lax.Precision.HIGHEST

    # ---- fold all pointwise convs / BN once, in f32 ----
    w_qkv = p["w_qkv"].astype(f32)
    w_lin = p["w_lin"].astype(f32)
    b_lin = p["b_lin"].astype(f32)
    w_down = p["w_down"].astype(f32)
    b_down = p["b_down"].astype(f32)
    w_grp = p["w_grp"].astype(f32)
    w_proj = p["w_proj"].astype(f32)
    scale = p["bn_gamma"].astype(f32) / jnp.sqrt(p["bn_var"].astype(f32) + bn_eps)
    shift = p["bn_beta"].astype(f32) - p["bn_mean"].astype(f32) * scale

    C_lin = w_lin.shape[0]                 # heads * 3 * d
    C3 = w_qkv.shape[0]                    # 3 * total_dim
    total_dim = C3 // 3
    Cout = w_proj.shape[0]

    # branch 0: fold the qkv 1x1 into self.linear  -> attention reads x directly
    w_lin_qkv = jnp.matmul(w_lin, w_qkv, precision=hi)                       # (C_lin, Cin)
    # branch 1: fold the grouped 1x1 into self.linear -> attention reads the depthwise output
    G, co, ci = w_grp.shape
    w_lin_agg = jnp.einsum("lgo,goi->lgi", w_lin.reshape(C_lin, G, co), w_grp,
                           precision=hi).reshape(C_lin, G * ci)              # (C_lin, 3*Cin)
    # fold linear_down + proj halves + BN into per-branch output weights
    wp0, wp1 = w_proj[:, :total_dim], w_proj[:, total_dim:]
    w_comb0 = jnp.matmul(scale[:, None] * wp0, w_down, precision=hi)         # (Cout, heads*d)
    w_comb1 = jnp.matmul(scale[:, None] * wp1, w_down, precision=hi)
    b_comb = scale * jnp.matmul(wp0 + wp1, b_down, precision=hi) + shift     # (Cout,)

    def split_qkv_rows(wl, bl):
        r = wl.reshape(heads, 3 * d, -1)
        br = bl.reshape(heads, 3 * d)
        w_q = r[:, :d].reshape(heads * d, -1)
        w_kv = r[:, d:].reshape(heads * 2 * d, -1)
        b_q = br[:, :d].reshape(heads * d, 1)
        b_kv = br[:, d:].reshape(heads * 2 * d, 1)
        return w_q, b_q, w_kv, b_kv

    wq0, bq0, wkv0, bkv0 = split_qkv_rows(w_lin_qkv, b_lin)
    wq1, bq1, wkv1, bkv1 = split_qkv_rows(w_lin_agg, b_lin)

    def c(w):  # compute-dtype cast (bf16 halves HBM traffic; accumulation stays f32)
        return w.astype(cdtype)

    x_f = x.reshape(B, Cin, hw)                       # NCHW -> (B, C, HW): free, lane-dense

    # self.qkv is still materialized only because the depthwise 5x5 branch needs it.
    qkv_f = conv1x1(x_f, c(w_qkv))
    dw = _depthwise_conv5x5(qkv_f.reshape(B, C3, H, W), c(p["w_dw"]),
                            highest=(cdtype == jnp.float32))
    dw_f = dw.reshape(B, C3, hw)

    # branch 0: reads x directly (qkv folded); carries the combined bias.
    y_partial = relu_linear_att_fused(
        x_f, c(wq0), bq0, c(wkv0), bkv0, c(w_comb0), b_comb,
        heads=heads, d=d, eps=eps, acc=None,
        force_two_pass=force_two_pass, max_tile_hw=max_tile_hw)
    # branch 1: reads the depthwise output (grouped 1x1 folded) and accumulates branch 0's
    # partial sum -> no concatenate, no proj pass.
    out_f = relu_linear_att_fused(
        dw_f, c(wq1), bq1, c(wkv1), bkv1, c(w_comb1), jnp.zeros((Cout,), f32),
        heads=heads, d=d, eps=eps, acc=y_partial,
        force_two_pass=force_two_pass, max_tile_hw=max_tile_hw)
    return out_f.reshape(B, Cout, H, W)


# ---------------------------------------------------------------------------
# Pure-JAX reference reproducing the PyTorch forward semantics (NCHW, torch op order).
# ---------------------------------------------------------------------------
def _reference(x, p, *, heads, dim=8, expand=8, eps=1e-15, bn_eps=1e-5):
    hi = jax.lax.Precision.HIGHEST

    def c1x1(t, w, b=None):
        y = jnp.einsum("bchw,oc->bohw", t, w, precision=hi)
        if b is not None:
            y = y + b.reshape(1, -1, 1, 1)
        return y

    B, Cin, H, W = x.shape
    d = dim * expand
    qkv = c1x1(x, p["w_qkv"])
    dwo = _depthwise_conv5x5(qkv, p["w_dw"])
    G, co, ci = p["w_grp"].shape
    agg = jnp.einsum("bgihw,goi->bgohw", dwo.reshape(B, G, ci, H, W), p["w_grp"],
                     precision=hi).reshape(B, G * co, H, W)

    def att(elem):
        t = c1x1(elem, p["w_lin"], p["b_lin"])
        hw = H * W
        t = jnp.swapaxes(t.reshape(B, heads, 3 * d, hw), -1, -2)     # (B, h, hw, 3d)
        q = jax.nn.relu(t[..., :d])
        k = jax.nn.relu(t[..., d:2 * d])
        v = t[..., 2 * d:]
        vp = jnp.concatenate([v, jnp.ones(v.shape[:-1] + (1,), v.dtype)], axis=-1)
        kv = jnp.einsum("bhne,bhnf->bhef", k, vp, precision=hi)
        o = jnp.einsum("bhne,bhef->bhnf", q, kv, precision=hi)
        o = o[..., :-1] / (o[..., -1:] + eps)
        o = jnp.swapaxes(o, -1, -2).reshape(B, heads * d, H, W)
        return c1x1(o, p["w_down"], p["b_down"])

    y = jnp.concatenate([att(qkv), att(agg)], axis=1)
    y = c1x1(y, p["w_proj"])
    scale = p["bn_gamma"] / jnp.sqrt(p["bn_var"] + bn_eps)
    shift = p["bn_beta"] - p["bn_mean"] * scale
    return y * scale.reshape(1, -1, 1, 1) + shift.reshape(1, -1, 1, 1)


if __name__ == "__main__":
    key = jax.random.PRNGKey(0)
    # in_channels must be a multiple of dim(=8) for LiteMLA (heads = Cin // dim).
    B, Cin, H, W = 2, 16, 16, 16
    Cout = 16
    dim, expand = 8, 8
    heads = Cin // dim                  # 2
    d = dim * expand                    # 64
    C3 = 3 * Cin                        # qkv channels (total_dim == Cin)

    ks = jax.random.split(key, 13)

    def init(k, shape, fan_in):
        return jax.random.normal(k, shape, jnp.float32) / jnp.sqrt(float(fan_in))

    x = jax.random.normal(ks[0], (B, Cin, H, W), jnp.float32)
    p = {
        "w_qkv": init(ks[1], (C3, Cin), Cin),                      # self.qkv (no bias)
        "w_dw": init(ks[2], (C3, 1, 5, 5), 25),                    # aggreg depthwise 5x5
        "w_grp": init(ks[3], (3 * heads, dim, dim), dim),          # aggreg grouped 1x1
        "w_lin": init(ks[4], (heads * 3 * d, C3), C3),             # self.linear
        "b_lin": 0.1 * jax.random.normal(ks[5], (heads * 3 * d,), jnp.float32),
        "w_down": init(ks[6], (Cin, heads * d), heads * d),        # self.linear_down
        "b_down": 0.1 * jax.random.normal(ks[7], (Cin,), jnp.float32),
        "w_proj": init(ks[8], (Cout, 2 * Cin), 2 * Cin),           # self.proj conv
        "bn_gamma": 1.0 + 0.1 * jax.random.normal(ks[9], (Cout,), jnp.float32),
        "bn_beta": 0.1 * jax.random.normal(ks[10], (Cout,), jnp.float32),
        "bn_mean": 0.1 * jax.random.normal(ks[11], (Cout,), jnp.float32),
        "bn_var": jnp.abs(1.0 + 0.1 * jax.random.normal(ks[12], (Cout,), jnp.float32)),
    }

    ref = _reference(x, p, heads=heads, dim=dim, expand=expand)

    # 1) f32, fused single-pass path
    fwd = jax.jit(functools.partial(lite_mla_forward, heads=heads, dim=dim, expand=expand))
    out = jax.block_until_ready(fwd(x, p))
    assert out.shape == (B, Cout, H, W), out.shape
    err = float(jnp.max(jnp.abs(out - ref)))
    assert jnp.allclose(out, ref, atol=1e-3, rtol=1e-3), f"single-pass max abs err = {err}"

    # 2) f32, HW-tiled two-pass path (kv accumulated over 128-lane tiles), forced for coverage
    fwd_tiled = jax.jit(functools.partial(lite_mla_forward, heads=heads, dim=dim, expand=expand,
                                          force_two_pass=True, max_tile_hw=128))
    out_t = jax.block_until_ready(fwd_tiled(x, p))
    err_t = float(jnp.max(jnp.abs(out_t - ref)))
    assert jnp.allclose(out_t, ref, atol=1e-3, rtol=1e-3), f"two-pass max abs err = {err_t}"

    # 3) bf16 activations + weights (HBM traffic halved); weight folding stays f32 internally
    out_bf16 = jax.block_until_ready(fwd(x.astype(jnp.bfloat16), p))
    assert out_bf16.dtype == jnp.bfloat16
    out_bf32 = out_bf16.astype(jnp.float32)
    err_b = float(jnp.max(jnp.abs(out_bf32 - ref)))
    assert jnp.allclose(out_bf32, ref, atol=0.1, rtol=0.1), f"bf16 max abs err = {err_b}"

    print("KERNEL_OK")
</pallas_src>

<mosaic_0001>
module attributes {stable_mosaic.version = 11 : i64} {
  func.func @_att_fused_kernel(%arg0: i32, %arg1: memref<1x16x256xf32, #tpu.memory_space<vmem>>, %arg2: memref<128x16xf32, #tpu.memory_space<vmem>>, %arg3: memref<128x1xf32, #tpu.memory_space<vmem>>, %arg4: memref<256x16xf32, #tpu.memory_space<vmem>>, %arg5: memref<256x1xf32, #tpu.memory_space<vmem>>, %arg6: memref<16x128xf32, #tpu.memory_space<vmem>>, %arg7: memref<16x1xf32, #tpu.memory_space<vmem>>, %arg8: memref<1x16x256xf32, #tpu.memory_space<vmem>>) attributes {dimension_semantics = [#tpu.dimension_semantics<parallel>], iteration_bounds = array<i64: 2>, scalar_prefetch = 0 : i64, scratch_operands = 0 : i64, tpu.core_type = #tpu.core_type<tc>, window_params = [{transform_indices = @transform_0, window_bounds = array<i64: 1, 16, 256>}, {pipeline_mode = #tpu.pipeline_mode<synchronous>, transform_indices = @transform_1, window_bounds = array<i64: 128, 16>}, {pipeline_mode = #tpu.pipeline_mode<synchronous>, transform_indices = @transform_2, window_bounds = array<i64: 128, 1>}, {pipeline_mode = #tpu.pipeline_mode<synchronous>, transform_indices = @transform_3, window_bounds = array<i64: 256, 16>}, {pipeline_mode = #tpu.pipeline_mode<synchronous>, transform_indices = @transform_4, window_bounds = array<i64: 256, 1>}, {pipeline_mode = #tpu.pipeline_mode<synchronous>, transform_indices = @transform_5, window_bounds = array<i64: 16, 128>}, {pipeline_mode = #tpu.pipeline_mode<synchronous>, transform_indices = @transform_6, window_bounds = array<i64: 16, 1>}, {transform_indices = @transform_7, window_bounds = array<i64: 1, 16, 256>}]} {
    %c0 = arith.constant 0 : index
    %c0_0 = arith.constant 0 : index
    %c0_1 = arith.constant 0 : index
    %0 = vector.load %arg1[%c0, %c0_0, %c0_1] : memref<1x16x256xf32, #tpu.memory_space<vmem>>, vector<1x16x256xf32>
    %1 = vector.shape_cast %0 : vector<1x16x256xf32> to vector<16x256xf32>
    %c0_2 = arith.constant 0 : index
    %c0_3 = arith.constant 0 : index
    %2 = vector.load %arg2[%c0_2, %c0_3] : memref<128x16xf32, #tpu.memory_space<vmem>>, vector<128x16xf32>
    %cst = arith.constant dense<0.000000e+00> : vector<128x256xf32>
    %3 = tpu.matmul %2, %1, %cst {dimension_numbers = #tpu.dot_dimension_numbers<[1], [0], [0], [1], [0, 0, 1, 1], [], []>} : vector<128x16xf32>, vector<16x256xf32>, vector<128x256xf32> -> vector<128x256xf32>
    %c0_4 = arith.constant 0 : index
    %c0_5 = arith.constant 0 : index
    %4 = vector.load %arg3[%c0_4, %c0_5] : memref<128x1xf32, #tpu.memory_space<vmem>>, vector<128x1xf32>
    %5 = vector.broadcast %4 : vector<128x1xf32> to vector<128x256xf32>
    %6 = arith.addf %3, %5 : vector<128x256xf32>
    %c0_6 = arith.constant 0 : index
    %c0_7 = arith.constant 0 : index
    %7 = vector.load %arg4[%c0_6, %c0_7] : memref<256x16xf32, #tpu.memory_space<vmem>>, vector<256x16xf32>
    %cst_8 = arith.constant dense<0.000000e+00> : vector<256x256xf32>
    %8 = tpu.matmul %7, %1, %cst_8 {dimension_numbers = #tpu.dot_dimension_numbers<[1], [0], [0], [1], [0, 0, 1, 1], [], []>} : vector<256x16xf32>, vector<16x256xf32>, vector<256x256xf32> -> vector<256x256xf32>
    %c0_9 = arith.constant 0 : index
    %c0_10 = arith.constant 0 : index
    %9 = vector.load %arg5[%c0_9, %c0_10] : memref<256x1xf32, #tpu.memory_space<vmem>>, vector<256x1xf32>
    %10 = vector.broadcast %9 : vector<256x1xf32> to vector<256x256xf32>
    %11 = arith.addf %8, %10 : vector<256x256xf32>
    %cst_11 = arith.constant 0.000000e+00 : f32
    %12 = vector.broadcast %cst_11 : f32 to vector<128x256xf32>
    %13 = arith.maximumf %6, %12 : vector<128x256xf32>
    %14 = vector.shape_cast %13 : vector<128x256xf32> to vector<2x64x256xf32>
    %15 = vector.shape_cast %11 : vector<256x256xf32> to vector<2x128x256xf32>
    %16 = vector.extract_strided_slice %15 {offsets = [0, 0, 0], sizes = [2, 64, 256], strides = [1, 1, 1]} : vector<2x128x256xf32> to vector<2x64x256xf32>
    %cst_12 = arith.constant 0.000000e+00 : f32
    %17 = vector.broadcast %cst_12 : f32 to vector<2x64x256xf32>
    %18 = arith.maximumf %16, %17 : vector<2x64x256xf32>
    %19 = vector.extract_strided_slice %15 {offsets = [0, 64, 0], sizes = [2, 64, 256], strides = [1, 1, 1]} : vector<2x128x256xf32> to vector<2x64x256xf32>
    "tpu.trace_start"() <{level = 10 : i32, message = "hfn,hen->hfe"}> : () -> ()
    %cst_13 = arith.constant dense<0.000000e+00> : vector<2x64x64xf32>
    %20 = tpu.matmul %19, %18, %cst_13 {dimension_numbers = #tpu.dot_dimension_numbers<[2], [2], [1], [1], [0, 0, 0, 1, 1, 1], [0], [0]>} : vector<2x64x256xf32>, vector<2x64x256xf32>, vector<2x64x64xf32> -> vector<2x64x64xf32>
    "tpu.trace_stop"() : () -> ()
    %cst_14 = arith.constant dense<0.000000e+00> : vector<2x64xf32>
    %21 = vector.multi_reduction <add>, %18, %cst_14 [2] : vector<2x64x256xf32> to vector<2x64xf32>
    %22 = vector.shape_cast %21 : vector<2x64xf32> to vector<2x64x1xf32>
    "tpu.trace_start"() <{level = 10 : i32, message = "hfe,hen->hfn"}> : () -> ()
    %cst_15 = arith.constant dense<0.000000e+00> : vector<2x64x256xf32>
    %23 = tpu.matmul %20, %14, %cst_15 {dimension_numbers = #tpu.dot_dimension_numbers<[2], [1], [1], [2], [0, 0, 0, 1, 1, 2], [0], [0]>} : vector<2x64x64xf32>, vector<2x64x256xf32>, vector<2x64x256xf32> -> vector<2x64x256xf32>
    "tpu.trace_stop"() : () -> ()
    %24 = vector.broadcast %22 : vector<2x64x1xf32> to vector<2x64x256xf32>
    %25 = arith.mulf %14, %24 : vector<2x64x256xf32>
    %cst_16 = arith.constant dense<0.000000e+00> : vector<2x256xf32>
    %26 = vector.multi_reduction <add>, %25, %cst_16 [1] : vector<2x64x256xf32> to vector<2x256xf32>
    %27 = vector.shape_cast %26 : vector<2x256xf32> to vector<2x1x256xf32>
    %cst_17 = arith.constant 1.000000e-15 : f32
    %28 = vector.broadcast %cst_17 : f32 to vector<2x1x256xf32>
    %29 = arith.addf %27, %28 : vector<2x1x256xf32>
    %30 = tpu.reciprocal %29 : vector<2x1x256xf32> -> vector<2x1x256xf32>
    %31 = vector.broadcast %30 : vector<2x1x256xf32> to vector<2x64x256xf32>
    %32 = arith.mulf %23, %31 : vector<2x64x256xf32>
    %33 = vector.shape_cast %32 : vector<2x64x256xf32> to vector<128x256xf32>
    %c0_18 = arith.constant 0 : index
    %c0_19 = arith.constant 0 : index
    %34 = vector.load %arg6[%c0_18, %c0_19] : memref<16x128xf32, #tpu.memory_space<vmem>>, vector<16x128xf32>
    %cst_20 = arith.constant dense<0.000000e+00> : vector<16x256xf32>
    %35 = tpu.matmul %34, %33, %cst_20 {dimension_numbers = #tpu.dot_dimension_numbers<[1], [0], [0], [1], [0, 0, 1, 1], [], []>} : vector<16x128xf32>, vector<128x256xf32>, vector<16x256xf32> -> vector<16x256xf32>
    %c0_21 = arith.constant 0 : index
    %c0_22 = arith.constant 0 : index
    %36 = vector.load %arg7[%c0_21, %c0_22] : memref<16x1xf32, #tpu.memory_space<vmem>>, vector<16x1xf32>
    %37 = vector.broadcast %36 : vector<16x1xf32> to vector<16x256xf32>
    %38 = arith.addf %35, %37 : vector<16x256xf32>
    %c0_23 = arith.constant 0 : index
    %c0_24 = arith.constant 0 : index
    %c0_25 = arith.constant 0 : index
    %39 = vector.load %arg8[%c0_23, %c0_24, %c0_25] : memref<1x16x256xf32, #tpu.memory_space<vmem>>, vector<1x16x256xf32>
    %40 = vector.shape_cast %39 : vector<1x16x256xf32> to vector<16x256xf32>
    %41 = vector.shape_cast %38 : vector<16x256xf32> to vector<1x16x256xf32>
    tpu.vector_store %arg8[%c0_23, %c0_24, %c0_25], %41 {strides = array<i32>} : memref<1x16x256xf32, #tpu.memory_space<vmem>>, vector<1x16x256xf32>,
    return
  }
  func.func @transform_0(%arg0: i32) -> (i32, i32, i32) {
    %c0_i32 = arith.constant 0 : i32
    %c0_i32_0 = arith.constant 0 : i32
    %c0_i32_1 = arith.constant 0 : i32
    return %arg0, %c0_i32, %c0_i32_0 : i32, i32, i32
  }
  func.func @transform_1(%arg0: i32) -> (i32, i32) {
    %c0_i32 = arith.constant 0 : i32
    %c0_i32_0 = arith.constant 0 : i32
    %c0_i32_1 = arith.constant 0 : i32
    return %c0_i32, %c0_i32_0 : i32, i32
  }
  func.func @transform_2(%arg0: i32) -> (i32, i32) {
    %c0_i32 = arith.constant 0 : i32
    %c0_i32_0 = arith.constant 0 : i32
    %c0_i32_1 = arith.constant 0 : i32
    return %c0_i32, %c0_i32_0 : i32, i32
  }
  func.func @transform_3(%arg0: i32) -> (i32, i32) {
    %c0_i32 = arith.constant 0 : i32
    %c0_i32_0 = arith.constant 0 : i32
    %c0_i32_1 = arith.constant 0 : i32
    return %c0_i32, %c0_i32_0 : i32, i32
  }
  func.func @transform_4(%arg0: i32) -> (i32, i32) {
    %c0_i32 = arith.constant 0 : i32
    %c0_i32_0 = arith.constant 0 : i32
    %c0_i32_1 = arith.constant 0 : i32
    return %c0_i32, %c0_i32_0 : i32, i32
  }
  func.func @transform_5(%arg0: i32) -> (i32, i32) {
    %c0_i32 = arith.constant 0 : i32
    %c0_i32_0 = arith.constant 0 : i32
    %c0_i32_1 = arith.constant 0 : i32
    return %c0_i32, %c0_i32_0 : i32, i32
  }
  func.func @transform_6(%arg0: i32) -> (i32, i32) {
    %c0_i32 = arith.constant 0 : i32
    %c0_i32_0 = arith.constant 0 : i32
    %c0_i32_1 = arith.constant 0 : i32
    return %c0_i32, %c0_i32_0 : i32, i32
  }
  func.func @transform_7(%arg0: i32) -> (i32, i32, i32) {
    %c0_i32 = arith.constant 0 : i32
    %c0_i32_0 = arith.constant 0 : i32
    %c0_i32_1 = arith.constant 0 : i32
    return %arg0, %c0_i32, %c0_i32_0 : i32, i32, i32
  }
}

module attributes {stable_mosaic.version = 11 : i64} {
  func.func @_conv1x1_kernel(%arg0: i32, %arg1: i32, %arg2: memref<1x16x256xf32, #tpu.memory_space<vmem>>, %arg3: memref<48x16xf32, #tpu.memory_space<vmem>>, %arg4: memref<48x1xf32, #tpu.memory_space<vmem>>, %arg5: memref<1x48x256xf32, #tpu.memory_space<vmem>>) attributes {dimension_semantics = [#tpu.dimension_semantics<parallel>, #tpu.dimension_semantics<parallel>], iteration_bounds = array<i64: 2, 1>, scalar_prefetch = 0 : i64, scratch_operands = 0 : i64, tpu.core_type = #tpu.core_type<tc>, window_params = [{transform_indices = @transform_0, window_bounds = array<i64: 1, 16, 256>}, {pipeline_mode = #tpu.pipeline_mode<synchronous>, transform_indices = @transform_1, window_bounds = array<i64: 48, 16>}, {pipeline_mode = #tpu.pipeline_mode<synchronous>, transform_indices = @transform_2, window_bounds = array<i64: 48, 1>}, {transform_indices = @transform_3, window_bounds = array<i64: 1, 48, 256>}]} {
    %c0 = arith.constant 0 : index
    %c0_0 = arith.constant 0 : index
    %0 = vector.load %arg3[%c0, %c0_0] : memref<48x16xf32, #tpu.memory_space<vmem>>, vector<48x16xf32>
    %c0_1 = arith.constant 0 : index
    %c0_2 = arith.constant 0 : index
    %c0_3 = arith.constant 0 : index
    %1 = vector.load %arg2[%c0_1, %c0_2, %c0_3] : memref<1x16x256xf32, #tpu.memory_space<vmem>>, vector<1x16x256xf32>
    %2 = vector.shape_cast %1 : vector<1x16x256xf32> to vector<16x256xf32>
    %cst = arith.constant dense<0.000000e+00> : vector<48x256xf32>
    %3 = tpu.matmul %0, %2, %cst {dimension_numbers = #tpu.dot_dimension_numbers<[1], [0], [0], [1], [0, 0, 1, 1], [], []>} : vector<48x16xf32>, vector<16x256xf32>, vector<48x256xf32> -> vector<48x256xf32>
    %c0_4 = arith.constant 0 : index
    %c0_5 = arith.constant 0 : index
    %4 = vector.load %arg4[%c0_4, %c0_5] : memref<48x1xf32, #tpu.memory_space<vmem>>, vector<48x1xf32>
    %5 = vector.broadcast %4 : vector<48x1xf32> to vector<48x256xf32>
    %6 = arith.addf %3, %5 : vector<48x256xf32>
    %c0_6 = arith.constant 0 : index
    %c0_7 = arith.constant 0 : index
    %c0_8 = arith.constant 0 : index
    %7 = vector.load %arg5[%c0_6, %c0_7, %c0_8] : memref<1x48x256xf32, #tpu.memory_space<vmem>>, vector<1x48x256xf32>
    %8 = vector.shape_cast %7 : vector<1x48x256xf32> to vector<48x256xf32>
    %9 = vector.shape_cast %6 : vector<48x256xf32> to vector<1x48x256xf32>
    tpu.vector_store %arg5[%c0_6, %c0_7, %c0_8], %9 {strides = array<i32>} : memref<1x48x256xf32, #tpu.memory_space<vmem>>, vector<1x48x256xf32>,
    return
  }
  func.func @transform_0(%arg0: i32, %arg1: i32) -> (i32, i32, i32) {
    %c0_i32 = arith.constant 0 : i32
    %c0_i32_0 = arith.constant 0 : i32
    return %arg0, %c0_i32, %arg1 : i32, i32, i32
  }
  func.func @transform_1(%arg0: i32, %arg1: i32) -> (i32, i32) {
    %c0_i32 = arith.constant 0 : i32
    %c0_i32_0 = arith.constant 0 : i32
    %c0_i32_1 = arith.constant 0 : i32
    return %c0_i32, %c0_i32_0 : i32, i32
  }
  func.func @transform_2(%arg0: i32, %arg1: i32) -> (i32, i32) {
    %c0_i32 = arith.constant 0 : i32
    %c0_i32_0 = arith.constant 0 : i32
    %c0_i32_1 = arith.constant 0 : i32
    return %c0_i32, %c0_i32_0 : i32, i32
  }
  func.func @transform_3(%arg0: i32, %arg1: i32) -> (i32, i32, i32) {
    %c0_i32 = arith.constant 0 : i32
    %c0_i32_0 = arith.constant 0 : i32
    return %arg0, %c0_i32, %arg1 : i32, i32, i32
  }
}

module attributes {stable_mosaic.version = 11 : i64} {
  func.func @_att_fused_kernel(%arg0: i32, %arg1: memref<1x48x256xf32, #tpu.memory_space<vmem>>, %arg2: memref<128x48xf32, #tpu.memory_space<vmem>>, %arg3: memref<128x1xf32, #tpu.memory_space<vmem>>, %arg4: memref<256x48xf32, #tpu.memory_space<vmem>>, %arg5: memref<256x1xf32, #tpu.memory_space<vmem>>, %arg6: memref<16x128xf32, #tpu.memory_space<vmem>>, %arg7: memref<16x1xf32, #tpu.memory_space<vmem>>, %arg8: memref<1x16x256xf32, #tpu.memory_space<vmem>>, %arg9: memref<1x16x256xf32, #tpu.memory_space<vmem>>) attributes {dimension_semantics = [#tpu.dimension_semantics<parallel>], iteration_bounds = array<i64: 2>, scalar_prefetch = 0 : i64, scratch_operands = 0 : i64, tpu.core_type = #tpu.core_type<tc>, window_params = [{transform_indices = @transform_0, window_bounds = array<i64: 1, 48, 256>}, {pipeline_mode = #tpu.pipeline_mode<synchronous>, transform_indices = @transform_1, window_bounds = array<i64: 128, 48>}, {pipeline_mode = #tpu.pipeline_mode<synchronous>, transform_indices = @transform_2, window_bounds = array<i64: 128, 1>}, {pipeline_mode = #tpu.pipeline_mode<synchronous>, transform_indices = @transform_3, window_bounds = array<i64: 256, 48>}, {pipeline_mode = #tpu.pipeline_mode<synchronous>, transform_indices = @transform_4, window_bounds = array<i64: 256, 1>}, {pipeline_mode = #tpu.pipeline_mode<synchronous>, transform_indices = @transform_5, window_bounds = array<i64: 16, 128>}, {pipeline_mode = #tpu.pipeline_mode<synchronous>, transform_indices = @transform_6, window_bounds = array<i64: 16, 1>}, {transform_indices = @transform_7, window_bounds = array<i64: 1, 16, 256>}, {transform_indices = @transform_8, window_bounds = array<i64: 1, 16, 256>}]} {
    %c0 = arith.constant 0 : index
    %c0_0 = arith.constant 0 : index
    %c0_1 = arith.constant 0 : index
    %0 = vector.load %arg1[%c0, %c0_0, %c0_1] : memref<1x48x256xf32, #tpu.memory_space<vmem>>, vector<1x48x256xf32>
    %1 = vector.shape_cast %0 : vector<1x48x256xf32> to vector<48x256xf32>
    %c0_2 = arith.constant 0 : index
    %c0_3 = arith.constant 0 : index
    %2 = vector.load %arg2[%c0_2, %c0_3] : memref<128x48xf32, #tpu.memory_space<vmem>>, vector<128x48xf32>
    %cst = arith.constant dense<0.000000e+00> : vector<128x256xf32>
    %3 = tpu.matmul %2, %1, %cst {dimension_numbers = #tpu.dot_dimension_numbers<[1], [0], [0], [1], [0, 0, 1, 1], [], []>} : vector<128x48xf32>, vector<48x256xf32>, vector<128x256xf32> -> vector<128x256xf32>
    %c0_4 = arith.constant 0 : index
    %c0_5 = arith.constant 0 : index
    %4 = vector.load %arg3[%c0_4, %c0_5] : memref<128x1xf32, #tpu.memory_space<vmem>>, vector<128x1xf32>
    %5 = vector.broadcast %4 : vector<128x1xf32> to vector<128x256xf32>
    %6 = arith.addf %3, %5 : vector<128x256xf32>
    %c0_6 = arith.constant 0 : index
    %c0_7 = arith.constant 0 : index
    %7 = vector.load %arg4[%c0_6, %c0_7] : memref<256x48xf32, #tpu.memory_space<vmem>>, vector<256x48xf32>
    %cst_8 = arith.constant dense<0.000000e+00> : vector<256x256xf32>
    %8 = tpu.matmul %7, %1, %cst_8 {dimension_numbers = #tpu.dot_dimension_numbers<[1], [0], [0], [1], [0, 0, 1, 1], [], []>} : vector<256x48xf32>, vector<48x256xf32>, vector<256x256xf32> -> vector<256x256xf32>
    %c0_9 = arith.constant 0 : index
    %c0_10 = arith.constant 0 : index
    %9 = vector.load %arg5[%c0_9, %c0_10] : memref<256x1xf32, #tpu.memory_space<vmem>>, vector<256x1xf32>
    %10 = vector.broadcast %9 : vector<256x1xf32> to vector<256x256xf32>
    %11 = arith.addf %8, %10 : vector<256x256xf32>
    %cst_11 = arith.constant 0.000000e+00 : f32
    %12 = vector.broadcast %cst_11 : f32 to vector<128x256xf32>
    %13 = arith.maximumf %6, %12 : vector<128x256xf32>
    %14 = vector.shape_cast %13 : vector<128x256xf32> to vector<2x64x256xf32>
    %15 = vector.shape_cast %11 : vector<256x256xf32> to vector<2x128x256xf32>
    %16 = vector.extract_strided_slice %15 {offsets = [0, 0, 0], sizes = [2, 64, 256], strides = [1, 1, 1]} : vector<2x128x256xf32> to vector<2x64x256xf32>
    %cst_12 = arith.constant 0.000000e+00 : f32
    %17 = vector.broadcast %cst_12 : f32 to vector<2x64x256xf32>
    %18 = arith.maximumf %16, %17 : vector<2x64x256xf32>
    %19 = vector.extract_strided_slice %15 {offsets = [0, 64, 0], sizes = [2, 64, 256], strides = [1, 1, 1]} : vector<2x128x256xf32> to vector<2x64x256xf32>
    "tpu.trace_start"() <{level = 10 : i32, message = "hfn,hen->hfe"}> : () -> ()
    %cst_13 = arith.constant dense<0.000000e+00> : vector<2x64x64xf32>
    %20 = tpu.matmul %19, %18, %cst_13 {dimension_numbers = #tpu.dot_dimension_numbers<[2], [2], [1], [1], [0, 0, 0, 1, 1, 1], [0], [0]>} : vector<2x64x256xf32>, vector<2x64x256xf32>, vector<2x64x64xf32> -> vector<2x64x64xf32>
    "tpu.trace_stop"() : () -> ()
    %cst_14 = arith.constant dense<0.000000e+00> : vector<2x64xf32>
    %21 = vector.multi_reduction <add>, %18, %cst_14 [2] : vector<2x64x256xf32> to vector<2x64xf32>
    %22 = vector.shape_cast %21 : vector<2x64xf32> to vector<2x64x1xf32>
    "tpu.trace_start"() <{level = 10 : i32, message = "hfe,hen->hfn"}> : () -> ()
    %cst_15 = arith.constant dense<0.000000e+00> : vector<2x64x256xf32>
    %23 = tpu.matmul %20, %14, %cst_15 {dimension_numbers = #tpu.dot_dimension_numbers<[2], [1], [1], [2], [0, 0, 0, 1, 1, 2], [0], [0]>} : vector<2x64x64xf32>, vector<2x64x256xf32>, vector<2x64x256xf32> -> vector<2x64x256xf32>
    "tpu.trace_stop"() : () -> ()
    %24 = vector.broadcast %22 : vector<2x64x1xf32> to vector<2x64x256xf32>
    %25 = arith.mulf %14, %24 : vector<2x64x256xf32>
    %cst_16 = arith.constant dense<0.000000e+00> : vector<2x256xf32>
    %26 = vector.multi_reduction <add>, %25, %cst_16 [1] : vector<2x64x256xf32> to vector<2x256xf32>
    %27 = vector.shape_cast %26 : vector<2x256xf32> to vector<2x1x256xf32>
    %cst_17 = arith.constant 1.000000e-15 : f32
    %28 = vector.broadcast %cst_17 : f32 to vector<2x1x256xf32>
    %29 = arith.addf %27, %28 : vector<2x1x256xf32>
    %30 = tpu.reciprocal %29 : vector<2x1x256xf32> -> vector<2x1x256xf32>
    %31 = vector.broadcast %30 : vector<2x1x256xf32> to vector<2x64x256xf32>
    %32 = arith.mulf %23, %31 : vector<2x64x256xf32>
    %33 = vector.shape_cast %32 : vector<2x64x256xf32> to vector<128x256xf32>
    %c0_18 = arith.constant 0 : index
    %c0_19 = arith.constant 0 : index
    %34 = vector.load %arg6[%c0_18, %c0_19] : memref<16x128xf32, #tpu.memory_space<vmem>>, vector<16x128xf32>
    %cst_20 = arith.constant dense<0.000000e+00> : vector<16x256xf32>
    %35 = tpu.matmul %34, %33, %cst_20 {dimension_numbers = #tpu.dot_dimension_numbers<[1], [0], [0], [1], [0, 0, 1, 1], [], []>} : vector<16x128xf32>, vector<128x256xf32>, vector<16x256xf32> -> vector<16x256xf32>
    %c0_21 = arith.constant 0 : index
    %c0_22 = arith.constant 0 : index
    %36 = vector.load %arg7[%c0_21, %c0_22] : memref<16x1xf32, #tpu.memory_space<vmem>>, vector<16x1xf32>
    %37 = vector.broadcast %36 : vector<16x1xf32> to vector<16x256xf32>
    %38 = arith.addf %35, %37 : vector<16x256xf32>
    %c0_23 = arith.constant 0 : index
    %c0_24 = arith.constant 0 : index
    %c0_25 = arith.constant 0 : index
    %39 = vector.load %arg8[%c0_23, %c0_24, %c0_25] : memref<1x16x256xf32, #tpu.memory_space<vmem>>, vector<1x16x256xf32>
    %40 = vector.shape_cast %39 : vector<1x16x256xf32> to vector<16x256xf32>
    %41 = arith.addf %38, %40 : vector<16x256xf32>
    %c0_26 = arith.constant 0 : index
    %c0_27 = arith.constant 0 : index
    %c0_28 = arith.constant 0 : index
    %42 = vector.load %arg9[%c0_26, %c0_27, %c0_28] : memref<1x16x256xf32, #tpu.memory_space<vmem>>, vector<1x16x256xf32>
    %43 = vector.shape_cast %42 : vector<1x16x256xf32> to vector<16x256xf32>
    %44 = vector.shape_cast %41 : vector<16x256xf32> to vector<1x16x256xf32>
    tpu.vector_store %arg9[%c0_26, %c0_27, %c0_28], %44 {strides = array<i32>} : memref<1x16x256xf32, #tpu.memory_space<vmem>>, vector<1x16x256xf32>,
    return
  }
  func.func @transform_0(%arg0: i32) -> (i32, i32, i32) {
    %c0_i32 = arith.constant 0 : i32
    %c0_i32_0 = arith.constant 0 : i32
    %c0_i32_1 = arith.constant 0 : i32
    return %arg0, %c0_i32, %c0_i32_0 : i32, i32, i32
  }
  func.func @transform_1(%arg0: i32) -> (i32, i32) {
    %c0_i32 = arith.constant 0 : i32
    %c0_i32_0 = arith.constant 0 : i32
    %c0_i32_1 = arith.constant 0 : i32
    return %c0_i32, %c0_i32_0 : i32, i32
  }
  func.func @transform_2(%arg0: i32) -> (i32, i32) {
    %c0_i32 = arith.constant 0 : i32
    %c0_i32_0 = arith.constant 0 : i32
    %c0_i32_1 = arith.constant 0 : i32
    return %c0_i32, %c0_i32_0 : i32, i32
  }
  func.func @transform_3(%arg0: i32) -> (i32, i32) {
    %c0_i32 = arith.constant 0 : i32
    %c0_i32_0 = arith.constant 0 : i32
    %c0_i32_1 = arith.constant 0 : i32
    return %c0_i32, %c0_i32_0 : i32, i32
  }
  func.func @transform_4(%arg0: i32) -> (i32, i32) {
    %c0_i32 = arith.constant 0 : i32
    %c0_i32_0 = arith.constant 0 : i32
    %c0_i32_1 = arith.constant 0 : i32
    return %c0_i32, %c0_i32_0 : i32, i32
  }
  func.func @transform_5(%arg0: i32) -> (i32, i32) {
    %c0_i32 = arith.constant 0 : i32
    %c0_i32_0 = arith.constant 0 : i32
    %c0_i32_1 = arith.constant 0 : i32
    return %c0_i32, %c0_i32_0 : i32, i32
  }
  func.func @transform_6(%arg0: i32) -> (i32, i32) {
    %c0_i32 = arith.constant 0 : i32
    %c0_i32_0 = arith.constant 0 : i32
    %c0_i32_1 = arith.constant 0 : i32
    return %c0_i32, %c0_i32_0 : i32, i32
  }
  func.func @transform_7(%arg0: i32) -> (i32, i32, i32) {
    %c0_i32 = arith.constant 0 : i32
    %c0_i32_0 = arith.constant 0 : i32
    %c0_i32_1 = arith.constant 0 : i32
    return %arg0, %c0_i32, %c0_i32_0 : i32, i32, i32
  }
  func.func @transform_8(%arg0: i32) -> (i32, i32, i32) {
    %c0_i32 = arith.constant 0 : i32
    %c0_i32_0 = arith.constant 0 : i32
    %c0_i32_1 = arith.constant 0 : i32
    return %arg0, %c0_i32, %c0_i32_0 : i32, i32, i32
  }
}

</mosaic_0001>

<llo_original>
// kernel: lite_mla_forward.3
$region0: #{lite_mla_forward.3}
  #allocation0 [shape = 'u32[]', space=smem, size = 0x4, offset = 0x4, fixed_abs, tag = 'smem constant byte address 0x4 - core index']
  #allocation1 [shape = 'u32[144,128]{1,0:T(1,128)}', space=vmem, size = 0x12000, scoped, tag = 'internal scratch']
  %s0 = inlined_call_operand.vmem [shape: f32[2,16,256], index: 0, kind: input, shape index: {}]
  %s1 = inlined_call_operand.vmem [shape: f32[48,16], index: 1, kind: input, shape index: {}]
  %s2 = inlined_call_operand.vmem [shape: f32[48,1], index: 2, kind: input, shape index: {}]
  %s3 = inlined_call_operand.vmem [shape: f32[2,48,256], index: 3, kind: output, shape index: {}]
  %s4 = sld [smem:[#allocation0]]
  $region45: #{lite_mla_forward.3} parent=0
    _
  %s6 = ssub.s32 1, %s4
  %s7 = scalar_select 0, %s6, %s4
  loop: start=0, step=1, limit=4
  $region2: #{lite_mla_forward.3} parent=0 // loop_pre_header
    _
  $region3: #{lite_mla_forward.3} parent=0 // loop_header
    %s9 = sphi 0, %s13
    %p10 = scmp.ge.s32.totalorder %s9, 4
    %s16 = sphi 0, %s28
    %s17 = sphi 0, %s24
    %s18 = sphi 0, %s16
    %s19 = sphi 0, %s17
    %s20 = sphi 0, %s18
    %s21 = sphi 0, %s19
    %s33 = sphi 0, %s35
    %s36 = sphi 0, %s33
    %s37 = sphi 0, %s36
    %s53 = sphi 0, %s37
    %s57 = sphi 0, %s57
    %s59 = sphi 0, %s57
    %s60 = sphi 0, %s59
    %s74 = sphi 0, %s60
    %s78 = sphi 0, %s78
    %s80 = sphi 0, %s78
    %s81 = sphi 0, %s80
    %s95 = sphi 0, %s81
    %s103 = sphi 0, %s105
    %s106 = sphi 0, %s103
    %s107 = sphi 0, %s106
    %s123 = sphi 0, %s107
  $region4: #{lite_mla_forward.3} parent=0 // loop_header_branch
    %12 = sbr.rel (%p10) target = $region8
  $region5: #{lite_mla_forward.3} parent=0 // loop_body
    %s14 = ssub.s32 %s9, 1
    %s15 = ssub.s32 %s9, 2
    %s22 = sadd.s32 1, %s17
    %p23 = scmp.ge.s32.totalorder %s22, 1
    %s24 = scalar_select %p23, 0, %s22
    %s25 = sadd.s32 1, %s16
    %s26 = scalar_select %p23, %s25, %s16
    %p27 = scmp.ge.s32.totalorder %s26, 2
    %s28 = scalar_select %p27, 0, %s26
    %s29 = ssub.s32 %s16, %s28
    %s30 = ssub.s32 %s17, %s24
    %s31 = sor.u32 %s29, %s30
    %p32 = scmp.eq.s32.totalorder %s31, 0
    %s34 = sadd.s32 %s33, 1
    %s35 = scalar_select %p32, %s33, %s34
    %p38 = pneg %p32
    %p39 = scmp.eq.s32.totalorder %s9, 1
    %p40 = por %p38, %p39
    %p41 = scmp.ne.s32.totalorder %s33, %s36
    %p42 = scmp.eq.s32.totalorder %s9, 0
    %p43 = por %p41, %p42
    %p44 = scmp.ne.s32.totalorder %s33, %s36
    %p45 = scmp.eq.s32.totalorder %s14, 1
    %p46 = por %p44, %p45
    %p47 = scmp.ne.s32.totalorder %s36, %s37
    %p48 = scmp.eq.s32.totalorder %s14, 0
    %p49 = por %p47, %p48
    %p50 = scmp.ne.s32.totalorder %s36, %s37
    %p51 = scmp.eq.s32.totalorder %s15, 1
    %p52 = por %p50, %p51
    %p54 = scmp.ne.s32.totalorder %s37, %s53
    %p55 = scmp.eq.s32.totalorder %s15, 0
    %p56 = por %p54, %p55
    %s58 = sadd.s32 %s57, 1
    %p61 = scmp.eq.s32.totalorder %s9, 1
    %p62 = scmp.ne.s32.totalorder %s57, %s59
    %p63 = scmp.eq.s32.totalorder %s9, 0
    %p64 = por %p62, %p63
    %p65 = scmp.ne.s32.totalorder %s57, %s59
    %p66 = scmp.eq.s32.totalorder %s14, 1
    %p67 = por %p65, %p66
    %p68 = scmp.ne.s32.totalorder %s59, %s60
    %p69 = scmp.eq.s32.totalorder %s14, 0
    %p70 = por %p68, %p69
    %p71 = scmp.ne.s32.totalorder %s59, %s60
    %p72 = scmp.eq.s32.totalorder %s15, 1
    %p73 = por %p71, %p72
    %p75 = scmp.ne.s32.totalorder %s60, %s74
    %p76 = scmp.eq.s32.totalorder %s15, 0
    %p77 = por %p75, %p76
    %s79 = sadd.s32 %s78, 1
    %p82 = scmp.eq.s32.totalorder %s9, 1
    %p83 = scmp.ne.s32.totalorder %s78, %s80
    %p84 = scmp.eq.s32.totalorder %s9, 0
    %p85 = por %p83, %p84
    %p86 = scmp.ne.s32.totalorder %s78, %s80
    %p87 = scmp.eq.s32.totalorder %s14, 1
    %p88 = por %p86, %p87
    %p89 = scmp.ne.s32.totalorder %s80, %s81
    %p90 = scmp.eq.s32.totalorder %s14, 0
    %p91 = por %p89, %p90
    %p92 = scmp.ne.s32.totalorder %s80, %s81
    %p93 = scmp.eq.s32.totalorder %s15, 1
    %p94 = por %p92, %p93
    %p96 = scmp.ne.s32.totalorder %s81, %s95
    %p97 = scmp.eq.s32.totalorder %s15, 0
    %p98 = por %p96, %p97
    %s99 = ssub.s32 %s16, %s28
    %s100 = ssub.s32 %s17, %s24
    %s101 = sor.u32 %s99, %s100
    %p102 = scmp.eq.s32.totalorder %s101, 0
    %s104 = sadd.s32 %s103, 1
    %s105 = scalar_select %p102, %s103, %s104
    %p108 = pneg %p102
    %p109 = scmp.eq.s32.totalorder %s9, 1
    %p110 = por %p108, %p109
    %p111 = scmp.ne.s32.totalorder %s103, %s106
    %p112 = scmp.eq.s32.totalorder %s9, 0
    %p113 = por %p111, %p112
    %p114 = scmp.ne.s32.totalorder %s103, %s106
    %p115 = scmp.eq.s32.totalorder %s14, 1
    %p116 = por %p114, %p115
    %p117 = scmp.ne.s32.totalorder %s106, %s107
    %p118 = scmp.eq.s32.totalorder %s14, 0
    %p119 = por %p117, %p118
    %p120 = scmp.ne.s32.totalorder %s106, %s107
    %p121 = scmp.eq.s32.totalorder %s15, 1
    %p122 = por %p120, %p121
    %p124 = scmp.ne.s32.totalorder %s107, %s123
    %p125 = scmp.eq.s32.totalorder %s15, 0
    %p126 = por %p124, %p125
    %p127 = scmp.le.s32.totalorder 1, %s9
    %p128 = scmp.lt.s32.totalorder %s9, 3
    %p129 = pnand %p127, %p128
    %p130 = pneg %p129
    // Predicated region
    $region9: #{lite_mla_forward.3} parent=5 // pred_check
      _
    $region10: #{lite_mla_forward.3} parent=5 // pred_check_branch
      %132 = sbr.rel (%p129) target = $region12
    $region11: #{lite_mla_forward.3} parent=5 // pred_region
      %s133 = ssub.s32 %s9, 1
      // Predicated region
      $region13: #{lite_mla_forward.3} parent=11 // pred_check
        %p134 = pneg %p70
      $region14: #{lite_mla_forward.3} parent=11 // pred_check_branch
        %136 = sbr.rel (%p134) target = $region16
      $region15: #{lite_mla_forward.3} parent=11 // pred_region
        _
      $region16: #{lite_mla_forward.3} parent=11 // pred_fallthru
        _
      // Predicated region
      $region17: #{lite_mla_forward.3} parent=11 // pred_check
        %p137 = pneg %p91
      $region18: #{lite_mla_forward.3} parent=11 // pred_check_branch
        %139 = sbr.rel (%p137) target = $region20
      $region19: #{lite_mla_forward.3} parent=11 // pred_region
        _
      $region20: #{lite_mla_forward.3} parent=11 // pred_fallthru
        _
    $region12: #{lite_mla_forward.3} parent=5 // pred_fallthru
      _
    %p140 = scmp.lt.s32.totalorder %s9, 2
    // Predicated region
    $region21: #{lite_mla_forward.3} parent=5 // pred_check
      %p141 = pneg %p140
    $region22: #{lite_mla_forward.3} parent=5 // pred_check_branch
      %143 = sbr.rel (%p141) target = $region24
    $region23: #{lite_mla_forward.3} parent=5 // pred_region
      // Predicated region
      $region25: #{lite_mla_forward.3} parent=23 // pred_check
        %p144 = pneg %p43
      $region26: #{lite_mla_forward.3} parent=23 // pred_check_branch
        %146 = sbr.rel (%p144) target = $region28
      $region27: #{lite_mla_forward.3} parent=23 // pred_region
        %s147 = smul.u32 2, %s17
        %p148 = scmp.lt.s32.totalorder %s16, 1
        %s149 = scalar_select %p148, %s16, 1
        %p150 = scmp.lt.s32.totalorder %s147, 1
        %s151 = scalar_select %p150, %s147, 1
        %s152 = smul.addr %s149, 4
        %s153 = sadd.s32 %s151, %s152
        %s154 = smul.addr %s153, 8
        %s155 = scalar_lea.vmem %s0, %s154
        %s156 = smul.u32 2, %s17
      $region28: #{lite_mla_forward.3} parent=23 // pred_fallthru
        _
    $region24: #{lite_mla_forward.3} parent=5 // pred_fallthru
      _
    %p157 = scmp.le.s32.totalorder 1, %s9
    %p158 = scmp.lt.s32.totalorder %s9, 3
    %p159 = pnand %p157, %p158
    %p160 = pneg %p159
    // Predicated region
    $region29: #{lite_mla_forward.3} parent=5 // pred_check
      _
    $region30: #{lite_mla_forward.3} parent=5 // pred_check_branch
      %162 = sbr.rel (%p159) target = $region32
    $region31: #{lite_mla_forward.3} parent=5 // pred_region
      %s163 = ssub.s32 %s9, 1
      %s164 = smul.u32 2, %s19
      %p165 = scmp.lt.s32.totalorder %s18, 1
      %s166 = scalar_select %p165, %s18, 1
      %p167 = scmp.lt.s32.totalorder %s164, 1
      %s168 = scalar_select %p167, %s164, 1
      %s169 = smul.addr %s166, 4
      %s170 = sadd.s32 %s168, %s169
      %s171 = smul.addr %s170, 8
      %s172 = scalar_lea.vmem %s0, %s171
      %p173 = pneg %p49
      %p174 = pneg %p46
      %p175 = pneg %p70
      %p176 = pneg %p67
      %p177 = pneg %p91
      %p178 = pneg %p88
      %p179 = pneg %p119
      %p180 = pneg %p116
      %s181 = smul.u32 2, %s19
      %p182 = scmp.lt.s32.totalorder %s18, 1
      %s183 = scalar_select %p182, %s18, 1
      %p184 = scmp.lt.s32.totalorder %s181, 1
      %s185 = scalar_select %p184, %s181, 1
      %s186 = smul.addr %s183, 12
      %s187 = sadd.s32 %s185, %s186
      %s188 = smul.addr %s187, 8
      %s189 = scalar_lea.vmem %s3, %s188
      %s190 = smul.u32 2, %s19
      %p191 = scmp.lt.s32.totalorder %s18, 1
      %s192 = scalar_select %p191, %s18, 1
      %p193 = scmp.lt.s32.totalorder %s190, 1
      %s194 = scalar_select %p193, %s190, 1
      %s195 = smul.addr %s192, 4
      %s196 = sadd.s32 %s194, %s195
      %s197 = smul.addr %s196, 8
      %s198 = scalar_lea.vmem %s0, %s197
      %s199 = smul.u32 2, %s19
      %s200 = smul.u32 2, %s19
      %p201 = scmp.lt.s32.totalorder %s18, 1
      %s202 = scalar_select %p201, %s18, 1
      %p203 = scmp.lt.s32.totalorder %s200, 1
      %s204 = scalar_select %p203, %s200, 1
      %s205 = smul.addr %s202, 12
      %s206 = sadd.s32 %s204, %s205
      %s207 = smul.addr %s206, 8
      %s208 = scalar_lea.vmem %s3, %s207
      %s209 = smul.u32 2, %s19
      %v210 = vld [vmem:[%s1] sm:$0xff]
      %v211 = vld [vmem:[%s1 + $0x8] sm:$0xff]
      %v212 = vld [vmem:[%s1 + $0x10] sm:$0xff]
      %v213 = vld [vmem:[%s1 + $0x18] sm:$0xff]
      %v214 = vld [vmem:[%s1 + $0x20] sm:$0xff]
      %v215 = vld [vmem:[%s1 + $0x28] sm:$0xff]
      %v216 = vld [vmem:[%s198] sm:$0xff]
      %v217 = vld [vmem:[%s198 + $0x8] sm:$0xff]
      %v218 = vld [vmem:[%s198 + $0x10] sm:$0xff]
      %v219 = vld [vmem:[%s198 + $0x18] sm:$0xff]
      %v220 = vld [vmem:[%s2] sm:$0xff]
      %v221 = vld [vmem:[%s2 + $0x8] sm:$0xff]
      %v222 = vld [vmem:[%s2 + $0x10] sm:$0xff]
      %v223 = vld [vmem:[%s2 + $0x18] sm:$0xff]
      %v224 = vld [vmem:[%s2 + $0x20] sm:$0xff]
      %v225 = vld [vmem:[%s2 + $0x28] sm:$0xff]
      %227 = vset.pattern.permute.xlu0 0
      %228 = vperm.xlu0 %227, %v220
      %v229 = vpop.permute.xlu0 %228
      %232 = vset.pattern.permute.xlu0 0
      %233 = vperm.xlu0 %232, %v221
      %v234 = vpop.permute.xlu0 %233
      %237 = vset.pattern.permute.xlu0 0
      %238 = vperm.xlu0 %237, %v222
      %v239 = vpop.permute.xlu0 %238
      %242 = vset.pattern.permute.xlu0 0
      %243 = vperm.xlu0 %242, %v223
      %v244 = vpop.permute.xlu0 %243
      %247 = vset.pattern.permute.xlu0 0
      %248 = vperm.xlu0 %247, %v224
      %v249 = vpop.permute.xlu0 %248
      %252 = vset.pattern.permute.xlu0 0
      %253 = vperm.xlu0 %252, %v225
      %v254 = vpop.permute.xlu0 %253
      %vm256 = vcmask 130048
      %v258 = vsel %vm256, %v210, 0
      %v261 = vsel %vm256, %v211, 0
      %v264 = vsel %vm256, %v212, 0
      %v267 = vsel %vm256, %v213, 0
      %v270 = vsel %vm256, %v214, 0
      %v273 = vsel %vm256, %v215, 0
      %275 = vmatprep.subr.mxu0 0.0
      %276 = vmatpush1.msra.mxu0 0.0
      %277 = vmatprep.subr.mxu0 0.0
      %278 = vmatpush1.msra.mxu0 0.0
      %279 = vmatprep.subr.mxu0 0.0
      %280 = vmatpush1.msra.mxu0 0.0
      %281 = vmatprep.subr.mxu0 0.0
      %282 = vmatpush1.msra.mxu0 0.0
      %283 = vmatprep.subr.mxu0 0.0
      %284 = vmatpush1.msra.mxu0 0.0
      %285 = vmatprep.subr.mxu0 0.0
      %286 = vmatpush1.msra.mxu0 0.0
      %287 = vmatprep.subr.mxu0 0.0
      %288 = vmatpush1.msra.mxu0 0.0
      %289 = vmatprep.subr.mxu0 0.0
      %290 = vmatpush1.msra.mxu0 0.0
      %291 = vmatprep.subr.mxu0 0.0
      %292 = vmatpush1.msra.mxu0 0.0
      %293 = vmatprep.subr.mxu0 0.0
      %294 = vmatpush1.msra.mxu0 0.0
      %295 = vmatprep.subr.mxu0 0.0
      %296 = vmatpush1.msra.mxu0 0.0
      %297 = vmatprep.subr.mxu0 0.0
      %298 = vmatpush1.msra.mxu0 0.0
      %299 = vmatprep.subr.mxu0 0.0
      %300 = vmatpush1.msra.mxu0 0.0
      %301 = vmatprep.subr.mxu0 0.0
      %302 = vmatpush1.msra.mxu0 0.0
      %303 = vmatprep.subr.mxu0 %v219
      %304 = vmatpush1.msra.mxu0 %v218
      %305 = vmatprep.subr.mxu0 %v217
      %306 = vmatpush1.msra.mxu0 %v216
      %307 = vmatprep.subr.mxu0 0.0
      %308 = vmatpush2.msra.mxu0 0.0
      %309 = vmatprep.subr.mxu0 0.0
      %310 = vmatpush2.msra.mxu0 0.0
      %311 = vmatprep.subr.mxu0 0.0
      %312 = vmatpush2.msra.mxu0 0.0
      %313 = vmatprep.subr.mxu0 0.0
      %314 = vmatpush2.msra.mxu0 0.0
      %315 = vmatprep.subr.mxu0 0.0
      %316 = vmatpush2.msra.mxu0 0.0
      %317 = vmatprep.subr.mxu0 0.0
      %318 = vmatpush2.msra.mxu0 0.0
      %319 = vmatprep.subr.mxu0 0.0
      %320 = vmatpush2.msra.mxu0 0.0
      %321 = vmatprep.subr.mxu0 0.0
      %322 = vmatpush2.msra.mxu0 0.0
      %323 = vmatprep.subr.mxu0 0.0
      %324 = vmatpush2.msra.mxu0 0.0
      %325 = vmatprep.subr.mxu0 0.0
      %326 = vmatpush2.msra.mxu0 0.0
      %327 = vmatprep.subr.mxu0 0.0
      %328 = vmatpush2.msra.mxu0 0.0
      %329 = vmatprep.subr.mxu0 0.0
      %330 = vmatpush2.msra.mxu0 0.0
      %331 = vmatprep.subr.mxu0 0.0
      %332 = vmatpush2.msra.mxu0 0.0
      %333 = vmatprep.subr.mxu0 0.0
      %334 = vmatpush2.msra.mxu0 0.0
      %335 = vmatprep.subr.mxu0 0.0
      %336 = vmatpush2.msra.mxu0 0.0
      %337 = vmatprep.subr.mxu0 0.0
      %338 = vmatpush2.msra.mxu0 0.0
      %339 = vmatprep.mubr.f32.mxu0 0.0
      %340 = vmatmul.mubr.f32.gmra.mxu0 %v258
      %v341 = vpop.f32.mrf.mxu0
      %v342 = vadd.f32 %v229, %v341
      %v343 = vpop.f32.mrf.mxu0
      %v344 = vadd.f32 %v229, %v343
      %345 = vmatprep.mubr.f32.mxu0 0.0
      %346 = vmatmul.mubr.f32.gmra.mxu0 %v261
      %v347 = vpop.f32.mrf.mxu0
      %v348 = vadd.f32 %v234, %v347
      %v349 = vpop.f32.mrf.mxu0
      %v350 = vadd.f32 %v234, %v349
      %351 = vmatprep.mubr.f32.mxu0 0.0
      %352 = vmatmul.mubr.f32.gmra.mxu0 %v264
      %v353 = vpop.f32.mrf.mxu0
      %v354 = vadd.f32 %v239, %v353
      %v355 = vpop.f32.mrf.mxu0
      %v356 = vadd.f32 %v239, %v355
      %357 = vmatprep.mubr.f32.mxu0 0.0
      %358 = vmatmul.mubr.f32.gmra.mxu0 %v267
      %v359 = vpop.f32.mrf.mxu0
      %v360 = vadd.f32 %v244, %v359
      %v361 = vpop.f32.mrf.mxu0
      %v362 = vadd.f32 %v244, %v361
      %363 = vmatprep.mubr.f32.mxu0 0.0
      %364 = vmatmul.mubr.f32.gmra.mxu0 %v270
      %v365 = vpop.f32.mrf.mxu0
      %v366 = vadd.f32 %v249, %v365
      %v367 = vpop.f32.mrf.mxu0
      %v368 = vadd.f32 %v249, %v367
      %369 = vmatprep.mubr.f32.mxu0 0.0
      %370 = vmatmul.mubr.f32.gmra.mxu0 %v273
      %v371 = vpop.f32.mrf.mxu0
      %v372 = vadd.f32 %v254, %v371
      %v373 = vpop.f32.mrf.mxu0
      %v374 = vadd.f32 %v254, %v373
      %375 = vdwg.mxu0
      %376 = vst [vmem:[%s208] sm:$0xff] %v342
      %377 = vst [vmem:[%s208 + $0x8] sm:$0xff] %v344
      %378 = vst [vmem:[%s208 + $0x10] sm:$0xff] %v348
      %379 = vst [vmem:[%s208 + $0x18] sm:$0xff] %v350
      %380 = vst [vmem:[%s208 + $0x20] sm:$0xff] %v354
      %381 = vst [vmem:[%s208 + $0x28] sm:$0xff] %v356
      %382 = vst [vmem:[%s208 + $0x30] sm:$0xff] %v360
      %383 = vst [vmem:[%s208 + $0x38] sm:$0xff] %v362
      %384 = vst [vmem:[%s208 + $0x40] sm:$0xff] %v366
      %385 = vst [vmem:[%s208 + $0x48] sm:$0xff] %v368
      %386 = vst [vmem:[%s208 + $0x50] sm:$0xff] %v372
      %387 = vst [vmem:[%s208 + $0x58] sm:$0xff] %v374
      %s388 = smul.u32 2, %s19
      %p389 = scmp.lt.s32.totalorder %s18, 1
      %s390 = scalar_select %p389, %s18, 1
      %p391 = scmp.lt.s32.totalorder %s388, 1
      %s392 = scalar_select %p391, %s388, 1
      %s393 = smul.addr %s390, 12
      %s394 = sadd.s32 %s392, %s393
      %s395 = smul.addr %s394, 8
      %s396 = scalar_lea.vmem %s3, %s395
      // Predicated region
      $region33: #{lite_mla_forward.3} parent=31 // pred_check
        %p397 = pneg %p116
      $region34: #{lite_mla_forward.3} parent=31 // pred_check_branch
        %399 = sbr.rel (%p397) target = $region36
      $region35: #{lite_mla_forward.3} parent=31 // pred_region
        %s400 = smul.u32 2, %s19
      $region36: #{lite_mla_forward.3} parent=31 // pred_fallthru
        _
    $region32: #{lite_mla_forward.3} parent=5 // pred_fallthru
      _
    %p401 = scmp.le.s32.totalorder 2, %s9
    // Predicated region
    $region37: #{lite_mla_forward.3} parent=5 // pred_check
      %p402 = pneg %p401
    $region38: #{lite_mla_forward.3} parent=5 // pred_check_branch
      %404 = sbr.rel (%p402) target = $region40
    $region39: #{lite_mla_forward.3} parent=5 // pred_region
      %s405 = ssub.s32 %s9, 2
      // Predicated region
      $region41: #{lite_mla_forward.3} parent=39 // pred_check
        %p406 = pneg %p122
      $region42: #{lite_mla_forward.3} parent=39 // pred_check_branch
        %408 = sbr.rel (%p406) target = $region44
      $region43: #{lite_mla_forward.3} parent=39 // pred_region
        %s409 = smul.u32 2, %s21
        %p410 = scmp.lt.s32.totalorder %s20, 1
        %s411 = scalar_select %p410, %s20, 1
        %p412 = scmp.lt.s32.totalorder %s409, 1
        %s413 = scalar_select %p412, %s409, 1
        %s414 = smul.addr %s411, 12
        %s415 = sadd.s32 %s413, %s414
        %s416 = smul.addr %s415, 8
        %s417 = scalar_lea.vmem %s3, %s416
      $region44: #{lite_mla_forward.3} parent=39 // pred_fallthru
        _
    $region40: #{lite_mla_forward.3} parent=5 // pred_fallthru
      _
  $region6: #{lite_mla_forward.3} parent=0 // loop_footer
    %s13 = sadd.s32 1, %s9
  $region7: #{lite_mla_forward.3} parent=0 // loop_footer_branch
    %8 = sbr.rel target = $region3
  $region8: #{lite_mla_forward.3} parent=0 // loop_exit
    _

// kernel: lite_mla_forward.4
$region0: #{lite_mla_forward.4}
  #allocation0 [shape = 'u32[]', space=smem, size = 0x4, offset = 0x4, fixed_abs, tag = 'smem constant byte address 0x4 - core index']
  #allocation1 [shape = 'u32[144,128]{1,0:T(1,128)}', space=vmem, size = 0x12000, scoped, tag = 'internal scratch']
  %s0 = inlined_call_operand.vmem [shape: f32[2,16,256], index: 0, kind: input, shape index: {}]
  %s1 = inlined_call_operand.vmem [shape: f32[128,16], index: 1, kind: input, shape index: {}]
  %s2 = inlined_call_operand.vmem [shape: f32[128,1], index: 2, kind: input, shape index: {}]
  %s3 = inlined_call_operand.vmem [shape: f32[256,16], index: 3, kind: input, shape index: {}]
  %s4 = inlined_call_operand.vmem [shape: f32[256,1], index: 4, kind: input, shape index: {}]
  %s5 = inlined_call_operand.vmem [shape: f32[16,128], index: 5, kind: input, shape index: {}]
  %s6 = inlined_call_operand.vmem [shape: f32[16,1], index: 6, kind: input, shape index: {}]
  %s7 = inlined_call_operand.vmem [shape: f32[2,16,256], index: 7, kind: output, shape index: {}]
  %s8 = sld [smem:[#allocation0]]
  $region61: #{lite_mla_forward.4} parent=0
    _
  %s10 = ssub.s32 1, %s8
  %s11 = scalar_select 0, %s10, %s8
  loop: start=0, step=1, limit=4
  $region2: #{lite_mla_forward.4} parent=0 // loop_pre_header
    _
  $region3: #{lite_mla_forward.4} parent=0 // loop_header
    %s13 = sphi 0, %s17
    %p14 = scmp.ge.s32.totalorder %s13, 4
    %s23 = sphi 0, %s25
    %s26 = sphi 0, %s23
    %s27 = sphi 0, %s26
    %s43 = sphi 0, %s27
    %s47 = sphi 0, %s47
    %s49 = sphi 0, %s47
    %s50 = sphi 0, %s49
    %s64 = sphi 0, %s50
    %s68 = sphi 0, %s68
    %s70 = sphi 0, %s68
    %s71 = sphi 0, %s70
    %s85 = sphi 0, %s71
    %s89 = sphi 0, %s89
    %s91 = sphi 0, %s89
    %s92 = sphi 0, %s91
    %s106 = sphi 0, %s92
    %s110 = sphi 0, %s110
    %s112 = sphi 0, %s110
    %s113 = sphi 0, %s112
    %s127 = sphi 0, %s113
    %s131 = sphi 0, %s131
    %s133 = sphi 0, %s131
    %s134 = sphi 0, %s133
    %s148 = sphi 0, %s134
    %s152 = sphi 0, %s152
    %s154 = sphi 0, %s152
    %s155 = sphi 0, %s154
    %s169 = sphi 0, %s155
    %s175 = sphi 0, %s177
    %s178 = sphi 0, %s175
    %s179 = sphi 0, %s178
    %s195 = sphi 0, %s179
  $region4: #{lite_mla_forward.4} parent=0 // loop_header_branch
    %16 = sbr.rel (%p14) target = $region8
  $region5: #{lite_mla_forward.4} parent=0 // loop_body
    %s18 = ssub.s32 %s13, 1
    %s19 = ssub.s32 %s13, 2
    %s20 = sadd.s32 %s13, 1
    %s21 = ssub.s32 %s13, %s20
    %p22 = scmp.eq.s32.totalorder %s21, 0
    %s24 = sadd.s32 %s23, 1
    %s25 = scalar_select %p22, %s23, %s24
    %p28 = pneg %p22
    %p29 = scmp.eq.s32.totalorder %s13, 1
    %p30 = por %p28, %p29
    %p31 = scmp.ne.s32.totalorder %s23, %s26
    %p32 = scmp.eq.s32.totalorder %s13, 0
    %p33 = por %p31, %p32
    %p34 = scmp.ne.s32.totalorder %s23, %s26
    %p35 = scmp.eq.s32.totalorder %s18, 1
    %p36 = por %p34, %p35
    %p37 = scmp.ne.s32.totalorder %s26, %s27
    %p38 = scmp.eq.s32.totalorder %s18, 0
    %p39 = por %p37, %p38
    %p40 = scmp.ne.s32.totalorder %s26, %s27
    %p41 = scmp.eq.s32.totalorder %s19, 1
    %p42 = por %p40, %p41
    %p44 = scmp.ne.s32.totalorder %s27, %s43
    %p45 = scmp.eq.s32.totalorder %s19, 0
    %p46 = por %p44, %p45
    %s48 = sadd.s32 %s47, 1
    %p51 = scmp.eq.s32.totalorder %s13, 1
    %p52 = scmp.ne.s32.totalorder %s47, %s49
    %p53 = scmp.eq.s32.totalorder %s13, 0
    %p54 = por %p52, %p53
    %p55 = scmp.ne.s32.totalorder %s47, %s49
    %p56 = scmp.eq.s32.totalorder %s18, 1
    %p57 = por %p55, %p56
    %p58 = scmp.ne.s32.totalorder %s49, %s50
    %p59 = scmp.eq.s32.totalorder %s18, 0
    %p60 = por %p58, %p59
    %p61 = scmp.ne.s32.totalorder %s49, %s50
    %p62 = scmp.eq.s32.totalorder %s19, 1
    %p63 = por %p61, %p62
    %p65 = scmp.ne.s32.totalorder %s50, %s64
    %p66 = scmp.eq.s32.totalorder %s19, 0
    %p67 = por %p65, %p66
    %s69 = sadd.s32 %s68, 1
    %p72 = scmp.eq.s32.totalorder %s13, 1
    %p73 = scmp.ne.s32.totalorder %s68, %s70
    %p74 = scmp.eq.s32.totalorder %s13, 0
    %p75 = por %p73, %p74
    %p76 = scmp.ne.s32.totalorder %s68, %s70
    %p77 = scmp.eq.s32.totalorder %s18, 1
    %p78 = por %p76, %p77
    %p79 = scmp.ne.s32.totalorder %s70, %s71
    %p80 = scmp.eq.s32.totalorder %s18, 0
    %p81 = por %p79, %p80
    %p82 = scmp.ne.s32.totalorder %s70, %s71
    %p83 = scmp.eq.s32.totalorder %s19, 1
    %p84 = por %p82, %p83
    %p86 = scmp.ne.s32.totalorder %s71, %s85
    %p87 = scmp.eq.s32.totalorder %s19, 0
    %p88 = por %p86, %p87
    %s90 = sadd.s32 %s89, 1
    %p93 = scmp.eq.s32.totalorder %s13, 1
    %p94 = scmp.ne.s32.totalorder %s89, %s91
    %p95 = scmp.eq.s32.totalorder %s13, 0
    %p96 = por %p94, %p95
    %p97 = scmp.ne.s32.totalorder %s89, %s91
    %p98 = scmp.eq.s32.totalorder %s18, 1
    %p99 = por %p97, %p98
    %p100 = scmp.ne.s32.totalorder %s91, %s92
    %p101 = scmp.eq.s32.totalorder %s18, 0
    %p102 = por %p100, %p101
    %p103 = scmp.ne.s32.totalorder %s91, %s92
    %p104 = scmp.eq.s32.totalorder %s19, 1
    %p105 = por %p103, %p104
    %p107 = scmp.ne.s32.totalorder %s92, %s106
    %p108 = scmp.eq.s32.totalorder %s19, 0
    %p109 = por %p107, %p108
    %s111 = sadd.s32 %s110, 1
    %p114 = scmp.eq.s32.totalorder %s13, 1
    %p115 = scmp.ne.s32.totalorder %s110, %s112
    %p116 = scmp.eq.s32.totalorder %s13, 0
    %p117 = por %p115, %p116
    %p118 = scmp.ne.s32.totalorder %s110, %s112
    %p119 = scmp.eq.s32.totalorder %s18, 1
    %p120 = por %p118, %p119
    %p121 = scmp.ne.s32.totalorder %s112, %s113
    %p122 = scmp.eq.s32.totalorder %s18, 0
    %p123 = por %p121, %p122
    %p124 = scmp.ne.s32.totalorder %s112, %s113
    %p125 = scmp.eq.s32.totalorder %s19, 1
    %p126 = por %p124, %p125
    %p128 = scmp.ne.s32.totalorder %s113, %s127
    %p129 = scmp.eq.s32.totalorder %s19, 0
    %p130 = por %p128, %p129
    %s132 = sadd.s32 %s131, 1
    %p135 = scmp.eq.s32.totalorder %s13, 1
    %p136 = scmp.ne.s32.totalorder %s131, %s133
    %p137 = scmp.eq.s32.totalorder %s13, 0
    %p138 = por %p136, %p137
    %p139 = scmp.ne.s32.totalorder %s131, %s133
    %p140 = scmp.eq.s32.totalorder %s18, 1
    %p141 = por %p139, %p140
    %p142 = scmp.ne.s32.totalorder %s133, %s134
    %p143 = scmp.eq.s32.totalorder %s18, 0
    %p144 = por %p142, %p143
    %p145 = scmp.ne.s32.totalorder %s133, %s134
    %p146 = scmp.eq.s32.totalorder %s19, 1
    %p147 = por %p145, %p146
    %p149 = scmp.ne.s32.totalorder %s134, %s148
    %p150 = scmp.eq.s32.totalorder %s19, 0
    %p151 = por %p149, %p150
    %s153 = sadd.s32 %s152, 1
    %p156 = scmp.eq.s32.totalorder %s13, 1
    %p157 = scmp.ne.s32.totalorder %s152, %s154
    %p158 = scmp.eq.s32.totalorder %s13, 0
    %p159 = por %p157, %p158
    %p160 = scmp.ne.s32.totalorder %s152, %s154
    %p161 = scmp.eq.s32.totalorder %s18, 1
    %p162 = por %p160, %p161
    %p163 = scmp.ne.s32.totalorder %s154, %s155
    %p164 = scmp.eq.s32.totalorder %s18, 0
    %p165 = por %p163, %p164
    %p166 = scmp.ne.s32.totalorder %s154, %s155
    %p167 = scmp.eq.s32.totalorder %s19, 1
    %p168 = por %p166, %p167
    %p170 = scmp.ne.s32.totalorder %s155, %s169
    %p171 = scmp.eq.s32.totalorder %s19, 0
    %p172 = por %p170, %p171
    %s173 = ssub.s32 %s13, %s20
    %p174 = scmp.eq.s32.totalorder %s173, 0
    %s176 = sadd.s32 %s175, 1
    %s177 = scalar_select %p174, %s175, %s176
    %p180 = pneg %p174
    %p181 = scmp.eq.s32.totalorder %s13, 1
    %p182 = por %p180, %p181
    %p183 = scmp.ne.s32.totalorder %s175, %s178
    %p184 = scmp.eq.s32.totalorder %s13, 0
    %p185 = por %p183, %p184
    %p186 = scmp.ne.s32.totalorder %s175, %s178
    %p187 = scmp.eq.s32.totalorder %s18, 1
    %p188 = por %p186, %p187
    %p189 = scmp.ne.s32.totalorder %s178, %s179
    %p190 = scmp.eq.s32.totalorder %s18, 0
    %p191 = por %p189, %p190
    %p192 = scmp.ne.s32.totalorder %s178, %s179
    %p193 = scmp.eq.s32.totalorder %s19, 1
    %p194 = por %p192, %p193
    %p196 = scmp.ne.s32.totalorder %s179, %s195
    %p197 = scmp.eq.s32.totalorder %s19, 0
    %p198 = por %p196, %p197
    %p199 = scmp.le.s32.totalorder 1, %s13
    %p200 = scmp.lt.s32.totalorder %s13, 3
    %p201 = pnand %p199, %p200
    %p202 = pneg %p201
    // Predicated region
    $region9: #{lite_mla_forward.4} parent=5 // pred_check
      _
    $region10: #{lite_mla_forward.4} parent=5 // pred_check_branch
      %204 = sbr.rel (%p201) target = $region12
    $region11: #{lite_mla_forward.4} parent=5 // pred_region
      %s205 = ssub.s32 %s13, 1
      // Predicated region
      $region13: #{lite_mla_forward.4} parent=11 // pred_check
        %p206 = pneg %p60
      $region14: #{lite_mla_forward.4} parent=11 // pred_check_branch
        %208 = sbr.rel (%p206) target = $region16
      $region15: #{lite_mla_forward.4} parent=11 // pred_region
        _
      $region16: #{lite_mla_forward.4} parent=11 // pred_fallthru
        _
      // Predicated region
      $region17: #{lite_mla_forward.4} parent=11 // pred_check
        %p209 = pneg %p81
      $region18: #{lite_mla_forward.4} parent=11 // pred_check_branch
        %211 = sbr.rel (%p209) target = $region20
      $region19: #{lite_mla_forward.4} parent=11 // pred_region
        _
      $region20: #{lite_mla_forward.4} parent=11 // pred_fallthru
        _
      // Predicated region
      $region21: #{lite_mla_forward.4} parent=11 // pred_check
        %p212 = pneg %p102
      $region22: #{lite_mla_forward.4} parent=11 // pred_check_branch
        %214 = sbr.rel (%p212) target = $region24
      $region23: #{lite_mla_forward.4} parent=11 // pred_region
        _
      $region24: #{lite_mla_forward.4} parent=11 // pred_fallthru
        _
      // Predicated region
      $region25: #{lite_mla_forward.4} parent=11 // pred_check
        %p215 = pneg %p123
      $region26: #{lite_mla_forward.4} parent=11 // pred_check_branch
        %217 = sbr.rel (%p215) target = $region28
      $region27: #{lite_mla_forward.4} parent=11 // pred_region
        _
      $region28: #{lite_mla_forward.4} parent=11 // pred_fallthru
        _
      // Predicated region
      $region29: #{lite_mla_forward.4} parent=11 // pred_check
        %p218 = pneg %p144
      $region30: #{lite_mla_forward.4} parent=11 // pred_check_branch
        %220 = sbr.rel (%p218) target = $region32
      $region31: #{lite_mla_forward.4} parent=11 // pred_region
        _
      $region32: #{lite_mla_forward.4} parent=11 // pred_fallthru
        _
      // Predicated region
      $region33: #{lite_mla_forward.4} parent=11 // pred_check
        %p221 = pneg %p165
      $region34: #{lite_mla_forward.4} parent=11 // pred_check_branch
        %223 = sbr.rel (%p221) target = $region36
      $region35: #{lite_mla_forward.4} parent=11 // pred_region
        _
      $region36: #{lite_mla_forward.4} parent=11 // pred_fallthru
        _
    $region12: #{lite_mla_forward.4} parent=5 // pred_fallthru
      _
    %p224 = scmp.lt.s32.totalorder %s13, 2
    // Predicated region
    $region37: #{lite_mla_forward.4} parent=5 // pred_check
      %p225 = pneg %p224
    $region38: #{lite_mla_forward.4} parent=5 // pred_check_branch
      %227 = sbr.rel (%p225) target = $region40
    $region39: #{lite_mla_forward.4} parent=5 // pred_region
      // Predicated region
      $region41: #{lite_mla_forward.4} parent=39 // pred_check
        %p228 = pneg %p33
      $region42: #{lite_mla_forward.4} parent=39 // pred_check_branch
        %230 = sbr.rel (%p228) target = $region44
      $region43: #{lite_mla_forward.4} parent=39 // pred_region
        %p231 = scmp.lt.s32.totalorder %s13, 1
        %s232 = scalar_select %p231, %s13, 1
        %s233 = smul.addr %s232, 4
        %s234 = smul.addr %s233, 8
        %s235 = scalar_lea.vmem %s0, %s234
      $region44: #{lite_mla_forward.4} parent=39 // pred_fallthru
        _
    $region40: #{lite_mla_forward.4} parent=5 // pred_fallthru
      _
    %p236 = scmp.le.s32.totalorder 1, %s13
    %p237 = scmp.lt.s32.totalorder %s13, 3
    %p238 = pnand %p236, %p237
    %p239 = pneg %p238
    // Predicated region
    $region45: #{lite_mla_forward.4} parent=5 // pred_check
      _
    $region46: #{lite_mla_forward.4} parent=5 // pred_check_branch
      %241 = sbr.rel (%p238) target = $region48
    $region47: #{lite_mla_forward.4} parent=5 // pred_region
      %s242 = ssub.s32 %s13, 1
      %p243 = scmp.lt.s32.totalorder %s18, 1
      %s244 = scalar_select %p243, %s18, 1
      %s245 = smul.addr %s244, 4
      %s246 = smul.addr %s245, 8
      %s247 = scalar_lea.vmem %s0, %s246
      %p248 = pneg %p39
      %p249 = pneg %p36
      %p250 = pneg %p60
      %p251 = pneg %p57
      %p252 = pneg %p81
      %p253 = pneg %p78
      %p254 = pneg %p102
      %p255 = pneg %p99
      %p256 = pneg %p123
      %p257 = pneg %p120
      %p258 = pneg %p144
      %p259 = pneg %p141
      %p260 = pneg %p165
      %p261 = pneg %p162
      %p262 = pneg %p191
      %p263 = pneg %p188
      %p264 = scmp.lt.s32.totalorder %s18, 1
      %s265 = scalar_select %p264, %s18, 1
      %s266 = smul.addr %s265, 4
      %s267 = smul.addr %s266, 8
      %s268 = scalar_lea.vmem %s7, %s267
      %p269 = scmp.lt.s32.totalorder %s18, 1
      %s270 = scalar_select %p269, %s18, 1
      %s271 = smul.addr %s270, 4
      %s272 = smul.addr %s271, 8
      %s273 = scalar_lea.vmem %s0, %s272
      %p274 = scmp.lt.s32.totalorder %s18, 1
      %s275 = scalar_select %p274, %s18, 1
      %s276 = smul.addr %s275, 4
      %s277 = smul.addr %s276, 8
      %s278 = scalar_lea.vmem %s7, %s277
      %v279 = vld [vmem:[%s273] sm:$0xff]
      %v280 = vld [vmem:[%s273 + $0x8] sm:$0xff]
      %v281 = vld [vmem:[%s273 + $0x10] sm:$0xff]
      %v282 = vld [vmem:[%s273 + $0x18] sm:$0xff]
      %v283 = vld [vmem:[%s1] sm:$0xff]
      %v284 = vld [vmem:[%s1 + $0x8] sm:$0xff]
      %v285 = vld [vmem:[%s1 + $0x10] sm:$0xff]
      %v286 = vld [vmem:[%s1 + $0x18] sm:$0xff]
      %v287 = vld [vmem:[%s1 + $0x20] sm:$0xff]
      %v288 = vld [vmem:[%s1 + $0x28] sm:$0xff]
      %v289 = vld [vmem:[%s1 + $0x30] sm:$0xff]
      %v290 = vld [vmem:[%s1 + $0x38] sm:$0xff]
      %v291 = vld [vmem:[%s1 + $0x40] sm:$0xff]
      %v292 = vld [vmem:[%s1 + $0x48] sm:$0xff]
      %v293 = vld [vmem:[%s1 + $0x50] sm:$0xff]
      %v294 = vld [vmem:[%s1 + $0x58] sm:$0xff]
      %v295 = vld [vmem:[%s1 + $0x60] sm:$0xff]
      %v296 = vld [vmem:[%s1 + $0x68] sm:$0xff]
      %v297 = vld [vmem:[%s1 + $0x70] sm:$0xff]
      %v298 = vld [vmem:[%s1 + $0x78] sm:$0xff]
      %v299 = vld [vmem:[%s2] sm:$0xff]
      %v300 = vld [vmem:[%s2 + $0x8] sm:$0xff]
      %v301 = vld [vmem:[%s2 + $0x10] sm:$0xff]
      %v302 = vld [vmem:[%s2 + $0x18] sm:$0xff]
      %v303 = vld [vmem:[%s2 + $0x20] sm:$0xff]
      %v304 = vld [vmem:[%s2 + $0x28] sm:$0xff]
      %v305 = vld [vmem:[%s2 + $0x30] sm:$0xff]
      %v306 = vld [vmem:[%s2 + $0x38] sm:$0xff]
      %v307 = vld [vmem:[%s2 + $0x40] sm:$0xff]
      %v308 = vld [vmem:[%s2 + $0x48] sm:$0xff]
      %v309 = vld [vmem:[%s2 + $0x50] sm:$0xff]
      %v310 = vld [vmem:[%s2 + $0x58] sm:$0xff]
      %v311 = vld [vmem:[%s2 + $0x60] sm:$0xff]
      %v312 = vld [vmem:[%s2 + $0x68] sm:$0xff]
      %v313 = vld [vmem:[%s2 + $0x70] sm:$0xff]
      %v314 = vld [vmem:[%s2 + $0x78] sm:$0xff]
      %316 = vset.pattern.permute.xlu0 0
      %317 = vperm.xlu0 %316, %v299
      %v318 = vpop.permute.xlu0 %317
      %321 = vset.pattern.permute.xlu0 0
      %322 = vperm.xlu0 %321, %v300
      %v323 = vpop.permute.xlu0 %322
      %326 = vset.pattern.permute.xlu0 0
      %327 = vperm.xlu0 %326, %v301
      %v328 = vpop.permute.xlu0 %327
      %331 = vset.pattern.permute.xlu0 0
      %332 = vperm.xlu0 %331, %v302
      %v333 = vpop.permute.xlu0 %332
      %336 = vset.pattern.permute.xlu0 0
      %337 = vperm.xlu0 %336, %v303
      %v338 = vpop.permute.xlu0 %337
      %341 = vset.pattern.permute.xlu0 0
      %342 = vperm.xlu0 %341, %v304
      %v343 = vpop.permute.xlu0 %342
      %346 = vset.pattern.permute.xlu0 0
      %347 = vperm.xlu0 %346, %v305
      %v348 = vpop.permute.xlu0 %347
      %351 = vset.pattern.permute.xlu0 0
      %352 = vperm.xlu0 %351, %v306
      %v353 = vpop.permute.xlu0 %352
      %356 = vset.pattern.permute.xlu0 0
      %357 = vperm.xlu0 %356, %v307
      %v358 = vpop.permute.xlu0 %357
      %361 = vset.pattern.permute.xlu0 0
      %362 = vperm.xlu0 %361, %v308
      %v363 = vpop.permute.xlu0 %362
      %366 = vset.pattern.permute.xlu0 0
      %367 = vperm.xlu0 %366, %v309
      %v368 = vpop.permute.xlu0 %367
      %371 = vset.pattern.permute.xlu0 0
      %372 = vperm.xlu0 %371, %v310
      %v373 = vpop.permute.xlu0 %372
      %376 = vset.pattern.permute.xlu0 0
      %377 = vperm.xlu0 %376, %v311
      %v378 = vpop.permute.xlu0 %377
      %381 = vset.pattern.permute.xlu0 0
      %382 = vperm.xlu0 %381, %v312
      %v383 = vpop.permute.xlu0 %382
      %386 = vset.pattern.permute.xlu0 0
      %387 = vperm.xlu0 %386, %v313
      %v388 = vpop.permute.xlu0 %387
      %391 = vset.pattern.permute.xlu0 0
      %392 = vperm.xlu0 %391, %v314
      %v393 = vpop.permute.xlu0 %392
      %vm395 = vcmask 130048
      %v397 = vsel %vm395, %v283, 0
      %v400 = vsel %vm395, %v284, 0
      %v403 = vsel %vm395, %v285, 0
      %v406 = vsel %vm395, %v286, 0
      %v409 = vsel %vm395, %v287, 0
      %v412 = vsel %vm395, %v288, 0
      %v415 = vsel %vm395, %v289, 0
      %v418 = vsel %vm395, %v290, 0
      %v421 = vsel %vm395, %v291, 0
      %v424 = vsel %vm395, %v292, 0
      %v427 = vsel %vm395, %v293, 0
      %v430 = vsel %vm395, %v294, 0
      %v433 = vsel %vm395, %v295, 0
      %v436 = vsel %vm395, %v296, 0
      %v439 = vsel %vm395, %v297, 0
      %v442 = vsel %vm395, %v298, 0
      %444 = vmatprep.subr.mxu0 0.0
      %445 = vmatpush1.msra.mxu0 0.0
      %446 = vmatprep.subr.mxu0 0.0
      %447 = vmatpush1.msra.mxu0 0.0
      %448 = vmatprep.subr.mxu0 0.0
      %449 = vmatpush1.msra.mxu0 0.0
      %450 = vmatprep.subr.mxu0 0.0
      %451 = vmatpush1.msra.mxu0 0.0
      %452 = vmatprep.subr.mxu0 0.0
      %453 = vmatpush1.msra.mxu0 0.0
      %454 = vmatprep.subr.mxu0 0.0
      %455 = vmatpush1.msra.mxu0 0.0
      %456 = vmatprep.subr.mxu0 0.0
      %457 = vmatpush1.msra.mxu0 0.0
      %458 = vmatprep.subr.mxu0 0.0
      %459 = vmatpush1.msra.mxu0 0.0
      %460 = vmatprep.subr.mxu0 0.0
      %461 = vmatpush1.msra.mxu0 0.0
      %462 = vmatprep.subr.mxu0 0.0
      %463 = vmatpush1.msra.mxu0 0.0
      %464 = vmatprep.subr.mxu0 0.0
      %465 = vmatpush1.msra.mxu0 0.0
      %466 = vmatprep.subr.mxu0 0.0
      %467 = vmatpush1.msra.mxu0 0.0
      %468 = vmatprep.subr.mxu0 0.0
      %469 = vmatpush1.msra.mxu0 0.0
      %470 = vmatprep.subr.mxu0 0.0
      %471 = vmatpush1.msra.mxu0 0.0
      %472 = vmatprep.subr.mxu0 %v282
      %473 = vmatpush1.msra.mxu0 %v281
      %474 = vmatprep.subr.mxu0 %v280
      %475 = vmatpush1.msra.mxu0 %v279
      %476 = vmatprep.subr.mxu0 0.0
      %477 = vmatpush2.msra.mxu0 0.0
      %478 = vmatprep.subr.mxu0 0.0
      %479 = vmatpush2.msra.mxu0 0.0
      %480 = vmatprep.subr.mxu0 0.0
      %481 = vmatpush2.msra.mxu0 0.0
      %482 = vmatprep.subr.mxu0 0.0
      %483 = vmatpush2.msra.mxu0 0.0
      %484 = vmatprep.subr.mxu0 0.0
      %485 = vmatpush2.msra.mxu0 0.0
      %486 = vmatprep.subr.mxu0 0.0
      %487 = vmatpush2.msra.mxu0 0.0
      %488 = vmatprep.subr.mxu0 0.0
      %489 = vmatpush2.msra.mxu0 0.0
      %490 = vmatprep.subr.mxu0 0.0
      %491 = vmatpush2.msra.mxu0 0.0
      %492 = vmatprep.subr.mxu0 0.0
      %493 = vmatpush2.msra.mxu0 0.0
      %494 = vmatprep.subr.mxu0 0.0
      %495 = vmatpush2.msra.mxu0 0.0
      %496 = vmatprep.subr.mxu0 0.0
      %497 = vmatpush2.msra.mxu0 0.0
      %498 = vmatprep.subr.mxu0 0.0
      %499 = vmatpush2.msra.mxu0 0.0
      %500 = vmatprep.subr.mxu0 0.0
      %501 = vmatpush2.msra.mxu0 0.0
      %502 = vmatprep.subr.mxu0 0.0
      %503 = vmatpush2.msra.mxu0 0.0
      %504 = vmatprep.subr.mxu0 0.0
      %505 = vmatpush2.msra.mxu0 0.0
      %506 = vmatprep.subr.mxu0 0.0
      %507 = vmatpush2.msra.mxu0 0.0
      %508 = vmatprep.mubr.f32.mxu0 0.0
      %509 = vmatmul.mubr.f32.gmra.mxu0 %v397
      %v510 = vpop.f32.mrf.mxu0
      %v511 = vadd.f32 %v318, %v510
      %v512 = vpop.f32.mrf.mxu0
      %v513 = vadd.f32 %v318, %v512
      %514 = vmatprep.mubr.f32.mxu0 0.0
      %515 = vmatmul.mubr.f32.gmra.mxu0 %v400
      %v516 = vpop.f32.mrf.mxu0
      %v517 = vadd.f32 %v323, %v516
      %v518 = vpop.f32.mrf.mxu0
      %v519 = vadd.f32 %v323, %v518
      %520 = vmatprep.mubr.f32.mxu0 0.0
      %521 = vmatmul.mubr.f32.gmra.mxu0 %v403
      %v522 = vpop.f32.mrf.mxu0
      %v523 = vadd.f32 %v328, %v522
      %v524 = vpop.f32.mrf.mxu0
      %v525 = vadd.f32 %v328, %v524
      %526 = vmatprep.mubr.f32.mxu0 0.0
      %527 = vmatmul.mubr.f32.gmra.mxu0 %v406
      %v528 = vpop.f32.mrf.mxu0
      %v529 = vadd.f32 %v333, %v528
      %v530 = vpop.f32.mrf.mxu0
      %v531 = vadd.f32 %v333, %v530
      %532 = vmatprep.mubr.f32.mxu0 0.0
      %533 = vmatmul.mubr.f32.gmra.mxu0 %v409
      %v534 = vpop.f32.mrf.mxu0
      %v535 = vadd.f32 %v338, %v534
      %v536 = vpop.f32.mrf.mxu0
      %v537 = vadd.f32 %v338, %v536
      %538 = vmatprep.mubr.f32.mxu0 0.0
      %539 = vmatmul.mubr.f32.gmra.mxu0 %v412
      %v540 = vpop.f32.mrf.mxu0
      %v541 = vadd.f32 %v343, %v540
      %v542 = vpop.f32.mrf.mxu0
      %v543 = vadd.f32 %v343, %v542
      %544 = vmatprep.mubr.f32.mxu0 0.0
      %545 = vmatmul.mubr.f32.gmra.mxu0 %v415
      %v546 = vpop.f32.mrf.mxu0
      %v547 = vadd.f32 %v348, %v546
      %v548 = vpop.f32.mrf.mxu0
      %v549 = vadd.f32 %v348, %v548
      %550 = vmatprep.mubr.f32.mxu0 0.0
      %551 = vmatmul.mubr.f32.gmra.mxu0 %v418
      %v552 = vpop.f32.mrf.mxu0
      %v553 = vadd.f32 %v353, %v552
      %v554 = vpop.f32.mrf.mxu0
      %v555 = vadd.f32 %v353, %v554
      %556 = vmatprep.mubr.f32.mxu0 0.0
      %557 = vmatmul.mubr.f32.gmra.mxu0 %v421
      %v558 = vpop.f32.mrf.mxu0
      %v559 = vadd.f32 %v358, %v558
      %v560 = vpop.f32.mrf.mxu0
      %v561 = vadd.f32 %v358, %v560
      %562 = vmatprep.mubr.f32.mxu0 0.0
      %563 = vmatmul.mubr.f32.gmra.mxu0 %v424
      %v564 = vpop.f32.mrf.mxu0
      %v565 = vadd.f32 %v363, %v564
      %v566 = vpop.f32.mrf.mxu0
      %v567 = vadd.f32 %v363, %v566
      %568 = vmatprep.mubr.f32.mxu0 0.0
      %569 = vmatmul.mubr.f32.gmra.mxu0 %v427
      %v570 = vpop.f32.mrf.mxu0
      %v571 = vadd.f32 %v368, %v570
      %v572 = vpop.f32.mrf.mxu0
      %v573 = vadd.f32 %v368, %v572
      %574 = vmatprep.mubr.f32.mxu0 0.0
      %575 = vmatmul.mubr.f32.gmra.mxu0 %v430
      %v576 = vpop.f32.mrf.mxu0
      %v577 = vadd.f32 %v373, %v576
      %v578 = vpop.f32.mrf.mxu0
      %v579 = vadd.f32 %v373, %v578
      %580 = vmatprep.mubr.f32.mxu0 0.0
      %581 = vmatmul.mubr.f32.gmra.mxu0 %v433
      %v582 = vpop.f32.mrf.mxu0
      %v583 = vadd.f32 %v378, %v582
      %v584 = vpop.f32.mrf.mxu0
      %v585 = vadd.f32 %v378, %v584
      %586 = vmatprep.mubr.f32.mxu0 0.0
      %587 = vmatmul.mubr.f32.gmra.mxu0 %v436
      %v588 = vpop.f32.mrf.mxu0
      %v589 = vadd.f32 %v383, %v588
      %v590 = vpop.f32.mrf.mxu0
      %v591 = vadd.f32 %v383, %v590
      %592 = vmatprep.mubr.f32.mxu0 0.0
      %593 = vmatmul.mubr.f32.gmra.mxu0 %v439
      %v594 = vpop.f32.mrf.mxu0
      %v595 = vadd.f32 %v388, %v594
      %v596 = vpop.f32.mrf.mxu0
      %v597 = vadd.f32 %v388, %v596
      %598 = vmatprep.mubr.f32.mxu0 0.0
      %599 = vmatmul.mubr.f32.gmra.mxu0 %v442
      %v600 = vpop.f32.mrf.mxu0
      %v601 = vadd.f32 %v393, %v600
      %v602 = vpop.f32.mrf.mxu0
      %v603 = vadd.f32 %v393, %v602
      %604 = vdwg.mxu0
      %v605 = vld [vmem:[%s3] sm:$0xff]
      %v606 = vld [vmem:[%s3 + $0x8] sm:$0xff]
      %v607 = vld [vmem:[%s3 + $0x10] sm:$0xff]
      %v608 = vld [vmem:[%s3 + $0x18] sm:$0xff]
      %v609 = vld [vmem:[%s3 + $0x20] sm:$0xff]
      %v610 = vld [vmem:[%s3 + $0x28] sm:$0xff]
      %v611 = vld [vmem:[%s3 + $0x30] sm:$0xff]
      %v612 = vld [vmem:[%s3 + $0x38] sm:$0xff]
      %v613 = vld [vmem:[%s3 + $0x40] sm:$0xff]
      %v614 = vld [vmem:[%s3 + $0x48] sm:$0xff]
      %v615 = vld [vmem:[%s3 + $0x50] sm:$0xff]
      %v616 = vld [vmem:[%s3 + $0x58] sm:$0xff]
      %v617 = vld [vmem:[%s3 + $0x60] sm:$0xff]
      %v618 = vld [vmem:[%s3 + $0x68] sm:$0xff]
      %v619 = vld [vmem:[%s3 + $0x70] sm:$0xff]
      %v620 = vld [vmem:[%s3 + $0x78] sm:$0xff]
      %v621 = vld [vmem:[%s3 + $0x80] sm:$0xff]
      %v622 = vld [vmem:[%s3 + $0x88] sm:$0xff]
      %v623 = vld [vmem:[%s3 + $0x90] sm:$0xff]
      %v624 = vld [vmem:[%s3 + $0x98] sm:$0xff]
      %v625 = vld [vmem:[%s3 + $0xa0] sm:$0xff]
      %v626 = vld [vmem:[%s3 + $0xa8] sm:$0xff]
      %v627 = vld [vmem:[%s3 + $0xb0] sm:$0xff]
      %v628 = vld [vmem:[%s3 + $0xb8] sm:$0xff]
      %v629 = vld [vmem:[%s3 + $0xc0] sm:$0xff]
      %v630 = vld [vmem:[%s3 + $0xc8] sm:$0xff]
      %v631 = vld [vmem:[%s3 + $0xd0] sm:$0xff]
      %v632 = vld [vmem:[%s3 + $0xd8] sm:$0xff]
      %v633 = vld [vmem:[%s3 + $0xe0] sm:$0xff]
      %v634 = vld [vmem:[%s3 + $0xe8] sm:$0xff]
      %v635 = vld [vmem:[%s3 + $0xf0] sm:$0xff]
      %v636 = vld [vmem:[%s3 + $0xf8] sm:$0xff]
      %v637 = vld [vmem:[%s4] sm:$0xff]
      %v638 = vld [vmem:[%s4 + $0x8] sm:$0xff]
      %v639 = vld [vmem:[%s4 + $0x10] sm:$0xff]
      %v640 = vld [vmem:[%s4 + $0x18] sm:$0xff]
      %v641 = vld [vmem:[%s4 + $0x20] sm:$0xff]
      %v642 = vld [vmem:[%s4 + $0x28] sm:$0xff]
      %v643 = vld [vmem:[%s4 + $0x30] sm:$0xff]
      %v644 = vld [vmem:[%s4 + $0x38] sm:$0xff]
      %v645 = vld [vmem:[%s4 + $0x40] sm:$0xff]
      %v646 = vld [vmem:[%s4 + $0x48] sm:$0xff]
      %v647 = vld [vmem:[%s4 + $0x50] sm:$0xff]
      %v648 = vld [vmem:[%s4 + $0x58] sm:$0xff]
      %v649 = vld [vmem:[%s4 + $0x60] sm:$0xff]
      %v650 = vld [vmem:[%s4 + $0x68] sm:$0xff]
      %v651 = vld [vmem:[%s4 + $0x70] sm:$0xff]
      %v652 = vld [vmem:[%s4 + $0x78] sm:$0xff]
      %v653 = vld [vmem:[%s4 + $0x80] sm:$0xff]
      %v654 = vld [vmem:[%s4 + $0x88] sm:$0xff]
      %v655 = vld [vmem:[%s4 + $0x90] sm:$0xff]
      %v656 = vld [vmem:[%s4 + $0x98] sm:$0xff]
      %v657 = vld [vmem:[%s4 + $0xa0] sm:$0xff]
      %v658 = vld [vmem:[%s4 + $0xa8] sm:$0xff]
      %v659 = vld [vmem:[%s4 + $0xb0] sm:$0xff]
      %v660 = vld [vmem:[%s4 + $0xb8] sm:$0xff]
      %v661 = vld [vmem:[%s4 + $0xc0] sm:$0xff]
      %v662 = vld [vmem:[%s4 + $0xc8] sm:$0xff]
      %v663 = vld [vmem:[%s4 + $0xd0] sm:$0xff]
      %v664 = vld [vmem:[%s4 + $0xd8] sm:$0xff]
      %v665 = vld [vmem:[%s4 + $0xe0] sm:$0xff]
      %v666 = vld [vmem:[%s4 + $0xe8] sm:$0xff]
      %v667 = vld [vmem:[%s4 + $0xf0] sm:$0xff]
      %v668 = vld [vmem:[%s4 + $0xf8] sm:$0xff]
      %670 = vset.pattern.permute.xlu0 0
      %671 = vperm.xlu0 %670, %v637
      %v672 = vpop.permute.xlu0 %671
      %675 = vset.pattern.permute.xlu0 0
      %676 = vperm.xlu0 %675, %v638
      %v677 = vpop.permute.xlu0 %676
      %680 = vset.pattern.permute.xlu0 0
      %681 = vperm.xlu0 %680, %v639
      %v682 = vpop.permute.xlu0 %681
      %685 = vset.pattern.permute.xlu0 0
      %686 = vperm.xlu0 %685, %v640
      %v687 = vpop.permute.xlu0 %686
      %690 = vset.pattern.permute.xlu0 0
      %691 = vperm.xlu0 %690, %v641
      %v692 = vpop.permute.xlu0 %691
      %695 = vset.pattern.permute.xlu0 0
      %696 = vperm.xlu0 %695, %v642
      %v697 = vpop.permute.xlu0 %696
      %700 = vset.pattern.permute.xlu0 0
      %701 = vperm.xlu0 %700, %v643
      %v702 = vpop.permute.xlu0 %701
      %705 = vset.pattern.permute.xlu0 0
      %706 = vperm.xlu0 %705, %v644
      %v707 = vpop.permute.xlu0 %706
      %710 = vset.pattern.permute.xlu0 0
      %711 = vperm.xlu0 %710, %v645
      %v712 = vpop.permute.xlu0 %711
      %715 = vset.pattern.permute.xlu0 0
      %716 = vperm.xlu0 %715, %v646
      %v717 = vpop.permute.xlu0 %716
      %720 = vset.pattern.permute.xlu0 0
      %721 = vperm.xlu0 %720, %v647
      %v722 = vpop.permute.xlu0 %721
      %725 = vset.pattern.permute.xlu0 0
      %726 = vperm.xlu0 %725, %v648
      %v727 = vpop.permute.xlu0 %726
      %730 = vset.pattern.permute.xlu0 0
      %731 = vperm.xlu0 %730, %v649
      %v732 = vpop.permute.xlu0 %731
      %735 = vset.pattern.permute.xlu0 0
      %736 = vperm.xlu0 %735, %v650
      %v737 = vpop.permute.xlu0 %736
      %740 = vset.pattern.permute.xlu0 0
      %741 = vperm.xlu0 %740, %v651
      %v742 = vpop.permute.xlu0 %741
      %745 = vset.pattern.permute.xlu0 0
      %746 = vperm.xlu0 %745, %v652
      %v747 = vpop.permute.xlu0 %746
      %750 = vset.pattern.permute.xlu0 0
      %751 = vperm.xlu0 %750, %v653
      %v752 = vpop.permute.xlu0 %751
      %755 = vset.pattern.permute.xlu0 0
      %756 = vperm.xlu0 %755, %v654
      %v757 = vpop.permute.xlu0 %756
      %760 = vset.pattern.permute.xlu0 0
      %761 = vperm.xlu0 %760, %v655
      %v762 = vpop.permute.xlu0 %761
      %765 = vset.pattern.permute.xlu0 0
      %766 = vperm.xlu0 %765, %v656
      %v767 = vpop.permute.xlu0 %766
      %770 = vset.pattern.permute.xlu0 0
      %771 = vperm.xlu0 %770, %v657
      %v772 = vpop.permute.xlu0 %771
      %775 = vset.pattern.permute.xlu0 0
      %776 = vperm.xlu0 %775, %v658
      %v777 = vpop.permute.xlu0 %776
      %780 = vset.pattern.permute.xlu0 0
      %781 = vperm.xlu0 %780, %v659
      %v782 = vpop.permute.xlu0 %781
      %785 = vset.pattern.permute.xlu0 0
      %786 = vperm.xlu0 %785, %v660
      %v787 = vpop.permute.xlu0 %786
      %790 = vset.pattern.permute.xlu0 0
      %791 = vperm.xlu0 %790, %v661
      %v792 = vpop.permute.xlu0 %791
      %795 = vset.pattern.permute.xlu0 0
      %796 = vperm.xlu0 %795, %v662
      %v797 = vpop.permute.xlu0 %796
      %800 = vset.pattern.permute.xlu0 0
      %801 = vperm.xlu0 %800, %v663
      %v802 = vpop.permute.xlu0 %801
      %805 = vset.pattern.permute.xlu0 0
      %806 = vperm.xlu0 %805, %v664
      %v807 = vpop.permute.xlu0 %806
      %810 = vset.pattern.permute.xlu0 0
      %811 = vperm.xlu0 %810, %v665
      %v812 = vpop.permute.xlu0 %811
      %815 = vset.pattern.permute.xlu0 0
      %816 = vperm.xlu0 %815, %v666
      %v817 = vpop.permute.xlu0 %816
      %820 = vset.pattern.permute.xlu0 0
      %821 = vperm.xlu0 %820, %v667
      %v822 = vpop.permute.xlu0 %821
      %825 = vset.pattern.permute.xlu0 0
      %826 = vperm.xlu0 %825, %v668
      %v827 = vpop.permute.xlu0 %826
      %v830 = vsel %vm395, %v605, 0
      %v833 = vsel %vm395, %v606, 0
      %v836 = vsel %vm395, %v607, 0
      %v839 = vsel %vm395, %v608, 0
      %v842 = vsel %vm395, %v609, 0
      %v845 = vsel %vm395, %v610, 0
      %v848 = vsel %vm395, %v611, 0
      %v851 = vsel %vm395, %v612, 0
      %v854 = vsel %vm395, %v613, 0
      %v857 = vsel %vm395, %v614, 0
      %v860 = vsel %vm395, %v615, 0
      %v863 = vsel %vm395, %v616, 0
      %v866 = vsel %vm395, %v617, 0
      %v869 = vsel %vm395, %v618, 0
      %v872 = vsel %vm395, %v619, 0
      %v875 = vsel %vm395, %v620, 0
      %v878 = vsel %vm395, %v621, 0
      %v881 = vsel %vm395, %v622, 0
      %v884 = vsel %vm395, %v623, 0
      %v887 = vsel %vm395, %v624, 0
      %v890 = vsel %vm395, %v625, 0
      %v893 = vsel %vm395, %v626, 0
      %v896 = vsel %vm395, %v627, 0
      %v899 = vsel %vm395, %v628, 0
      %v902 = vsel %vm395, %v629, 0
      %v905 = vsel %vm395, %v630, 0
      %v908 = vsel %vm395, %v631, 0
      %v911 = vsel %vm395, %v632, 0
      %v914 = vsel %vm395, %v633, 0
      %v917 = vsel %vm395, %v634, 0
      %v920 = vsel %vm395, %v635, 0
      %v923 = vsel %vm395, %v636, 0
      %925 = vmatprep.subr.mxu0 0.0
      %926 = vmatpush1.msra.mxu0 0.0
      %927 = vmatprep.subr.mxu0 0.0
      %928 = vmatpush1.msra.mxu0 0.0
      %929 = vmatprep.subr.mxu0 0.0
      %930 = vmatpush1.msra.mxu0 0.0
      %931 = vmatprep.subr.mxu0 0.0
      %932 = vmatpush1.msra.mxu0 0.0
      %933 = vmatprep.subr.mxu0 0.0
      %934 = vmatpush1.msra.mxu0 0.0
      %935 = vmatprep.subr.mxu0 0.0
      %936 = vmatpush1.msra.mxu0 0.0
      %937 = vmatprep.subr.mxu0 0.0
      %938 = vmatpush1.msra.mxu0 0.0
      %939 = vmatprep.subr.mxu0 0.0
      %940 = vmatpush1.msra.mxu0 0.0
      %941 = vmatprep.subr.mxu0 0.0
      %942 = vmatpush1.msra.mxu0 0.0
      %943 = vmatprep.subr.mxu0 0.0
      %944 = vmatpush1.msra.mxu0 0.0
      %945 = vmatprep.subr.mxu0 0.0
      %946 = vmatpush1.msra.mxu0 0.0
      %947 = vmatprep.subr.mxu0 0.0
      %948 = vmatpush1.msra.mxu0 0.0
      %949 = vmatprep.subr.mxu0 0.0
      %950 = vmatpush1.msra.mxu0 0.0
      %951 = vmatprep.subr.mxu0 0.0
      %952 = vmatpush1.msra.mxu0 0.0
      %953 = vmatprep.subr.mxu0 %v282
      %954 = vmatpush1.msra.mxu0 %v281
      %955 = vmatprep.subr.mxu0 %v280
      %956 = vmatpush1.msra.mxu0 %v279
      %957 = vmatprep.subr.mxu0 0.0
      %958 = vmatpush2.msra.mxu0 0.0
      %959 = vmatprep.subr.mxu0 0.0
      %960 = vmatpush2.msra.mxu0 0.0
      %961 = vmatprep.subr.mxu0 0.0
      %962 = vmatpush2.msra.mxu0 0.0
      %963 = vmatprep.subr.mxu0 0.0
      %964 = vmatpush2.msra.mxu0 0.0
      %965 = vmatprep.subr.mxu0 0.0
      %966 = vmatpush2.msra.mxu0 0.0
      %967 = vmatprep.subr.mxu0 0.0
      %968 = vmatpush2.msra.mxu0 0.0
      %969 = vmatprep.subr.mxu0 0.0
      %970 = vmatpush2.msra.mxu0 0.0
      %971 = vmatprep.subr.mxu0 0.0
      %972 = vmatpush2.msra.mxu0 0.0
      %973 = vmatprep.subr.mxu0 0.0
      %974 = vmatpush2.msra.mxu0 0.0
      %975 = vmatprep.subr.mxu0 0.0
      %976 = vmatpush2.msra.mxu0 0.0
      %977 = vmatprep.subr.mxu0 0.0
      %978 = vmatpush2.msra.mxu0 0.0
      %979 = vmatprep.subr.mxu0 0.0
      %980 = vmatpush2.msra.mxu0 0.0
      %981 = vmatprep.subr.mxu0 0.0
      %982 = vmatpush2.msra.mxu0 0.0
      %983 = vmatprep.subr.mxu0 0.0
      %984 = vmatpush2.msra.mxu0 0.0
      %985 = vmatprep.subr.mxu0 0.0
      %986 = vmatpush2.msra.mxu0 0.0
      %987 = vmatprep.subr.mxu0 0.0
      %988 = vmatpush2.msra.mxu0 0.0
      %989 = vmatprep.mubr.f32.mxu0 0.0
      %990 = vmatmul.mubr.f32.gmra.mxu0 %v830
      %v991 = vpop.f32.mrf.mxu0
      %v992 = vadd.f32 %v672, %v991
      %v993 = vpop.f32.mrf.mxu0
      %v994 = vadd.f32 %v672, %v993
      %995 = vmatprep.mubr.f32.mxu0 0.0
      %996 = vmatmul.mubr.f32.gmra.mxu0 %v833
      %v997 = vpop.f32.mrf.mxu0
      %v998 = vadd.f32 %v677, %v997
      %v999 = vpop.f32.mrf.mxu0
      %v1000 = vadd.f32 %v677, %v999
      %1001 = vmatprep.mubr.f32.mxu0 0.0
      %1002 = vmatmul.mubr.f32.gmra.mxu0 %v836
      %v1003 = vpop.f32.mrf.mxu0
      %v1004 = vadd.f32 %v682, %v1003
      %v1005 = vpop.f32.mrf.mxu0
      %v1006 = vadd.f32 %v682, %v1005
      %1007 = vmatprep.mubr.f32.mxu0 0.0
      %1008 = vmatmul.mubr.f32.gmra.mxu0 %v839
      %v1009 = vpop.f32.mrf.mxu0
      %v1010 = vadd.f32 %v687, %v1009
      %v1011 = vpop.f32.mrf.mxu0
      %v1012 = vadd.f32 %v687, %v1011
      %1013 = vmatprep.mubr.f32.mxu0 0.0
      %1014 = vmatmul.mubr.f32.gmra.mxu0 %v842
      %v1015 = vpop.f32.mrf.mxu0
      %v1016 = vadd.f32 %v692, %v1015
      %v1017 = vpop.f32.mrf.mxu0
      %v1018 = vadd.f32 %v692, %v1017
      %1019 = vmatprep.mubr.f32.mxu0 0.0
      %1020 = vmatmul.mubr.f32.gmra.mxu0 %v845
      %v1021 = vpop.f32.mrf.mxu0
      %v1022 = vadd.f32 %v697, %v1021
      %v1023 = vpop.f32.mrf.mxu0
      %v1024 = vadd.f32 %v697, %v1023
      %1025 = vmatprep.mubr.f32.mxu0 0.0
      %1026 = vmatmul.mubr.f32.gmra.mxu0 %v848
      %v1027 = vpop.f32.mrf.mxu0
      %v1028 = vadd.f32 %v702, %v1027
      %v1029 = vpop.f32.mrf.mxu0
      %v1030 = vadd.f32 %v702, %v1029
      %1031 = vmatprep.mubr.f32.mxu0 0.0
      %1032 = vmatmul.mubr.f32.gmra.mxu0 %v851
      %v1033 = vpop.f32.mrf.mxu0
      %v1034 = vadd.f32 %v707, %v1033
      %v1035 = vpop.f32.mrf.mxu0
      %v1036 = vadd.f32 %v707, %v1035
      %1037 = vmatprep.mubr.f32.mxu0 0.0
      %1038 = vmatmul.mubr.f32.gmra.mxu0 %v854
      %v1039 = vpop.f32.mrf.mxu0
      %v1040 = vadd.f32 %v712, %v1039
      %v1041 = vpop.f32.mrf.mxu0
      %v1042 = vadd.f32 %v712, %v1041
      %1043 = vmatprep.mubr.f32.mxu0 0.0
      %1044 = vmatmul.mubr.f32.gmra.mxu0 %v857
      %v1045 = vpop.f32.mrf.mxu0
      %v1046 = vadd.f32 %v717, %v1045
      %v1047 = vpop.f32.mrf.mxu0
      %v1048 = vadd.f32 %v717, %v1047
      %1049 = vmatprep.mubr.f32.mxu0 0.0
      %1050 = vmatmul.mubr.f32.gmra.mxu0 %v860
      %v1051 = vpop.f32.mrf.mxu0
      %v1052 = vadd.f32 %v722, %v1051
      %v1053 = vpop.f32.mrf.mxu0
      %v1054 = vadd.f32 %v722, %v1053
      %1055 = vmatprep.mubr.f32.mxu0 0.0
      %1056 = vmatmul.mubr.f32.gmra.mxu0 %v863
      %v1057 = vpop.f32.mrf.mxu0
      %v1058 = vadd.f32 %v727, %v1057
      %v1059 = vpop.f32.mrf.mxu0
      %v1060 = vadd.f32 %v727, %v1059
      %1061 = vmatprep.mubr.f32.mxu0 0.0
      %1062 = vmatmul.mubr.f32.gmra.mxu0 %v866
      %v1063 = vpop.f32.mrf.mxu0
      %v1064 = vadd.f32 %v732, %v1063
      %v1065 = vpop.f32.mrf.mxu0
      %v1066 = vadd.f32 %v732, %v1065
      %1067 = vmatprep.mubr.f32.mxu0 0.0
      %1068 = vmatmul.mubr.f32.gmra.mxu0 %v869
      %v1069 = vpop.f32.mrf.mxu0
      %v1070 = vadd.f32 %v737, %v1069
      %v1071 = vpop.f32.mrf.mxu0
      %v1072 = vadd.f32 %v737, %v1071
      %1073 = vmatprep.mubr.f32.mxu0 0.0
      %1074 = vmatmul.mubr.f32.gmra.mxu0 %v872
      %v1075 = vpop.f32.mrf.mxu0
      %v1076 = vadd.f32 %v742, %v1075
      %v1077 = vpop.f32.mrf.mxu0
      %v1078 = vadd.f32 %v742, %v1077
      %1079 = vmatprep.mubr.f32.mxu0 0.0
      %1080 = vmatmul.mubr.f32.gmra.mxu0 %v875
      %v1081 = vpop.f32.mrf.mxu0
      %v1082 = vadd.f32 %v747, %v1081
      %v1083 = vpop.f32.mrf.mxu0
      %v1084 = vadd.f32 %v747, %v1083
      %1085 = vmatprep.mubr.f32.mxu0 0.0
      %1086 = vmatmul.mubr.f32.gmra.mxu0 %v878
      %v1087 = vpop.f32.mrf.mxu0
      %v1088 = vadd.f32 %v752, %v1087
      %v1089 = vpop.f32.mrf.mxu0
      %v1090 = vadd.f32 %v752, %v1089
      %1091 = vmatprep.mubr.f32.mxu0 0.0
      %1092 = vmatmul.mubr.f32.gmra.mxu0 %v881
      %v1093 = vpop.f32.mrf.mxu0
      %v1094 = vadd.f32 %v757, %v1093
      %v1095 = vpop.f32.mrf.mxu0
      %v1096 = vadd.f32 %v757, %v1095
      %1097 = vmatprep.mubr.f32.mxu0 0.0
      %1098 = vmatmul.mubr.f32.gmra.mxu0 %v884
      %v1099 = vpop.f32.mrf.mxu0
      %v1100 = vadd.f32 %v762, %v1099
      %v1101 = vpop.f32.mrf.mxu0
      %v1102 = vadd.f32 %v762, %v1101
      %1103 = vmatprep.mubr.f32.mxu0 0.0
      %1104 = vmatmul.mubr.f32.gmra.mxu0 %v887
      %v1105 = vpop.f32.mrf.mxu0
      %v1106 = vadd.f32 %v767, %v1105
      %v1107 = vpop.f32.mrf.mxu0
      %v1108 = vadd.f32 %v767, %v1107
      %1109 = vmatprep.mubr.f32.mxu0 0.0
      %1110 = vmatmul.mubr.f32.gmra.mxu0 %v890
      %v1111 = vpop.f32.mrf.mxu0
      %v1112 = vadd.f32 %v772, %v1111
      %v1113 = vpop.f32.mrf.mxu0
      %v1114 = vadd.f32 %v772, %v1113
      %1115 = vmatprep.mubr.f32.mxu0 0.0
      %1116 = vmatmul.mubr.f32.gmra.mxu0 %v893
      %v1117 = vpop.f32.mrf.mxu0
      %v1118 = vadd.f32 %v777, %v1117
      %v1119 = vpop.f32.mrf.mxu0
      %v1120 = vadd.f32 %v777, %v1119
      %1121 = vmatprep.mubr.f32.mxu0 0.0
      %1122 = vmatmul.mubr.f32.gmra.mxu0 %v896
      %v1123 = vpop.f32.mrf.mxu0
      %v1124 = vadd.f32 %v782, %v1123
      %v1125 = vpop.f32.mrf.mxu0
      %v1126 = vadd.f32 %v782, %v1125
      %1127 = vmatprep.mubr.f32.mxu0 0.0
      %1128 = vmatmul.mubr.f32.gmra.mxu0 %v899
      %v1129 = vpop.f32.mrf.mxu0
      %v1130 = vadd.f32 %v787, %v1129
      %v1131 = vpop.f32.mrf.mxu0
      %v1132 = vadd.f32 %v787, %v1131
      %1133 = vmatprep.mubr.f32.mxu0 0.0
      %1134 = vmatmul.mubr.f32.gmra.mxu0 %v902
      %v1135 = vpop.f32.mrf.mxu0
      %v1136 = vadd.f32 %v792, %v1135
      %v1137 = vpop.f32.mrf.mxu0
      %v1138 = vadd.f32 %v792, %v1137
      %1139 = vmatprep.mubr.f32.mxu0 0.0
      %1140 = vmatmul.mubr.f32.gmra.mxu0 %v905
      %v1141 = vpop.f32.mrf.mxu0
      %v1142 = vadd.f32 %v797, %v1141
      %v1143 = vpop.f32.mrf.mxu0
      %v1144 = vadd.f32 %v797, %v1143
      %1145 = vmatprep.mubr.f32.mxu0 0.0
      %1146 = vmatmul.mubr.f32.gmra.mxu0 %v908
      %v1147 = vpop.f32.mrf.mxu0
      %v1148 = vadd.f32 %v802, %v1147
      %v1149 = vpop.f32.mrf.mxu0
      %v1150 = vadd.f32 %v802, %v1149
      %1151 = vmatprep.mubr.f32.mxu0 0.0
      %1152 = vmatmul.mubr.f32.gmra.mxu0 %v911
      %v1153 = vpop.f32.mrf.mxu0
      %v1154 = vadd.f32 %v807, %v1153
      %v1155 = vpop.f32.mrf.mxu0
      %v1156 = vadd.f32 %v807, %v1155
      %1157 = vmatprep.mubr.f32.mxu0 0.0
      %1158 = vmatmul.mubr.f32.gmra.mxu0 %v914
      %v1159 = vpop.f32.mrf.mxu0
      %v1160 = vadd.f32 %v812, %v1159
      %v1161 = vpop.f32.mrf.mxu0
      %v1162 = vadd.f32 %v812, %v1161
      %1163 = vmatprep.mubr.f32.mxu0 0.0
      %1164 = vmatmul.mubr.f32.gmra.mxu0 %v917
      %v1165 = vpop.f32.mrf.mxu0
      %v1166 = vadd.f32 %v817, %v1165
      %v1167 = vpop.f32.mrf.mxu0
      %v1168 = vadd.f32 %v817, %v1167
      %1169 = vmatprep.mubr.f32.mxu0 0.0
      %1170 = vmatmul.mubr.f32.gmra.mxu0 %v920
      %v1171 = vpop.f32.mrf.mxu0
      %v1172 = vadd.f32 %v822, %v1171
      %v1173 = vpop.f32.mrf.mxu0
      %v1174 = vadd.f32 %v822, %v1173
      %1175 = vmatprep.mubr.f32.mxu0 0.0
      %1176 = vmatmul.mubr.f32.gmra.mxu0 %v923
      %v1177 = vpop.f32.mrf.mxu0
      %v1178 = vadd.f32 %v827, %v1177
      %v1179 = vpop.f32.mrf.mxu0
      %v1180 = vadd.f32 %v827, %v1179
      %1181 = vdwg.mxu0
      %v1182 = vmax.f32 %v511, 0.0
      %v1183 = vmax.f32 %v513, 0.0
      %v1184 = vmax.f32 %v517, 0.0
      %v1185 = vmax.f32 %v519, 0.0
      %v1186 = vmax.f32 %v523, 0.0
      %v1187 = vmax.f32 %v525, 0.0
      %v1188 = vmax.f32 %v529, 0.0
      %v1189 = vmax.f32 %v531, 0.0
      %v1190 = vmax.f32 %v535, 0.0
      %v1191 = vmax.f32 %v537, 0.0
      %v1192 = vmax.f32 %v541, 0.0
      %v1193 = vmax.f32 %v543, 0.0
      %v1194 = vmax.f32 %v547, 0.0
      %v1195 = vmax.f32 %v549, 0.0
      %v1196 = vmax.f32 %v553, 0.0
      %v1197 = vmax.f32 %v555, 0.0
      %v1198 = vmax.f32 %v559, 0.0
      %v1199 = vmax.f32 %v561, 0.0
      %v1200 = vmax.f32 %v565, 0.0
      %v1201 = vmax.f32 %v567, 0.0
      %v1202 = vmax.f32 %v571, 0.0
      %v1203 = vmax.f32 %v573, 0.0
      %v1204 = vmax.f32 %v577, 0.0
      %v1205 = vmax.f32 %v579, 0.0
      %v1206 = vmax.f32 %v583, 0.0
      %v1207 = vmax.f32 %v585, 0.0
      %v1208 = vmax.f32 %v589, 0.0
      %v1209 = vmax.f32 %v591, 0.0
      %v1210 = vmax.f32 %v595, 0.0
      %v1211 = vmax.f32 %v597, 0.0
      %v1212 = vmax.f32 %v601, 0.0
      %v1213 = vmax.f32 %v603, 0.0
      %v1214 = vmax.f32 %v992, 0.0
      %v1215 = vmax.f32 %v994, 0.0
      %v1216 = vmax.f32 %v998, 0.0
      %v1217 = vmax.f32 %v1000, 0.0
      %v1218 = vmax.f32 %v1004, 0.0
      %v1219 = vmax.f32 %v1006, 0.0
      %v1220 = vmax.f32 %v1010, 0.0
      %v1221 = vmax.f32 %v1012, 0.0
      %v1222 = vmax.f32 %v1016, 0.0
      %v1223 = vmax.f32 %v1018, 0.0
      %v1224 = vmax.f32 %v1022, 0.0
      %v1225 = vmax.f32 %v1024, 0.0
      %v1226 = vmax.f32 %v1028, 0.0
      %v1227 = vmax.f32 %v1030, 0.0
      %v1228 = vmax.f32 %v1034, 0.0
      %v1229 = vmax.f32 %v1036, 0.0
      %v1230 = vmax.f32 %v1088, 0.0
      %v1231 = vmax.f32 %v1090, 0.0
      %v1232 = vmax.f32 %v1094, 0.0
      %v1233 = vmax.f32 %v1096, 0.0
      %v1234 = vmax.f32 %v1100, 0.0
      %v1235 = vmax.f32 %v1102, 0.0
      %v1236 = vmax.f32 %v1106, 0.0
      %v1237 = vmax.f32 %v1108, 0.0
      %v1238 = vmax.f32 %v1112, 0.0
      %v1239 = vmax.f32 %v1114, 0.0
      %v1240 = vmax.f32 %v1118, 0.0
      %v1241 = vmax.f32 %v1120, 0.0
      %v1242 = vmax.f32 %v1124, 0.0
      %v1243 = vmax.f32 %v1126, 0.0
      %v1244 = vmax.f32 %v1130, 0.0
      %v1245 = vmax.f32 %v1132, 0.0
      %1246 = vmatprep.subr.mxu0 0.0
      %1247 = vmatpush1.xpose.msra.mxu0 0.0
      %1248 = vmatprep.subr.mxu0 0.0
      %1249 = vmatpush1.xpose.msra.mxu0 0.0
      %1250 = vmatprep.subr.mxu0 0.0
      %1251 = vmatpush1.xpose.msra.mxu0 0.0
      %1252 = vmatprep.subr.mxu0 0.0
      %1253 = vmatpush1.xpose.msra.mxu0 0.0
      %1254 = vmatprep.subr.mxu0 0.0
      %1255 = vmatpush1.xpose.msra.mxu0 0.0
      %1256 = vmatprep.subr.mxu0 0.0
      %1257 = vmatpush1.xpose.msra.mxu0 0.0
      %1258 = vmatprep.subr.mxu0 0.0
      %1259 = vmatpush1.xpose.msra.mxu0 0.0
      %1260 = vmatprep.subr.mxu0 0.0
      %1261 = vmatpush1.xpose.msra.mxu0 0.0
      %1262 = vmatprep.subr.mxu0 %v1229
      %1263 = vmatpush1.xpose.msra.mxu0 %v1228
      %1264 = vmatprep.subr.mxu0 %v1227
      %1265 = vmatpush1.xpose.msra.mxu0 %v1226
      %1266 = vmatprep.subr.mxu0 %v1225
      %1267 = vmatpush1.xpose.msra.mxu0 %v1224
      %1268 = vmatprep.subr.mxu0 %v1223
      %1269 = vmatpush1.xpose.msra.mxu0 %v1222
      %1270 = vmatprep.subr.mxu0 %v1221
      %1271 = vmatpush1.xpose.msra.mxu0 %v1220
      %1272 = vmatprep.subr.mxu0 %v1219
      %1273 = vmatpush1.xpose.msra.mxu0 %v1218
      %1274 = vmatprep.subr.mxu0 %v1217
      %1275 = vmatpush1.xpose.msra.mxu0 %v1216
      %1276 = vmatprep.subr.mxu0 %v1215
      %1277 = vmatpush1.xpose.msra.mxu0 %v1214
      %1278 = vmatprep.subr.mxu0 0.0
      %1279 = vmatpush2.xpose.msra.mxu0 0.0
      %1280 = vmatprep.subr.mxu0 0.0
      %1281 = vmatpush2.xpose.msra.mxu0 0.0
      %1282 = vmatprep.subr.mxu0 0.0
      %1283 = vmatpush2.xpose.msra.mxu0 0.0
      %1284 = vmatprep.subr.mxu0 0.0
      %1285 = vmatpush2.xpose.msra.mxu0 0.0
      %1286 = vmatprep.subr.mxu0 0.0
      %1287 = vmatpush2.xpose.msra.mxu0 0.0
      %1288 = vmatprep.subr.mxu0 0.0
      %1289 = vmatpush2.xpose.msra.mxu0 0.0
      %1290 = vmatprep.subr.mxu0 0.0
      %1291 = vmatpush2.xpose.msra.mxu0 0.0
      %1292 = vmatprep.subr.mxu0 0.0
      %1293 = vmatpush2.xpose.msra.mxu0 0.0
      %1294 = vmatprep.subr.mxu0 0.0
      %1295 = vmatpush2.xpose.msra.mxu0 0.0
      %1296 = vmatprep.subr.mxu0 0.0
      %1297 = vmatpush2.xpose.msra.mxu0 0.0
      %1298 = vmatprep.subr.mxu0 0.0
      %1299 = vmatpush2.xpose.msra.mxu0 0.0
      %1300 = vmatprep.subr.mxu0 0.0
      %1301 = vmatpush2.xpose.msra.mxu0 0.0
      %1302 = vmatprep.subr.mxu0 0.0
      %1303 = vmatpush2.xpose.msra.mxu0 0.0
      %1304 = vmatprep.subr.mxu0 0.0
      %1305 = vmatpush2.xpose.msra.mxu0 0.0
      %1306 = vmatprep.subr.mxu0 0.0
      %1307 = vmatpush2.xpose.msra.mxu0 0.0
      %1308 = vmatprep.subr.mxu0 0.0
      %1309 = vmatpush2.xpose.msra.mxu0 0.0
      %1310 = vmatprep.mubr.f32.mxu0 %v1042
      %1311 = vmatmul.mubr.f32.gmra.mxu0 %v1040
      %v1312 = vpop.f32.mrf.mxu0
      %v1313 = vadd.f32 0.0, %v1312
      %v1314 = vpop.f32.mrf.mxu0
      %1315 = vmatprep.mubr.f32.mxu0 %v1048
      %1316 = vmatmul.mubr.f32.gmra.mxu0 %v1046
      %v1317 = vpop.f32.mrf.mxu0
      %v1318 = vadd.f32 0.0, %v1317
      %v1319 = vpop.f32.mrf.mxu0
      %1320 = vmatprep.mubr.f32.mxu0 %v1054
      %1321 = vmatmul.mubr.f32.gmra.mxu0 %v1052
      %v1322 = vpop.f32.mrf.mxu0
      %v1323 = vadd.f32 0.0, %v1322
      %v1324 = vpop.f32.mrf.mxu0
      %1325 = vmatprep.mubr.f32.mxu0 %v1060
      %1326 = vmatmul.mubr.f32.gmra.mxu0 %v1058
      %v1327 = vpop.f32.mrf.mxu0
      %v1328 = vadd.f32 0.0, %v1327
      %v1329 = vpop.f32.mrf.mxu0
      %1330 = vmatprep.mubr.f32.mxu0 %v1066
      %1331 = vmatmul.mubr.f32.gmra.mxu0 %v1064
      %v1332 = vpop.f32.mrf.mxu0
      %v1333 = vadd.f32 0.0, %v1332
      %v1334 = vpop.f32.mrf.mxu0
      %1335 = vmatprep.mubr.f32.mxu0 %v1072
      %1336 = vmatmul.mubr.f32.gmra.mxu0 %v1070
      %v1337 = vpop.f32.mrf.mxu0
      %v1338 = vadd.f32 0.0, %v1337
      %v1339 = vpop.f32.mrf.mxu0
      %1340 = vmatprep.mubr.f32.mxu0 %v1078
      %1341 = vmatmul.mubr.f32.gmra.mxu0 %v1076
      %v1342 = vpop.f32.mrf.mxu0
      %v1343 = vadd.f32 0.0, %v1342
      %v1344 = vpop.f32.mrf.mxu0
      %1345 = vmatprep.mubr.f32.mxu0 %v1084
      %1346 = vmatmul.mubr.f32.gmra.mxu0 %v1082
      %v1347 = vpop.f32.mrf.mxu0
      %v1348 = vadd.f32 0.0, %v1347
      %v1349 = vpop.f32.mrf.mxu0
      %1350 = vdwg.mxu0
      %1351 = vmatprep.subr.mxu0 0.0
      %1352 = vmatpush1.xpose.msra.mxu0 0.0
      %1353 = vmatprep.subr.mxu0 0.0
      %1354 = vmatpush1.xpose.msra.mxu0 0.0
      %1355 = vmatprep.subr.mxu0 0.0
      %1356 = vmatpush1.xpose.msra.mxu0 0.0
      %1357 = vmatprep.subr.mxu0 0.0
      %1358 = vmatpush1.xpose.msra.mxu0 0.0
      %1359 = vmatprep.subr.mxu0 0.0
      %1360 = vmatpush1.xpose.msra.mxu0 0.0
      %1361 = vmatprep.subr.mxu0 0.0
      %1362 = vmatpush1.xpose.msra.mxu0 0.0
      %1363 = vmatprep.subr.mxu0 0.0
      %1364 = vmatpush1.xpose.msra.mxu0 0.0
      %1365 = vmatprep.subr.mxu0 0.0
      %1366 = vmatpush1.xpose.msra.mxu0 0.0
      %1367 = vmatprep.subr.mxu0 %v1245
      %1368 = vmatpush1.xpose.msra.mxu0 %v1244
      %1369 = vmatprep.subr.mxu0 %v1243
      %1370 = vmatpush1.xpose.msra.mxu0 %v1242
      %1371 = vmatprep.subr.mxu0 %v1241
      %1372 = vmatpush1.xpose.msra.mxu0 %v1240
      %1373 = vmatprep.subr.mxu0 %v1239
      %1374 = vmatpush1.xpose.msra.mxu0 %v1238
      %1375 = vmatprep.subr.mxu0 %v1237
      %1376 = vmatpush1.xpose.msra.mxu0 %v1236
      %1377 = vmatprep.subr.mxu0 %v1235
      %1378 = vmatpush1.xpose.msra.mxu0 %v1234
      %1379 = vmatprep.subr.mxu0 %v1233
      %1380 = vmatpush1.xpose.msra.mxu0 %v1232
      %1381 = vmatprep.subr.mxu0 %v1231
      %1382 = vmatpush1.xpose.msra.mxu0 %v1230
      %1383 = vmatprep.subr.mxu0 0.0
      %1384 = vmatpush2.xpose.msra.mxu0 0.0
      %1385 = vmatprep.subr.mxu0 0.0
      %1386 = vmatpush2.xpose.msra.mxu0 0.0
      %1387 = vmatprep.subr.mxu0 0.0
      %1388 = vmatpush2.xpose.msra.mxu0 0.0
      %1389 = vmatprep.subr.mxu0 0.0
      %1390 = vmatpush2.xpose.msra.mxu0 0.0
      %1391 = vmatprep.subr.mxu0 0.0
      %1392 = vmatpush2.xpose.msra.mxu0 0.0
      %1393 = vmatprep.subr.mxu0 0.0
      %1394 = vmatpush2.xpose.msra.mxu0 0.0
      %1395 = vmatprep.subr.mxu0 0.0
      %1396 = vmatpush2.xpose.msra.mxu0 0.0
      %1397 = vmatprep.subr.mxu0 0.0
      %1398 = vmatpush2.xpose.msra.mxu0 0.0
      %1399 = vmatprep.subr.mxu0 0.0
      %1400 = vmatpush2.xpose.msra.mxu0 0.0
      %1401 = vmatprep.subr.mxu0 0.0
      %1402 = vmatpush2.xpose.msra.mxu0 0.0
      %1403 = vmatprep.subr.mxu0 0.0
      %1404 = vmatpush2.xpose.msra.mxu0 0.0
      %1405 = vmatprep.subr.mxu0 0.0
      %1406 = vmatpush2.xpose.msra.mxu0 0.0
      %1407 = vmatprep.subr.mxu0 0.0
      %1408 = vmatpush2.xpose.msra.mxu0 0.0
      %1409 = vmatprep.subr.mxu0 0.0
      %1410 = vmatpush2.xpose.msra.mxu0 0.0
      %1411 = vmatprep.subr.mxu0 0.0
      %1412 = vmatpush2.xpose.msra.mxu0 0.0
      %1413 = vmatprep.subr.mxu0 0.0
      %1414 = vmatpush2.xpose.msra.mxu0 0.0
      %1415 = vmatprep.mubr.f32.mxu0 %v1138
      %1416 = vmatmul.mubr.f32.gmra.mxu0 %v1136
      %v1417 = vpop.f32.mrf.mxu0
      %v1418 = vadd.f32 0.0, %v1417
      %v1419 = vpop.f32.mrf.mxu0
      %1420 = vmatprep.mubr.f32.mxu0 %v1144
      %1421 = vmatmul.mubr.f32.gmra.mxu0 %v1142
      %v1422 = vpop.f32.mrf.mxu0
      %v1423 = vadd.f32 0.0, %v1422
      %v1424 = vpop.f32.mrf.mxu0
      %1425 = vmatprep.mubr.f32.mxu0 %v1150
      %1426 = vmatmul.mubr.f32.gmra.mxu0 %v1148
      %v1427 = vpop.f32.mrf.mxu0
      %v1428 = vadd.f32 0.0, %v1427
      %v1429 = vpop.f32.mrf.mxu0
      %1430 = vmatprep.mubr.f32.mxu0 %v1156
      %1431 = vmatmul.mubr.f32.gmra.mxu0 %v1154
      %v1432 = vpop.f32.mrf.mxu0
      %v1433 = vadd.f32 0.0, %v1432
      %v1434 = vpop.f32.mrf.mxu0
      %1435 = vmatprep.mubr.f32.mxu0 %v1162
      %1436 = vmatmul.mubr.f32.gmra.mxu0 %v1160
      %v1437 = vpop.f32.mrf.mxu0
      %v1438 = vadd.f32 0.0, %v1437
      %v1439 = vpop.f32.mrf.mxu0
      %1440 = vmatprep.mubr.f32.mxu0 %v1168
      %1441 = vmatmul.mubr.f32.gmra.mxu0 %v1166
      %v1442 = vpop.f32.mrf.mxu0
      %v1443 = vadd.f32 0.0, %v1442
      %v1444 = vpop.f32.mrf.mxu0
      %1445 = vmatprep.mubr.f32.mxu0 %v1174
      %1446 = vmatmul.mubr.f32.gmra.mxu0 %v1172
      %v1447 = vpop.f32.mrf.mxu0
      %v1448 = vadd.f32 0.0, %v1447
      %v1449 = vpop.f32.mrf.mxu0
      %1450 = vmatprep.mubr.f32.mxu0 %v1180
      %1451 = vmatmul.mubr.f32.gmra.mxu0 %v1178
      %v1452 = vpop.f32.mrf.mxu0
      %v1453 = vadd.f32 0.0, %v1452
      %v1454 = vpop.f32.mrf.mxu0
      %1455 = vdwg.mxu0
      %v1456 = vadd.f32 %v1214, %v1215
      %1457 = vadd.xlane.f32.xlu0 %v1456
      %v1458 = vpop.xlane.xlu0 %1457
      %v1459 = vadd.f32 %v1216, %v1217
      %1460 = vadd.xlane.f32.xlu0 %v1459
      %v1461 = vpop.xlane.xlu0 %1460
      %v1462 = vadd.f32 %v1218, %v1219
      %1463 = vadd.xlane.f32.xlu0 %v1462
      %v1464 = vpop.xlane.xlu0 %1463
      %v1465 = vadd.f32 %v1220, %v1221
      %1466 = vadd.xlane.f32.xlu0 %v1465
      %v1467 = vpop.xlane.xlu0 %1466
      %v1468 = vadd.f32 %v1222, %v1223
      %1469 = vadd.xlane.f32.xlu0 %v1468
      %v1470 = vpop.xlane.xlu0 %1469
      %v1471 = vadd.f32 %v1224, %v1225
      %1472 = vadd.xlane.f32.xlu0 %v1471
      %v1473 = vpop.xlane.xlu0 %1472
      %v1474 = vadd.f32 %v1226, %v1227
      %1475 = vadd.xlane.f32.xlu0 %v1474
      %v1476 = vpop.xlane.xlu0 %1475
      %v1477 = vadd.f32 %v1228, %v1229
      %1478 = vadd.xlane.f32.xlu0 %v1477
      %v1479 = vpop.xlane.xlu0 %1478
      %v1480 = vadd.f32 %v1230, %v1231
      %1481 = vadd.xlane.f32.xlu0 %v1480
      %v1482 = vpop.xlane.xlu0 %1481
      %v1483 = vadd.f32 %v1232, %v1233
      %1484 = vadd.xlane.f32.xlu0 %v1483
      %v1485 = vpop.xlane.xlu0 %1484
      %v1486 = vadd.f32 %v1234, %v1235
      %1487 = vadd.xlane.f32.xlu0 %v1486
      %v1488 = vpop.xlane.xlu0 %1487
      %v1489 = vadd.f32 %v1236, %v1237
      %1490 = vadd.xlane.f32.xlu0 %v1489
      %v1491 = vpop.xlane.xlu0 %1490
      %v1492 = vadd.f32 %v1238, %v1239
      %1493 = vadd.xlane.f32.xlu0 %v1492
      %v1494 = vpop.xlane.xlu0 %1493
      %v1495 = vadd.f32 %v1240, %v1241
      %1496 = vadd.xlane.f32.xlu0 %v1495
      %v1497 = vpop.xlane.xlu0 %1496
      %v1498 = vadd.f32 %v1242, %v1243
      %1499 = vadd.xlane.f32.xlu0 %v1498
      %v1500 = vpop.xlane.xlu0 %1499
      %v1501 = vadd.f32 %v1244, %v1245
      %1502 = vadd.xlane.f32.xlu0 %v1501
      %v1503 = vpop.xlane.xlu0 %1502
      %vm1504 = vcmask 523264
      %v1506 = vsel %vm1504, %v1313, 0
      %v1509 = vsel %vm1504, %v1318, 0
      %v1512 = vsel %vm1504, %v1323, 0
      %v1515 = vsel %vm1504, %v1328, 0
      %v1518 = vsel %vm1504, %v1333, 0
      %v1521 = vsel %vm1504, %v1338, 0
      %v1524 = vsel %vm1504, %v1343, 0
      %v1527 = vsel %vm1504, %v1348, 0
      %1529 = vmatprep.subr.mxu0 0.0
      %1530 = vmatpush1.msra.mxu0 0.0
      %1531 = vmatprep.subr.mxu0 0.0
      %1532 = vmatpush1.msra.mxu0 0.0
      %1533 = vmatprep.subr.mxu0 0.0
      %1534 = vmatpush1.msra.mxu0 0.0
      %1535 = vmatprep.subr.mxu0 0.0
      %1536 = vmatpush1.msra.mxu0 0.0
      %1537 = vmatprep.subr.mxu0 0.0
      %1538 = vmatpush1.msra.mxu0 0.0
      %1539 = vmatprep.subr.mxu0 0.0
      %1540 = vmatpush1.msra.mxu0 0.0
      %1541 = vmatprep.subr.mxu0 0.0
      %1542 = vmatpush1.msra.mxu0 0.0
      %1543 = vmatprep.subr.mxu0 0.0
      %1544 = vmatpush1.msra.mxu0 0.0
      %1545 = vmatprep.subr.mxu0 %v1197
      %1546 = vmatpush1.msra.mxu0 %v1196
      %1547 = vmatprep.subr.mxu0 %v1195
      %1548 = vmatpush1.msra.mxu0 %v1194
      %1549 = vmatprep.subr.mxu0 %v1193
      %1550 = vmatpush1.msra.mxu0 %v1192
      %1551 = vmatprep.subr.mxu0 %v1191
      %1552 = vmatpush1.msra.mxu0 %v1190
      %1553 = vmatprep.subr.mxu0 %v1189
      %1554 = vmatpush1.msra.mxu0 %v1188
      %1555 = vmatprep.subr.mxu0 %v1187
      %1556 = vmatpush1.msra.mxu0 %v1186
      %1557 = vmatprep.subr.mxu0 %v1185
      %1558 = vmatpush1.msra.mxu0 %v1184
      %1559 = vmatprep.subr.mxu0 %v1183
      %1560 = vmatpush1.msra.mxu0 %v1182
      %1561 = vmatprep.subr.mxu0 0.0
      %1562 = vmatpush2.msra.mxu0 0.0
      %1563 = vmatprep.subr.mxu0 0.0
      %1564 = vmatpush2.msra.mxu0 0.0
      %1565 = vmatprep.subr.mxu0 0.0
      %1566 = vmatpush2.msra.mxu0 0.0
      %1567 = vmatprep.subr.mxu0 0.0
      %1568 = vmatpush2.msra.mxu0 0.0
      %1569 = vmatprep.subr.mxu0 0.0
      %1570 = vmatpush2.msra.mxu0 0.0
      %1571 = vmatprep.subr.mxu0 0.0
      %1572 = vmatpush2.msra.mxu0 0.0
      %1573 = vmatprep.subr.mxu0 0.0
      %1574 = vmatpush2.msra.mxu0 0.0
      %1575 = vmatprep.subr.mxu0 0.0
      %1576 = vmatpush2.msra.mxu0 0.0
      %1577 = vmatprep.subr.mxu0 0.0
      %1578 = vmatpush2.msra.mxu0 0.0
      %1579 = vmatprep.subr.mxu0 0.0
      %1580 = vmatpush2.msra.mxu0 0.0
      %1581 = vmatprep.subr.mxu0 0.0
      %1582 = vmatpush2.msra.mxu0 0.0
      %1583 = vmatprep.subr.mxu0 0.0
      %1584 = vmatpush2.msra.mxu0 0.0
      %1585 = vmatprep.subr.mxu0 0.0
      %1586 = vmatpush2.msra.mxu0 0.0
      %1587 = vmatprep.subr.mxu0 0.0
      %1588 = vmatpush2.msra.mxu0 0.0
      %1589 = vmatprep.subr.mxu0 0.0
      %1590 = vmatpush2.msra.mxu0 0.0
      %1591 = vmatprep.subr.mxu0 0.0
      %1592 = vmatpush2.msra.mxu0 0.0
      %1593 = vmatprep.mubr.f32.mxu0 0.0
      %1594 = vmatmul.mubr.f32.gmra.mxu0 %v1506
      %v1595 = vpop.f32.mrf.mxu0
      %v1596 = vadd.f32 0.0, %v1595
      %v1597 = vpop.f32.mrf.mxu0
      %v1598 = vadd.f32 0.0, %v1597
      %1599 = vmatprep.mubr.f32.mxu0 0.0
      %1600 = vmatmul.mubr.f32.gmra.mxu0 %v1509
      %v1601 = vpop.f32.mrf.mxu0
      %v1602 = vadd.f32 0.0, %v1601
      %v1603 = vpop.f32.mrf.mxu0
      %v1604 = vadd.f32 0.0, %v1603
      %1605 = vmatprep.mubr.f32.mxu0 0.0
      %1606 = vmatmul.mubr.f32.gmra.mxu0 %v1512
      %v1607 = vpop.f32.mrf.mxu0
      %v1608 = vadd.f32 0.0, %v1607
      %v1609 = vpop.f32.mrf.mxu0
      %v1610 = vadd.f32 0.0, %v1609
      %1611 = vmatprep.mubr.f32.mxu0 0.0
      %1612 = vmatmul.mubr.f32.gmra.mxu0 %v1515
      %v1613 = vpop.f32.mrf.mxu0
      %v1614 = vadd.f32 0.0, %v1613
      %v1615 = vpop.f32.mrf.mxu0
      %v1616 = vadd.f32 0.0, %v1615
      %1617 = vmatprep.mubr.f32.mxu0 0.0
      %1618 = vmatmul.mubr.f32.gmra.mxu0 %v1518
      %v1619 = vpop.f32.mrf.mxu0
      %v1620 = vadd.f32 0.0, %v1619
      %v1621 = vpop.f32.mrf.mxu0
      %v1622 = vadd.f32 0.0, %v1621
      %1623 = vmatprep.mubr.f32.mxu0 0.0
      %1624 = vmatmul.mubr.f32.gmra.mxu0 %v1521
      %v1625 = vpop.f32.mrf.mxu0
      %v1626 = vadd.f32 0.0, %v1625
      %v1627 = vpop.f32.mrf.mxu0
      %v1628 = vadd.f32 0.0, %v1627
      %1629 = vmatprep.mubr.f32.mxu0 0.0
      %1630 = vmatmul.mubr.f32.gmra.mxu0 %v1524
      %v1631 = vpop.f32.mrf.mxu0
      %v1632 = vadd.f32 0.0, %v1631
      %v1633 = vpop.f32.mrf.mxu0
      %v1634 = vadd.f32 0.0, %v1633
      %1635 = vmatprep.mubr.f32.mxu0 0.0
      %1636 = vmatmul.mubr.f32.gmra.mxu0 %v1527
      %v1637 = vpop.f32.mrf.mxu0
      %v1638 = vadd.f32 0.0, %v1637
      %v1639 = vpop.f32.mrf.mxu0
      %v1640 = vadd.f32 0.0, %v1639
      %1641 = vdwg.mxu0
      %v1643 = vsel %vm1504, %v1418, 0
      %v1646 = vsel %vm1504, %v1423, 0
      %v1649 = vsel %vm1504, %v1428, 0
      %v1652 = vsel %vm1504, %v1433, 0
      %v1655 = vsel %vm1504, %v1438, 0
      %v1658 = vsel %vm1504, %v1443, 0
      %v1661 = vsel %vm1504, %v1448, 0
      %v1664 = vsel %vm1504, %v1453, 0
      %1666 = vmatprep.subr.mxu0 0.0
      %1667 = vmatpush1.msra.mxu0 0.0
      %1668 = vmatprep.subr.mxu0 0.0
      %1669 = vmatpush1.msra.mxu0 0.0
      %1670 = vmatprep.subr.mxu0 0.0
      %1671 = vmatpush1.msra.mxu0 0.0
      %1672 = vmatprep.subr.mxu0 0.0
      %1673 = vmatpush1.msra.mxu0 0.0
      %1674 = vmatprep.subr.mxu0 0.0
      %1675 = vmatpush1.msra.mxu0 0.0
      %1676 = vmatprep.subr.mxu0 0.0
      %1677 = vmatpush1.msra.mxu0 0.0
      %1678 = vmatprep.subr.mxu0 0.0
      %1679 = vmatpush1.msra.mxu0 0.0
      %1680 = vmatprep.subr.mxu0 0.0
      %1681 = vmatpush1.msra.mxu0 0.0
      %1682 = vmatprep.subr.mxu0 %v1213
      %1683 = vmatpush1.msra.mxu0 %v1212
      %1684 = vmatprep.subr.mxu0 %v1211
      %1685 = vmatpush1.msra.mxu0 %v1210
      %1686 = vmatprep.subr.mxu0 %v1209
      %1687 = vmatpush1.msra.mxu0 %v1208
      %1688 = vmatprep.subr.mxu0 %v1207
      %1689 = vmatpush1.msra.mxu0 %v1206
      %1690 = vmatprep.subr.mxu0 %v1205
      %1691 = vmatpush1.msra.mxu0 %v1204
      %1692 = vmatprep.subr.mxu0 %v1203
      %1693 = vmatpush1.msra.mxu0 %v1202
      %1694 = vmatprep.subr.mxu0 %v1201
      %1695 = vmatpush1.msra.mxu0 %v1200
      %1696 = vmatprep.subr.mxu0 %v1199
      %1697 = vmatpush1.msra.mxu0 %v1198
      %1698 = vmatprep.subr.mxu0 0.0
      %1699 = vmatpush2.msra.mxu0 0.0
      %1700 = vmatprep.subr.mxu0 0.0
      %1701 = vmatpush2.msra.mxu0 0.0
      %1702 = vmatprep.subr.mxu0 0.0
      %1703 = vmatpush2.msra.mxu0 0.0
      %1704 = vmatprep.subr.mxu0 0.0
      %1705 = vmatpush2.msra.mxu0 0.0
      %1706 = vmatprep.subr.mxu0 0.0
      %1707 = vmatpush2.msra.mxu0 0.0
      %1708 = vmatprep.subr.mxu0 0.0
      %1709 = vmatpush2.msra.mxu0 0.0
      %1710 = vmatprep.subr.mxu0 0.0
      %1711 = vmatpush2.msra.mxu0 0.0
      %1712 = vmatprep.subr.mxu0 0.0
      %1713 = vmatpush2.msra.mxu0 0.0
      %1714 = vmatprep.subr.mxu0 0.0
      %1715 = vmatpush2.msra.mxu0 0.0
      %1716 = vmatprep.subr.mxu0 0.0
      %1717 = vmatpush2.msra.mxu0 0.0
      %1718 = vmatprep.subr.mxu0 0.0
      %1719 = vmatpush2.msra.mxu0 0.0
      %1720 = vmatprep.subr.mxu0 0.0
      %1721 = vmatpush2.msra.mxu0 0.0
      %1722 = vmatprep.subr.mxu0 0.0
      %1723 = vmatpush2.msra.mxu0 0.0
      %1724 = vmatprep.subr.mxu0 0.0
      %1725 = vmatpush2.msra.mxu0 0.0
      %1726 = vmatprep.subr.mxu0 0.0
      %1727 = vmatpush2.msra.mxu0 0.0
      %1728 = vmatprep.subr.mxu0 0.0
      %1729 = vmatpush2.msra.mxu0 0.0
      %1730 = vmatprep.mubr.f32.mxu0 0.0
      %1731 = vmatmul.mubr.f32.gmra.mxu0 %v1643
      %v1732 = vpop.f32.mrf.mxu0
      %v1733 = vadd.f32 0.0, %v1732
      %v1734 = vpop.f32.mrf.mxu0
      %v1735 = vadd.f32 0.0, %v1734
      %1736 = vmatprep.mubr.f32.mxu0 0.0
      %1737 = vmatmul.mubr.f32.gmra.mxu0 %v1646
      %v1738 = vpop.f32.mrf.mxu0
      %v1739 = vadd.f32 0.0, %v1738
      %v1740 = vpop.f32.mrf.mxu0
      %v1741 = vadd.f32 0.0, %v1740
      %1742 = vmatprep.mubr.f32.mxu0 0.0
      %1743 = vmatmul.mubr.f32.gmra.mxu0 %v1649
      %v1744 = vpop.f32.mrf.mxu0
      %v1745 = vadd.f32 0.0, %v1744
      %v1746 = vpop.f32.mrf.mxu0
      %v1747 = vadd.f32 0.0, %v1746
      %1748 = vmatprep.mubr.f32.mxu0 0.0
      %1749 = vmatmul.mubr.f32.gmra.mxu0 %v1652
      %v1750 = vpop.f32.mrf.mxu0
      %v1751 = vadd.f32 0.0, %v1750
      %v1752 = vpop.f32.mrf.mxu0
      %v1753 = vadd.f32 0.0, %v1752
      %1754 = vmatprep.mubr.f32.mxu0 0.0
      %1755 = vmatmul.mubr.f32.gmra.mxu0 %v1655
      %v1756 = vpop.f32.mrf.mxu0
      %v1757 = vadd.f32 0.0, %v1756
      %v1758 = vpop.f32.mrf.mxu0
      %v1759 = vadd.f32 0.0, %v1758
      %1760 = vmatprep.mubr.f32.mxu0 0.0
      %1761 = vmatmul.mubr.f32.gmra.mxu0 %v1658
      %v1762 = vpop.f32.mrf.mxu0
      %v1763 = vadd.f32 0.0, %v1762
      %v1764 = vpop.f32.mrf.mxu0
      %v1765 = vadd.f32 0.0, %v1764
      %1766 = vmatprep.mubr.f32.mxu0 0.0
      %1767 = vmatmul.mubr.f32.gmra.mxu0 %v1661
      %v1768 = vpop.f32.mrf.mxu0
      %v1769 = vadd.f32 0.0, %v1768
      %v1770 = vpop.f32.mrf.mxu0
      %v1771 = vadd.f32 0.0, %v1770
      %1772 = vmatprep.mubr.f32.mxu0 0.0
      %1773 = vmatmul.mubr.f32.gmra.mxu0 %v1664
      %v1774 = vpop.f32.mrf.mxu0
      %v1775 = vadd.f32 0.0, %v1774
      %v1776 = vpop.f32.mrf.mxu0
      %v1777 = vadd.f32 0.0, %v1776
      %1778 = vdwg.mxu0
      %v1779 = vmul.f32 %v1182, %v1458
      %v1780 = vmul.f32 %v1183, %v1458
      %v1781 = vmul.f32 %v1184, %v1461
      %v1782 = vmul.f32 %v1185, %v1461
      %v1783 = vmul.f32 %v1186, %v1464
      %v1784 = vmul.f32 %v1187, %v1464
      %v1785 = vmul.f32 %v1188, %v1467
      %v1786 = vmul.f32 %v1189, %v1467
      %v1787 = vmul.f32 %v1190, %v1470
      %v1788 = vmul.f32 %v1191, %v1470
      %v1789 = vmul.f32 %v1192, %v1473
      %v1790 = vmul.f32 %v1193, %v1473
      %v1791 = vmul.f32 %v1194, %v1476
      %v1792 = vmul.f32 %v1195, %v1476
      %v1793 = vmul.f32 %v1196, %v1479
      %v1794 = vmul.f32 %v1197, %v1479
      %v1795 = vmul.f32 %v1198, %v1482
      %v1796 = vmul.f32 %v1199, %v1482
      %v1797 = vmul.f32 %v1200, %v1485
      %v1798 = vmul.f32 %v1201, %v1485
      %v1799 = vmul.f32 %v1202, %v1488
      %v1800 = vmul.f32 %v1203, %v1488
      %v1801 = vmul.f32 %v1204, %v1491
      %v1802 = vmul.f32 %v1205, %v1491
      %v1803 = vmul.f32 %v1206, %v1494
      %v1804 = vmul.f32 %v1207, %v1494
      %v1805 = vmul.f32 %v1208, %v1497
      %v1806 = vmul.f32 %v1209, %v1497
      %v1807 = vmul.f32 %v1210, %v1500
      %v1808 = vmul.f32 %v1211, %v1500
      %v1809 = vmul.f32 %v1212, %v1503
      %v1810 = vmul.f32 %v1213, %v1503
      %v1811 = vadd.f32 %v1779, %v1781
      %v1812 = vadd.f32 %v1811, %v1783
      %v1813 = vadd.f32 %v1812, %v1785
      %v1814 = vadd.f32 %v1813, %v1787
      %v1815 = vadd.f32 %v1814, %v1789
      %v1816 = vadd.f32 %v1815, %v1791
      %v1817 = vadd.f32 %v1816, %v1793
      %v1818 = vrot.slane %v1817, 4
      %v1819 = vadd.f32 %v1817, %v1818
      %v1820 = vrot.slane %v1819, 2
      %v1821 = vadd.f32 %v1819, %v1820
      %v1822 = vrot.slane %v1821, 1
      %v1823 = vadd.f32 %v1821, %v1822
      %v1824 = vadd.f32 %v1780, %v1782
      %v1825 = vadd.f32 %v1824, %v1784
      %v1826 = vadd.f32 %v1825, %v1786
      %v1827 = vadd.f32 %v1826, %v1788
      %v1828 = vadd.f32 %v1827, %v1790
      %v1829 = vadd.f32 %v1828, %v1792
      %v1830 = vadd.f32 %v1829, %v1794
      %v1831 = vrot.slane %v1830, 4
      %v1832 = vadd.f32 %v1830, %v1831
      %v1833 = vrot.slane %v1832, 2
      %v1834 = vadd.f32 %v1832, %v1833
      %v1835 = vrot.slane %v1834, 1
      %v1836 = vadd.f32 %v1834, %v1835
      %v1837 = vadd.f32 %v1795, %v1797
      %v1838 = vadd.f32 %v1837, %v1799
      %v1839 = vadd.f32 %v1838, %v1801
      %v1840 = vadd.f32 %v1839, %v1803
      %v1841 = vadd.f32 %v1840, %v1805
      %v1842 = vadd.f32 %v1841, %v1807
      %v1843 = vadd.f32 %v1842, %v1809
      %v1844 = vrot.slane %v1843, 4
      %v1845 = vadd.f32 %v1843, %v1844
      %v1846 = vrot.slane %v1845, 2
      %v1847 = vadd.f32 %v1845, %v1846
      %v1848 = vrot.slane %v1847, 1
      %v1849 = vadd.f32 %v1847, %v1848
      %v1850 = vadd.f32 %v1796, %v1798
      %v1851 = vadd.f32 %v1850, %v1800
      %v1852 = vadd.f32 %v1851, %v1802
      %v1853 = vadd.f32 %v1852, %v1804
      %v1854 = vadd.f32 %v1853, %v1806
      %v1855 = vadd.f32 %v1854, %v1808
      %v1856 = vadd.f32 %v1855, %v1810
      %v1857 = vrot.slane %v1856, 4
      %v1858 = vadd.f32 %v1856, %v1857
      %v1859 = vrot.slane %v1858, 2
      %v1860 = vadd.f32 %v1858, %v1859
      %v1861 = vrot.slane %v1860, 1
      %v1862 = vadd.f32 %v1860, %v1861
      %v1863 = vadd.f32 %v1823, 1e-15
      %v1864 = vadd.f32 %v1836, 1e-15
      %v1865 = vadd.f32 %v1849, 1e-15
      %v1866 = vadd.f32 %v1862, 1e-15
      %v1867 = vrcp.pop %v1863
      %v1868 = vrcp.pop %v1864
      %v1869 = vrcp.pop %v1865
      %v1870 = vrcp.pop %v1866
      %v1871 = vmul.f32 %v1596, %v1867
      %v1872 = vmul.f32 %v1598, %v1868
      %v1873 = vmul.f32 %v1602, %v1867
      %v1874 = vmul.f32 %v1604, %v1868
      %v1875 = vmul.f32 %v1608, %v1867
      %v1876 = vmul.f32 %v1610, %v1868
      %v1877 = vmul.f32 %v1614, %v1867
      %v1878 = vmul.f32 %v1616, %v1868
      %v1879 = vmul.f32 %v1620, %v1867
      %v1880 = vmul.f32 %v1622, %v1868
      %v1881 = vmul.f32 %v1626, %v1867
      %v1882 = vmul.f32 %v1628, %v1868
      %v1883 = vmul.f32 %v1632, %v1867
      %v1884 = vmul.f32 %v1634, %v1868
      %v1885 = vmul.f32 %v1638, %v1867
      %v1886 = vmul.f32 %v1640, %v1868
      %v1887 = vmul.f32 %v1733, %v1869
      %v1888 = vmul.f32 %v1735, %v1870
      %v1889 = vmul.f32 %v1739, %v1869
      %v1890 = vmul.f32 %v1741, %v1870
      %v1891 = vmul.f32 %v1745, %v1869
      %v1892 = vmul.f32 %v1747, %v1870
      %v1893 = vmul.f32 %v1751, %v1869
      %v1894 = vmul.f32 %v1753, %v1870
      %v1895 = vmul.f32 %v1757, %v1869
      %v1896 = vmul.f32 %v1759, %v1870
      %v1897 = vmul.f32 %v1763, %v1869
      %v1898 = vmul.f32 %v1765, %v1870
      %v1899 = vmul.f32 %v1769, %v1869
      %v1900 = vmul.f32 %v1771, %v1870
      %v1901 = vmul.f32 %v1775, %v1869
      %v1902 = vmul.f32 %v1777, %v1870
      %v1903 = vld [vmem:[%s5] sm:$0xff]
      %v1904 = vld [vmem:[%s5 + $0x8] sm:$0xff]
      %v1905 = vld [vmem:[%s6] sm:$0xff]
      %v1906 = vld [vmem:[%s6 + $0x8] sm:$0xff]
      %1908 = vset.pattern.permute.xlu0 0
      %1909 = vperm.xlu0 %1908, %v1905
      %v1910 = vpop.permute.xlu0 %1909
      %1913 = vset.pattern.permute.xlu0 0
      %1914 = vperm.xlu0 %1913, %v1906
      %v1915 = vpop.permute.xlu0 %1914
      %1917 = vmatprep.subr.mxu0 %v1902
      %1918 = vmatpush1.msra.mxu0 %v1901
      %1919 = vmatprep.subr.mxu0 %v1900
      %1920 = vmatpush1.msra.mxu0 %v1899
      %1921 = vmatprep.subr.mxu0 %v1898
      %1922 = vmatpush1.msra.mxu0 %v1897
      %1923 = vmatprep.subr.mxu0 %v1896
      %1924 = vmatpush1.msra.mxu0 %v1895
      %1925 = vmatprep.subr.mxu0 %v1894
      %1926 = vmatpush1.msra.mxu0 %v1893
      %1927 = vmatprep.subr.mxu0 %v1892
      %1928 = vmatpush1.msra.mxu0 %v1891
      %1929 = vmatprep.subr.mxu0 %v1890
      %1930 = vmatpush1.msra.mxu0 %v1889
      %1931 = vmatprep.subr.mxu0 %v1888
      %1932 = vmatpush1.msra.mxu0 %v1887
      %1933 = vmatprep.subr.mxu0 %v1886
      %1934 = vmatpush1.msra.mxu0 %v1885
      %1935 = vmatprep.subr.mxu0 %v1884
      %1936 = vmatpush1.msra.mxu0 %v1883
      %1937 = vmatprep.subr.mxu0 %v1882
      %1938 = vmatpush1.msra.mxu0 %v1881
      %1939 = vmatprep.subr.mxu0 %v1880
      %1940 = vmatpush1.msra.mxu0 %v1879
      %1941 = vmatprep.subr.mxu0 %v1878
      %1942 = vmatpush1.msra.mxu0 %v1877
      %1943 = vmatprep.subr.mxu0 %v1876
      %1944 = vmatpush1.msra.mxu0 %v1875
      %1945 = vmatprep.subr.mxu0 %v1874
      %1946 = vmatpush1.msra.mxu0 %v1873
      %1947 = vmatprep.subr.mxu0 %v1872
      %1948 = vmatpush1.msra.mxu0 %v1871
      %1949 = vmatprep.subr.mxu0 0.0
      %1950 = vmatpush2.msra.mxu0 0.0
      %1951 = vmatprep.subr.mxu0 0.0
      %1952 = vmatpush2.msra.mxu0 0.0
      %1953 = vmatprep.subr.mxu0 0.0
      %1954 = vmatpush2.msra.mxu0 0.0
      %1955 = vmatprep.subr.mxu0 0.0
      %1956 = vmatpush2.msra.mxu0 0.0
      %1957 = vmatprep.subr.mxu0 0.0
      %1958 = vmatpush2.msra.mxu0 0.0
      %1959 = vmatprep.subr.mxu0 0.0
      %1960 = vmatpush2.msra.mxu0 0.0
      %1961 = vmatprep.subr.mxu0 0.0
      %1962 = vmatpush2.msra.mxu0 0.0
      %1963 = vmatprep.subr.mxu0 0.0
      %1964 = vmatpush2.msra.mxu0 0.0
      %1965 = vmatprep.subr.mxu0 0.0
      %1966 = vmatpush2.msra.mxu0 0.0
      %1967 = vmatprep.subr.mxu0 0.0
      %1968 = vmatpush2.msra.mxu0 0.0
      %1969 = vmatprep.subr.mxu0 0.0
      %1970 = vmatpush2.msra.mxu0 0.0
      %1971 = vmatprep.subr.mxu0 0.0
      %1972 = vmatpush2.msra.mxu0 0.0
      %1973 = vmatprep.subr.mxu0 0.0
      %1974 = vmatpush2.msra.mxu0 0.0
      %1975 = vmatprep.subr.mxu0 0.0
      %1976 = vmatpush2.msra.mxu0 0.0
      %1977 = vmatprep.subr.mxu0 0.0
      %1978 = vmatpush2.msra.mxu0 0.0
      %1979 = vmatprep.subr.mxu0 0.0
      %1980 = vmatpush2.msra.mxu0 0.0
      %1981 = vmatprep.mubr.f32.mxu0 0.0
      %1982 = vmatmul.mubr.f32.gmra.mxu0 %v1903
      %v1983 = vpop.f32.mrf.mxu0
      %v1984 = vadd.f32 %v1910, %v1983
      %v1985 = vpop.f32.mrf.mxu0
      %v1986 = vadd.f32 %v1910, %v1985
      %1987 = vmatprep.mubr.f32.mxu0 0.0
      %1988 = vmatmul.mubr.f32.gmra.mxu0 %v1904
      %v1989 = vpop.f32.mrf.mxu0
      %v1990 = vadd.f32 %v1915, %v1989
      %v1991 = vpop.f32.mrf.mxu0
      %v1992 = vadd.f32 %v1915, %v1991
      %1993 = vdwg.mxu0
      %1994 = vst [vmem:[%s278] sm:$0xff] %v1984
      %1995 = vst [vmem:[%s278 + $0x8] sm:$0xff] %v1986
      %1996 = vst [vmem:[%s278 + $0x10] sm:$0xff] %v1990
      %1997 = vst [vmem:[%s278 + $0x18] sm:$0xff] %v1992
      %p1998 = scmp.lt.s32.totalorder %s18, 1
      %s1999 = scalar_select %p1998, %s18, 1
      %s2000 = smul.addr %s1999, 4
      %s2001 = smul.addr %s2000, 8
      %s2002 = scalar_lea.vmem %s7, %s2001
      // Predicated region
      $region49: #{lite_mla_forward.4} parent=47 // pred_check
        %p2003 = pneg %p188
      $region50: #{lite_mla_forward.4} parent=47 // pred_check_branch
        %2005 = sbr.rel (%p2003) target = $region52
      $region51: #{lite_mla_forward.4} parent=47 // pred_region
        _
      $region52: #{lite_mla_forward.4} parent=47 // pred_fallthru
        _
    $region48: #{lite_mla_forward.4} parent=5 // pred_fallthru
      _
    %p2006 = scmp.le.s32.totalorder 2, %s13
    // Predicated region
    $region53: #{lite_mla_forward.4} parent=5 // pred_check
      %p2007 = pneg %p2006
    $region54: #{lite_mla_forward.4} parent=5 // pred_check_branch
      %2009 = sbr.rel (%p2007) target = $region56
    $region55: #{lite_mla_forward.4} parent=5 // pred_region
      %s2010 = ssub.s32 %s13, 2
      // Predicated region
      $region57: #{lite_mla_forward.4} parent=55 // pred_check
        %p2011 = pneg %p194
      $region58: #{lite_mla_forward.4} parent=55 // pred_check_branch
        %2013 = sbr.rel (%p2011) target = $region60
      $region59: #{lite_mla_forward.4} parent=55 // pred_region
        %p2014 = scmp.lt.s32.totalorder %s19, 1
        %s2015 = scalar_select %p2014, %s19, 1
        %s2016 = smul.addr %s2015, 4
        %s2017 = smul.addr %s2016, 8
        %s2018 = scalar_lea.vmem %s7, %s2017
      $region60: #{lite_mla_forward.4} parent=55 // pred_fallthru
        _
    $region56: #{lite_mla_forward.4} parent=5 // pred_fallthru
      _
  $region6: #{lite_mla_forward.4} parent=0 // loop_footer
    %s17 = sadd.s32 1, %s13
  $region7: #{lite_mla_forward.4} parent=0 // loop_footer_branch
    %12 = sbr.rel target = $region3
  $region8: #{lite_mla_forward.4} parent=0 // loop_exit
    _

// kernel: lite_mla_forward.5
$region0: #{lite_mla_forward.5}
  #allocation0 [shape = 'u32[]', space=smem, size = 0x4, offset = 0x4, fixed_abs, tag = 'smem constant byte address 0x4 - core index']
  #allocation1 [shape = 'u32[144,128]{1,0:T(1,128)}', space=vmem, size = 0x12000, scoped, tag = 'internal scratch']
  %s0 = inlined_call_operand.vmem [shape: f32[2,48,256], index: 0, kind: input, shape index: {}]
  %s1 = inlined_call_operand.vmem [shape: f32[128,48], index: 1, kind: input, shape index: {}]
  %s2 = inlined_call_operand.vmem [shape: f32[128,1], index: 2, kind: input, shape index: {}]
  %s3 = inlined_call_operand.vmem [shape: f32[256,48], index: 3, kind: input, shape index: {}]
  %s4 = inlined_call_operand.vmem [shape: f32[256,1], index: 4, kind: input, shape index: {}]
  %s5 = inlined_call_operand.vmem [shape: f32[16,128], index: 5, kind: input, shape index: {}]
  %s6 = inlined_call_operand.vmem [shape: f32[16,1], index: 6, kind: input, shape index: {}]
  %s7 = inlined_call_operand.vmem [shape: f32[2,16,256], index: 7, kind: input, shape index: {}]
  %s8 = inlined_call_operand.vmem [shape: f32[2,16,256], index: 8, kind: output, shape index: {}]
  %s9 = sld [smem:[#allocation0]]
  $region65: #{lite_mla_forward.5} parent=0
    _
  %s11 = ssub.s32 1, %s9
  %s12 = scalar_select 0, %s11, %s9
  loop: start=0, step=1, limit=4
  $region2: #{lite_mla_forward.5} parent=0 // loop_pre_header
    _
  $region3: #{lite_mla_forward.5} parent=0 // loop_header
    %s14 = sphi 0, %s18
    %p15 = scmp.ge.s32.totalorder %s14, 4
    %s24 = sphi 0, %s26
    %s27 = sphi 0, %s24
    %s28 = sphi 0, %s27
    %s44 = sphi 0, %s28
    %s48 = sphi 0, %s48
    %s50 = sphi 0, %s48
    %s51 = sphi 0, %s50
    %s65 = sphi 0, %s51
    %s69 = sphi 0, %s69
    %s71 = sphi 0, %s69
    %s72 = sphi 0, %s71
    %s86 = sphi 0, %s72
    %s90 = sphi 0, %s90
    %s92 = sphi 0, %s90
    %s93 = sphi 0, %s92
    %s107 = sphi 0, %s93
    %s111 = sphi 0, %s111
    %s113 = sphi 0, %s111
    %s114 = sphi 0, %s113
    %s128 = sphi 0, %s114
    %s132 = sphi 0, %s132
    %s134 = sphi 0, %s132
    %s135 = sphi 0, %s134
    %s149 = sphi 0, %s135
    %s153 = sphi 0, %s153
    %s155 = sphi 0, %s153
    %s156 = sphi 0, %s155
    %s170 = sphi 0, %s156
    %s176 = sphi 0, %s178
    %s179 = sphi 0, %s176
    %s180 = sphi 0, %s179
    %s196 = sphi 0, %s180
    %s202 = sphi 0, %s204
    %s205 = sphi 0, %s202
    %s206 = sphi 0, %s205
    %s222 = sphi 0, %s206
  $region4: #{lite_mla_forward.5} parent=0 // loop_header_branch
    %17 = sbr.rel (%p15) target = $region8
  $region5: #{lite_mla_forward.5} parent=0 // loop_body
    %s19 = ssub.s32 %s14, 1
    %s20 = ssub.s32 %s14, 2
    %s21 = sadd.s32 %s14, 1
    %s22 = ssub.s32 %s14, %s21
    %p23 = scmp.eq.s32.totalorder %s22, 0
    %s25 = sadd.s32 %s24, 1
    %s26 = scalar_select %p23, %s24, %s25
    %p29 = pneg %p23
    %p30 = scmp.eq.s32.totalorder %s14, 1
    %p31 = por %p29, %p30
    %p32 = scmp.ne.s32.totalorder %s24, %s27
    %p33 = scmp.eq.s32.totalorder %s14, 0
    %p34 = por %p32, %p33
    %p35 = scmp.ne.s32.totalorder %s24, %s27
    %p36 = scmp.eq.s32.totalorder %s19, 1
    %p37 = por %p35, %p36
    %p38 = scmp.ne.s32.totalorder %s27, %s28
    %p39 = scmp.eq.s32.totalorder %s19, 0
    %p40 = por %p38, %p39
    %p41 = scmp.ne.s32.totalorder %s27, %s28
    %p42 = scmp.eq.s32.totalorder %s20, 1
    %p43 = por %p41, %p42
    %p45 = scmp.ne.s32.totalorder %s28, %s44
    %p46 = scmp.eq.s32.totalorder %s20, 0
    %p47 = por %p45, %p46
    %s49 = sadd.s32 %s48, 1
    %p52 = scmp.eq.s32.totalorder %s14, 1
    %p53 = scmp.ne.s32.totalorder %s48, %s50
    %p54 = scmp.eq.s32.totalorder %s14, 0
    %p55 = por %p53, %p54
    %p56 = scmp.ne.s32.totalorder %s48, %s50
    %p57 = scmp.eq.s32.totalorder %s19, 1
    %p58 = por %p56, %p57
    %p59 = scmp.ne.s32.totalorder %s50, %s51
    %p60 = scmp.eq.s32.totalorder %s19, 0
    %p61 = por %p59, %p60
    %p62 = scmp.ne.s32.totalorder %s50, %s51
    %p63 = scmp.eq.s32.totalorder %s20, 1
    %p64 = por %p62, %p63
    %p66 = scmp.ne.s32.totalorder %s51, %s65
    %p67 = scmp.eq.s32.totalorder %s20, 0
    %p68 = por %p66, %p67
    %s70 = sadd.s32 %s69, 1
    %p73 = scmp.eq.s32.totalorder %s14, 1
    %p74 = scmp.ne.s32.totalorder %s69, %s71
    %p75 = scmp.eq.s32.totalorder %s14, 0
    %p76 = por %p74, %p75
    %p77 = scmp.ne.s32.totalorder %s69, %s71
    %p78 = scmp.eq.s32.totalorder %s19, 1
    %p79 = por %p77, %p78
    %p80 = scmp.ne.s32.totalorder %s71, %s72
    %p81 = scmp.eq.s32.totalorder %s19, 0
    %p82 = por %p80, %p81
    %p83 = scmp.ne.s32.totalorder %s71, %s72
    %p84 = scmp.eq.s32.totalorder %s20, 1
    %p85 = por %p83, %p84
    %p87 = scmp.ne.s32.totalorder %s72, %s86
    %p88 = scmp.eq.s32.totalorder %s20, 0
    %p89 = por %p87, %p88
    %s91 = sadd.s32 %s90, 1
    %p94 = scmp.eq.s32.totalorder %s14, 1
    %p95 = scmp.ne.s32.totalorder %s90, %s92
    %p96 = scmp.eq.s32.totalorder %s14, 0
    %p97 = por %p95, %p96
    %p98 = scmp.ne.s32.totalorder %s90, %s92
    %p99 = scmp.eq.s32.totalorder %s19, 1
    %p100 = por %p98, %p99
    %p101 = scmp.ne.s32.totalorder %s92, %s93
    %p102 = scmp.eq.s32.totalorder %s19, 0
    %p103 = por %p101, %p102
    %p104 = scmp.ne.s32.totalorder %s92, %s93
    %p105 = scmp.eq.s32.totalorder %s20, 1
    %p106 = por %p104, %p105
    %p108 = scmp.ne.s32.totalorder %s93, %s107
    %p109 = scmp.eq.s32.totalorder %s20, 0
    %p110 = por %p108, %p109
    %s112 = sadd.s32 %s111, 1
    %p115 = scmp.eq.s32.totalorder %s14, 1
    %p116 = scmp.ne.s32.totalorder %s111, %s113
    %p117 = scmp.eq.s32.totalorder %s14, 0
    %p118 = por %p116, %p117
    %p119 = scmp.ne.s32.totalorder %s111, %s113
    %p120 = scmp.eq.s32.totalorder %s19, 1
    %p121 = por %p119, %p120
    %p122 = scmp.ne.s32.totalorder %s113, %s114
    %p123 = scmp.eq.s32.totalorder %s19, 0
    %p124 = por %p122, %p123
    %p125 = scmp.ne.s32.totalorder %s113, %s114
    %p126 = scmp.eq.s32.totalorder %s20, 1
    %p127 = por %p125, %p126
    %p129 = scmp.ne.s32.totalorder %s114, %s128
    %p130 = scmp.eq.s32.totalorder %s20, 0
    %p131 = por %p129, %p130
    %s133 = sadd.s32 %s132, 1
    %p136 = scmp.eq.s32.totalorder %s14, 1
    %p137 = scmp.ne.s32.totalorder %s132, %s134
    %p138 = scmp.eq.s32.totalorder %s14, 0
    %p139 = por %p137, %p138
    %p140 = scmp.ne.s32.totalorder %s132, %s134
    %p141 = scmp.eq.s32.totalorder %s19, 1
    %p142 = por %p140, %p141
    %p143 = scmp.ne.s32.totalorder %s134, %s135
    %p144 = scmp.eq.s32.totalorder %s19, 0
    %p145 = por %p143, %p144
    %p146 = scmp.ne.s32.totalorder %s134, %s135
    %p147 = scmp.eq.s32.totalorder %s20, 1
    %p148 = por %p146, %p147
    %p150 = scmp.ne.s32.totalorder %s135, %s149
    %p151 = scmp.eq.s32.totalorder %s20, 0
    %p152 = por %p150, %p151
    %s154 = sadd.s32 %s153, 1
    %p157 = scmp.eq.s32.totalorder %s14, 1
    %p158 = scmp.ne.s32.totalorder %s153, %s155
    %p159 = scmp.eq.s32.totalorder %s14, 0
    %p160 = por %p158, %p159
    %p161 = scmp.ne.s32.totalorder %s153, %s155
    %p162 = scmp.eq.s32.totalorder %s19, 1
    %p163 = por %p161, %p162
    %p164 = scmp.ne.s32.totalorder %s155, %s156
    %p165 = scmp.eq.s32.totalorder %s19, 0
    %p166 = por %p164, %p165
    %p167 = scmp.ne.s32.totalorder %s155, %s156
    %p168 = scmp.eq.s32.totalorder %s20, 1
    %p169 = por %p167, %p168
    %p171 = scmp.ne.s32.totalorder %s156, %s170
    %p172 = scmp.eq.s32.totalorder %s20, 0
    %p173 = por %p171, %p172
    %s174 = ssub.s32 %s14, %s21
    %p175 = scmp.eq.s32.totalorder %s174, 0
    %s177 = sadd.s32 %s176, 1
    %s178 = scalar_select %p175, %s176, %s177
    %p181 = pneg %p175
    %p182 = scmp.eq.s32.totalorder %s14, 1
    %p183 = por %p181, %p182
    %p184 = scmp.ne.s32.totalorder %s176, %s179
    %p185 = scmp.eq.s32.totalorder %s14, 0
    %p186 = por %p184, %p185
    %p187 = scmp.ne.s32.totalorder %s176, %s179
    %p188 = scmp.eq.s32.totalorder %s19, 1
    %p189 = por %p187, %p188
    %p190 = scmp.ne.s32.totalorder %s179, %s180
    %p191 = scmp.eq.s32.totalorder %s19, 0
    %p192 = por %p190, %p191
    %p193 = scmp.ne.s32.totalorder %s179, %s180
    %p194 = scmp.eq.s32.totalorder %s20, 1
    %p195 = por %p193, %p194
    %p197 = scmp.ne.s32.totalorder %s180, %s196
    %p198 = scmp.eq.s32.totalorder %s20, 0
    %p199 = por %p197, %p198
    %s200 = ssub.s32 %s14, %s21
    %p201 = scmp.eq.s32.totalorder %s200, 0
    %s203 = sadd.s32 %s202, 1
    %s204 = scalar_select %p201, %s202, %s203
    %p207 = pneg %p201
    %p208 = scmp.eq.s32.totalorder %s14, 1
    %p209 = por %p207, %p208
    %p210 = scmp.ne.s32.totalorder %s202, %s205
    %p211 = scmp.eq.s32.totalorder %s14, 0
    %p212 = por %p210, %p211
    %p213 = scmp.ne.s32.totalorder %s202, %s205
    %p214 = scmp.eq.s32.totalorder %s19, 1
    %p215 = por %p213, %p214
    %p216 = scmp.ne.s32.totalorder %s205, %s206
    %p217 = scmp.eq.s32.totalorder %s19, 0
    %p218 = por %p216, %p217
    %p219 = scmp.ne.s32.totalorder %s205, %s206
    %p220 = scmp.eq.s32.totalorder %s20, 1
    %p221 = por %p219, %p220
    %p223 = scmp.ne.s32.totalorder %s206, %s222
    %p224 = scmp.eq.s32.totalorder %s20, 0
    %p225 = por %p223, %p224
    %p226 = scmp.le.s32.totalorder 1, %s14
    %p227 = scmp.lt.s32.totalorder %s14, 3
    %p228 = pnand %p226, %p227
    %p229 = pneg %p228
    // Predicated region
    $region9: #{lite_mla_forward.5} parent=5 // pred_check
      _
    $region10: #{lite_mla_forward.5} parent=5 // pred_check_branch
      %231 = sbr.rel (%p228) target = $region12
    $region11: #{lite_mla_forward.5} parent=5 // pred_region
      %s232 = ssub.s32 %s14, 1
      // Predicated region
      $region13: #{lite_mla_forward.5} parent=11 // pred_check
        %p233 = pneg %p61
      $region14: #{lite_mla_forward.5} parent=11 // pred_check_branch
        %235 = sbr.rel (%p233) target = $region16
      $region15: #{lite_mla_forward.5} parent=11 // pred_region
        _
      $region16: #{lite_mla_forward.5} parent=11 // pred_fallthru
        _
      // Predicated region
      $region17: #{lite_mla_forward.5} parent=11 // pred_check
        %p236 = pneg %p82
      $region18: #{lite_mla_forward.5} parent=11 // pred_check_branch
        %238 = sbr.rel (%p236) target = $region20
      $region19: #{lite_mla_forward.5} parent=11 // pred_region
        _
      $region20: #{lite_mla_forward.5} parent=11 // pred_fallthru
        _
      // Predicated region
      $region21: #{lite_mla_forward.5} parent=11 // pred_check
        %p239 = pneg %p103
      $region22: #{lite_mla_forward.5} parent=11 // pred_check_branch
        %241 = sbr.rel (%p239) target = $region24
      $region23: #{lite_mla_forward.5} parent=11 // pred_region
        _
      $region24: #{lite_mla_forward.5} parent=11 // pred_fallthru
        _
      // Predicated region
      $region25: #{lite_mla_forward.5} parent=11 // pred_check
        %p242 = pneg %p124
      $region26: #{lite_mla_forward.5} parent=11 // pred_check_branch
        %244 = sbr.rel (%p242) target = $region28
      $region27: #{lite_mla_forward.5} parent=11 // pred_region
        _
      $region28: #{lite_mla_forward.5} parent=11 // pred_fallthru
        _
      // Predicated region
      $region29: #{lite_mla_forward.5} parent=11 // pred_check
        %p245 = pneg %p145
      $region30: #{lite_mla_forward.5} parent=11 // pred_check_branch
        %247 = sbr.rel (%p245) target = $region32
      $region31: #{lite_mla_forward.5} parent=11 // pred_region
        _
      $region32: #{lite_mla_forward.5} parent=11 // pred_fallthru
        _
      // Predicated region
      $region33: #{lite_mla_forward.5} parent=11 // pred_check
        %p248 = pneg %p166
      $region34: #{lite_mla_forward.5} parent=11 // pred_check_branch
        %250 = sbr.rel (%p248) target = $region36
      $region35: #{lite_mla_forward.5} parent=11 // pred_region
        _
      $region36: #{lite_mla_forward.5} parent=11 // pred_fallthru
        _
    $region12: #{lite_mla_forward.5} parent=5 // pred_fallthru
      _
    %p251 = scmp.lt.s32.totalorder %s14, 2
    // Predicated region
    $region37: #{lite_mla_forward.5} parent=5 // pred_check
      %p252 = pneg %p251
    $region38: #{lite_mla_forward.5} parent=5 // pred_check_branch
      %254 = sbr.rel (%p252) target = $region40
    $region39: #{lite_mla_forward.5} parent=5 // pred_region
      // Predicated region
      $region41: #{lite_mla_forward.5} parent=39 // pred_check
        %p255 = pneg %p34
      $region42: #{lite_mla_forward.5} parent=39 // pred_check_branch
        %257 = sbr.rel (%p255) target = $region44
      $region43: #{lite_mla_forward.5} parent=39 // pred_region
        %p258 = scmp.lt.s32.totalorder %s14, 1
        %s259 = scalar_select %p258, %s14, 1
        %s260 = smul.addr %s259, 12
        %s261 = smul.addr %s260, 8
        %s262 = scalar_lea.vmem %s0, %s261
      $region44: #{lite_mla_forward.5} parent=39 // pred_fallthru
        _
      // Predicated region
      $region45: #{lite_mla_forward.5} parent=39 // pred_check
        %p263 = pneg %p186
      $region46: #{lite_mla_forward.5} parent=39 // pred_check_branch
        %265 = sbr.rel (%p263) target = $region48
      $region47: #{lite_mla_forward.5} parent=39 // pred_region
        %p266 = scmp.lt.s32.totalorder %s14, 1
        %s267 = scalar_select %p266, %s14, 1
        %s268 = smul.addr %s267, 4
        %s269 = smul.addr %s268, 8
        %s270 = scalar_lea.vmem %s7, %s269
      $region48: #{lite_mla_forward.5} parent=39 // pred_fallthru
        _
    $region40: #{lite_mla_forward.5} parent=5 // pred_fallthru
      _
    %p271 = scmp.le.s32.totalorder 1, %s14
    %p272 = scmp.lt.s32.totalorder %s14, 3
    %p273 = pnand %p271, %p272
    %p274 = pneg %p273
    // Predicated region
    $region49: #{lite_mla_forward.5} parent=5 // pred_check
      _
    $region50: #{lite_mla_forward.5} parent=5 // pred_check_branch
      %276 = sbr.rel (%p273) target = $region52
    $region51: #{lite_mla_forward.5} parent=5 // pred_region
      %s277 = ssub.s32 %s14, 1
      %p278 = scmp.lt.s32.totalorder %s19, 1
      %s279 = scalar_select %p278, %s19, 1
      %s280 = smul.addr %s279, 12
      %s281 = smul.addr %s280, 8
      %s282 = scalar_lea.vmem %s0, %s281
      %p283 = pneg %p40
      %p284 = pneg %p37
      %p285 = pneg %p61
      %p286 = pneg %p58
      %p287 = pneg %p82
      %p288 = pneg %p79
      %p289 = pneg %p103
      %p290 = pneg %p100
      %p291 = pneg %p124
      %p292 = pneg %p121
      %p293 = pneg %p145
      %p294 = pneg %p142
      %p295 = pneg %p166
      %p296 = pneg %p163
      %p297 = scmp.lt.s32.totalorder %s19, 1
      %s298 = scalar_select %p297, %s19, 1
      %s299 = smul.addr %s298, 4
      %s300 = smul.addr %s299, 8
      %s301 = scalar_lea.vmem %s7, %s300
      %p302 = pneg %p192
      %p303 = pneg %p189
      %p304 = pneg %p218
      %p305 = pneg %p215
      %p306 = scmp.lt.s32.totalorder %s19, 1
      %s307 = scalar_select %p306, %s19, 1
      %s308 = smul.addr %s307, 4
      %s309 = smul.addr %s308, 8
      %s310 = scalar_lea.vmem %s8, %s309
      %p311 = scmp.lt.s32.totalorder %s19, 1
      %s312 = scalar_select %p311, %s19, 1
      %s313 = smul.addr %s312, 12
      %s314 = smul.addr %s313, 8
      %s315 = scalar_lea.vmem %s0, %s314
      %p316 = scmp.lt.s32.totalorder %s19, 1
      %s317 = scalar_select %p316, %s19, 1
      %s318 = smul.addr %s317, 4
      %s319 = smul.addr %s318, 8
      %s320 = scalar_lea.vmem %s7, %s319
      %p321 = scmp.lt.s32.totalorder %s19, 1
      %s322 = scalar_select %p321, %s19, 1
      %s323 = smul.addr %s322, 4
      %s324 = smul.addr %s323, 8
      %s325 = scalar_lea.vmem %s8, %s324
      %v326 = vld [vmem:[%s315] sm:$0xff]
      %v327 = vld [vmem:[%s315 + $0x8] sm:$0xff]
      %v328 = vld [vmem:[%s315 + $0x10] sm:$0xff]
      %v329 = vld [vmem:[%s315 + $0x18] sm:$0xff]
      %v330 = vld [vmem:[%s315 + $0x20] sm:$0xff]
      %v331 = vld [vmem:[%s315 + $0x28] sm:$0xff]
      %v332 = vld [vmem:[%s315 + $0x30] sm:$0xff]
      %v333 = vld [vmem:[%s315 + $0x38] sm:$0xff]
      %v334 = vld [vmem:[%s315 + $0x40] sm:$0xff]
      %v335 = vld [vmem:[%s315 + $0x48] sm:$0xff]
      %v336 = vld [vmem:[%s315 + $0x50] sm:$0xff]
      %v337 = vld [vmem:[%s315 + $0x58] sm:$0xff]
      %v338 = vld [vmem:[%s1] sm:$0xff]
      %v339 = vld [vmem:[%s1 + $0x8] sm:$0xff]
      %v340 = vld [vmem:[%s1 + $0x10] sm:$0xff]
      %v341 = vld [vmem:[%s1 + $0x18] sm:$0xff]
      %v342 = vld [vmem:[%s1 + $0x20] sm:$0xff]
      %v343 = vld [vmem:[%s1 + $0x28] sm:$0xff]
      %v344 = vld [vmem:[%s1 + $0x30] sm:$0xff]
      %v345 = vld [vmem:[%s1 + $0x38] sm:$0xff]
      %v346 = vld [vmem:[%s1 + $0x40] sm:$0xff]
      %v347 = vld [vmem:[%s1 + $0x48] sm:$0xff]
      %v348 = vld [vmem:[%s1 + $0x50] sm:$0xff]
      %v349 = vld [vmem:[%s1 + $0x58] sm:$0xff]
      %v350 = vld [vmem:[%s1 + $0x60] sm:$0xff]
      %v351 = vld [vmem:[%s1 + $0x68] sm:$0xff]
      %v352 = vld [vmem:[%s1 + $0x70] sm:$0xff]
      %v353 = vld [vmem:[%s1 + $0x78] sm:$0xff]
      %v354 = vld [vmem:[%s2] sm:$0xff]
      %v355 = vld [vmem:[%s2 + $0x8] sm:$0xff]
      %v356 = vld [vmem:[%s2 + $0x10] sm:$0xff]
      %v357 = vld [vmem:[%s2 + $0x18] sm:$0xff]
      %v358 = vld [vmem:[%s2 + $0x20] sm:$0xff]
      %v359 = vld [vmem:[%s2 + $0x28] sm:$0xff]
      %v360 = vld [vmem:[%s2 + $0x30] sm:$0xff]
      %v361 = vld [vmem:[%s2 + $0x38] sm:$0xff]
      %v362 = vld [vmem:[%s2 + $0x40] sm:$0xff]
      %v363 = vld [vmem:[%s2 + $0x48] sm:$0xff]
      %v364 = vld [vmem:[%s2 + $0x50] sm:$0xff]
      %v365 = vld [vmem:[%s2 + $0x58] sm:$0xff]
      %v366 = vld [vmem:[%s2 + $0x60] sm:$0xff]
      %v367 = vld [vmem:[%s2 + $0x68] sm:$0xff]
      %v368 = vld [vmem:[%s2 + $0x70] sm:$0xff]
      %v369 = vld [vmem:[%s2 + $0x78] sm:$0xff]
      %371 = vset.pattern.permute.xlu0 0
      %372 = vperm.xlu0 %371, %v354
      %v373 = vpop.permute.xlu0 %372
      %376 = vset.pattern.permute.xlu0 0
      %377 = vperm.xlu0 %376, %v355
      %v378 = vpop.permute.xlu0 %377
      %381 = vset.pattern.permute.xlu0 0
      %382 = vperm.xlu0 %381, %v356
      %v383 = vpop.permute.xlu0 %382
      %386 = vset.pattern.permute.xlu0 0
      %387 = vperm.xlu0 %386, %v357
      %v388 = vpop.permute.xlu0 %387
      %391 = vset.pattern.permute.xlu0 0
      %392 = vperm.xlu0 %391, %v358
      %v393 = vpop.permute.xlu0 %392
      %396 = vset.pattern.permute.xlu0 0
      %397 = vperm.xlu0 %396, %v359
      %v398 = vpop.permute.xlu0 %397
      %401 = vset.pattern.permute.xlu0 0
      %402 = vperm.xlu0 %401, %v360
      %v403 = vpop.permute.xlu0 %402
      %406 = vset.pattern.permute.xlu0 0
      %407 = vperm.xlu0 %406, %v361
      %v408 = vpop.permute.xlu0 %407
      %411 = vset.pattern.permute.xlu0 0
      %412 = vperm.xlu0 %411, %v362
      %v413 = vpop.permute.xlu0 %412
      %416 = vset.pattern.permute.xlu0 0
      %417 = vperm.xlu0 %416, %v363
      %v418 = vpop.permute.xlu0 %417
      %421 = vset.pattern.permute.xlu0 0
      %422 = vperm.xlu0 %421, %v364
      %v423 = vpop.permute.xlu0 %422
      %426 = vset.pattern.permute.xlu0 0
      %427 = vperm.xlu0 %426, %v365
      %v428 = vpop.permute.xlu0 %427
      %431 = vset.pattern.permute.xlu0 0
      %432 = vperm.xlu0 %431, %v366
      %v433 = vpop.permute.xlu0 %432
      %436 = vset.pattern.permute.xlu0 0
      %437 = vperm.xlu0 %436, %v367
      %v438 = vpop.permute.xlu0 %437
      %441 = vset.pattern.permute.xlu0 0
      %442 = vperm.xlu0 %441, %v368
      %v443 = vpop.permute.xlu0 %442
      %446 = vset.pattern.permute.xlu0 0
      %447 = vperm.xlu0 %446, %v369
      %v448 = vpop.permute.xlu0 %447
      %vm450 = vcmask 392192
      %v452 = vsel %vm450, %v338, 0
      %v455 = vsel %vm450, %v339, 0
      %v458 = vsel %vm450, %v340, 0
      %v461 = vsel %vm450, %v341, 0
      %v464 = vsel %vm450, %v342, 0
      %v467 = vsel %vm450, %v343, 0
      %v470 = vsel %vm450, %v344, 0
      %v473 = vsel %vm450, %v345, 0
      %v476 = vsel %vm450, %v346, 0
      %v479 = vsel %vm450, %v347, 0
      %v482 = vsel %vm450, %v348, 0
      %v485 = vsel %vm450, %v349, 0
      %v488 = vsel %vm450, %v350, 0
      %v491 = vsel %vm450, %v351, 0
      %v494 = vsel %vm450, %v352, 0
      %v497 = vsel %vm450, %v353, 0
      %499 = vmatprep.subr.mxu0 0.0
      %500 = vmatpush1.msra.mxu0 0.0
      %501 = vmatprep.subr.mxu0 0.0
      %502 = vmatpush1.msra.mxu0 0.0
      %503 = vmatprep.subr.mxu0 0.0
      %504 = vmatpush1.msra.mxu0 0.0
      %505 = vmatprep.subr.mxu0 0.0
      %506 = vmatpush1.msra.mxu0 0.0
      %507 = vmatprep.subr.mxu0 0.0
      %508 = vmatpush1.msra.mxu0 0.0
      %509 = vmatprep.subr.mxu0 0.0
      %510 = vmatpush1.msra.mxu0 0.0
      %511 = vmatprep.subr.mxu0 0.0
      %512 = vmatpush1.msra.mxu0 0.0
      %513 = vmatprep.subr.mxu0 0.0
      %514 = vmatpush1.msra.mxu0 0.0
      %515 = vmatprep.subr.mxu0 0.0
      %516 = vmatpush1.msra.mxu0 0.0
      %517 = vmatprep.subr.mxu0 0.0
      %518 = vmatpush1.msra.mxu0 0.0
      %519 = vmatprep.subr.mxu0 %v337
      %520 = vmatpush1.msra.mxu0 %v336
      %521 = vmatprep.subr.mxu0 %v335
      %522 = vmatpush1.msra.mxu0 %v334
      %523 = vmatprep.subr.mxu0 %v333
      %524 = vmatpush1.msra.mxu0 %v332
      %525 = vmatprep.subr.mxu0 %v331
      %526 = vmatpush1.msra.mxu0 %v330
      %527 = vmatprep.subr.mxu0 %v329
      %528 = vmatpush1.msra.mxu0 %v328
      %529 = vmatprep.subr.mxu0 %v327
      %530 = vmatpush1.msra.mxu0 %v326
      %531 = vmatprep.subr.mxu0 0.0
      %532 = vmatpush2.msra.mxu0 0.0
      %533 = vmatprep.subr.mxu0 0.0
      %534 = vmatpush2.msra.mxu0 0.0
      %535 = vmatprep.subr.mxu0 0.0
      %536 = vmatpush2.msra.mxu0 0.0
      %537 = vmatprep.subr.mxu0 0.0
      %538 = vmatpush2.msra.mxu0 0.0
      %539 = vmatprep.subr.mxu0 0.0
      %540 = vmatpush2.msra.mxu0 0.0
      %541 = vmatprep.subr.mxu0 0.0
      %542 = vmatpush2.msra.mxu0 0.0
      %543 = vmatprep.subr.mxu0 0.0
      %544 = vmatpush2.msra.mxu0 0.0
      %545 = vmatprep.subr.mxu0 0.0
      %546 = vmatpush2.msra.mxu0 0.0
      %547 = vmatprep.subr.mxu0 0.0
      %548 = vmatpush2.msra.mxu0 0.0
      %549 = vmatprep.subr.mxu0 0.0
      %550 = vmatpush2.msra.mxu0 0.0
      %551 = vmatprep.subr.mxu0 0.0
      %552 = vmatpush2.msra.mxu0 0.0
      %553 = vmatprep.subr.mxu0 0.0
      %554 = vmatpush2.msra.mxu0 0.0
      %555 = vmatprep.subr.mxu0 0.0
      %556 = vmatpush2.msra.mxu0 0.0
      %557 = vmatprep.subr.mxu0 0.0
      %558 = vmatpush2.msra.mxu0 0.0
      %559 = vmatprep.subr.mxu0 0.0
      %560 = vmatpush2.msra.mxu0 0.0
      %561 = vmatprep.subr.mxu0 0.0
      %562 = vmatpush2.msra.mxu0 0.0
      %563 = vmatprep.mubr.f32.mxu0 0.0
      %564 = vmatmul.mubr.f32.gmra.mxu0 %v452
      %v565 = vpop.f32.mrf.mxu0
      %v566 = vadd.f32 %v373, %v565
      %v567 = vpop.f32.mrf.mxu0
      %v568 = vadd.f32 %v373, %v567
      %569 = vmatprep.mubr.f32.mxu0 0.0
      %570 = vmatmul.mubr.f32.gmra.mxu0 %v455
      %v571 = vpop.f32.mrf.mxu0
      %v572 = vadd.f32 %v378, %v571
      %v573 = vpop.f32.mrf.mxu0
      %v574 = vadd.f32 %v378, %v573
      %575 = vmatprep.mubr.f32.mxu0 0.0
      %576 = vmatmul.mubr.f32.gmra.mxu0 %v458
      %v577 = vpop.f32.mrf.mxu0
      %v578 = vadd.f32 %v383, %v577
      %v579 = vpop.f32.mrf.mxu0
      %v580 = vadd.f32 %v383, %v579
      %581 = vmatprep.mubr.f32.mxu0 0.0
      %582 = vmatmul.mubr.f32.gmra.mxu0 %v461
      %v583 = vpop.f32.mrf.mxu0
      %v584 = vadd.f32 %v388, %v583
      %v585 = vpop.f32.mrf.mxu0
      %v586 = vadd.f32 %v388, %v585
      %587 = vmatprep.mubr.f32.mxu0 0.0
      %588 = vmatmul.mubr.f32.gmra.mxu0 %v464
      %v589 = vpop.f32.mrf.mxu0
      %v590 = vadd.f32 %v393, %v589
      %v591 = vpop.f32.mrf.mxu0
      %v592 = vadd.f32 %v393, %v591
      %593 = vmatprep.mubr.f32.mxu0 0.0
      %594 = vmatmul.mubr.f32.gmra.mxu0 %v467
      %v595 = vpop.f32.mrf.mxu0
      %v596 = vadd.f32 %v398, %v595
      %v597 = vpop.f32.mrf.mxu0
      %v598 = vadd.f32 %v398, %v597
      %599 = vmatprep.mubr.f32.mxu0 0.0
      %600 = vmatmul.mubr.f32.gmra.mxu0 %v470
      %v601 = vpop.f32.mrf.mxu0
      %v602 = vadd.f32 %v403, %v601
      %v603 = vpop.f32.mrf.mxu0
      %v604 = vadd.f32 %v403, %v603
      %605 = vmatprep.mubr.f32.mxu0 0.0
      %606 = vmatmul.mubr.f32.gmra.mxu0 %v473
      %v607 = vpop.f32.mrf.mxu0
      %v608 = vadd.f32 %v408, %v607
      %v609 = vpop.f32.mrf.mxu0
      %v610 = vadd.f32 %v408, %v609
      %611 = vmatprep.mubr.f32.mxu0 0.0
      %612 = vmatmul.mubr.f32.gmra.mxu0 %v476
      %v613 = vpop.f32.mrf.mxu0
      %v614 = vadd.f32 %v413, %v613
      %v615 = vpop.f32.mrf.mxu0
      %v616 = vadd.f32 %v413, %v615
      %617 = vmatprep.mubr.f32.mxu0 0.0
      %618 = vmatmul.mubr.f32.gmra.mxu0 %v479
      %v619 = vpop.f32.mrf.mxu0
      %v620 = vadd.f32 %v418, %v619
      %v621 = vpop.f32.mrf.mxu0
      %v622 = vadd.f32 %v418, %v621
      %623 = vmatprep.mubr.f32.mxu0 0.0
      %624 = vmatmul.mubr.f32.gmra.mxu0 %v482
      %v625 = vpop.f32.mrf.mxu0
      %v626 = vadd.f32 %v423, %v625
      %v627 = vpop.f32.mrf.mxu0
      %v628 = vadd.f32 %v423, %v627
      %629 = vmatprep.mubr.f32.mxu0 0.0
      %630 = vmatmul.mubr.f32.gmra.mxu0 %v485
      %v631 = vpop.f32.mrf.mxu0
      %v632 = vadd.f32 %v428, %v631
      %v633 = vpop.f32.mrf.mxu0
      %v634 = vadd.f32 %v428, %v633
      %635 = vmatprep.mubr.f32.mxu0 0.0
      %636 = vmatmul.mubr.f32.gmra.mxu0 %v488
      %v637 = vpop.f32.mrf.mxu0
      %v638 = vadd.f32 %v433, %v637
      %v639 = vpop.f32.mrf.mxu0
      %v640 = vadd.f32 %v433, %v639
      %641 = vmatprep.mubr.f32.mxu0 0.0
      %642 = vmatmul.mubr.f32.gmra.mxu0 %v491
      %v643 = vpop.f32.mrf.mxu0
      %v644 = vadd.f32 %v438, %v643
      %v645 = vpop.f32.mrf.mxu0
      %v646 = vadd.f32 %v438, %v645
      %647 = vmatprep.mubr.f32.mxu0 0.0
      %648 = vmatmul.mubr.f32.gmra.mxu0 %v494
      %v649 = vpop.f32.mrf.mxu0
      %v650 = vadd.f32 %v443, %v649
      %v651 = vpop.f32.mrf.mxu0
      %v652 = vadd.f32 %v443, %v651
      %653 = vmatprep.mubr.f32.mxu0 0.0
      %654 = vmatmul.mubr.f32.gmra.mxu0 %v497
      %v655 = vpop.f32.mrf.mxu0
      %v656 = vadd.f32 %v448, %v655
      %v657 = vpop.f32.mrf.mxu0
      %v658 = vadd.f32 %v448, %v657
      %659 = vdwg.mxu0
      %v660 = vld [vmem:[%s3] sm:$0xff]
      %v661 = vld [vmem:[%s3 + $0x8] sm:$0xff]
      %v662 = vld [vmem:[%s3 + $0x10] sm:$0xff]
      %v663 = vld [vmem:[%s3 + $0x18] sm:$0xff]
      %v664 = vld [vmem:[%s3 + $0x20] sm:$0xff]
      %v665 = vld [vmem:[%s3 + $0x28] sm:$0xff]
      %v666 = vld [vmem:[%s3 + $0x30] sm:$0xff]
      %v667 = vld [vmem:[%s3 + $0x38] sm:$0xff]
      %v668 = vld [vmem:[%s3 + $0x40] sm:$0xff]
      %v669 = vld [vmem:[%s3 + $0x48] sm:$0xff]
      %v670 = vld [vmem:[%s3 + $0x50] sm:$0xff]
      %v671 = vld [vmem:[%s3 + $0x58] sm:$0xff]
      %v672 = vld [vmem:[%s3 + $0x60] sm:$0xff]
      %v673 = vld [vmem:[%s3 + $0x68] sm:$0xff]
      %v674 = vld [vmem:[%s3 + $0x70] sm:$0xff]
      %v675 = vld [vmem:[%s3 + $0x78] sm:$0xff]
      %v676 = vld [vmem:[%s3 + $0x80] sm:$0xff]
      %v677 = vld [vmem:[%s3 + $0x88] sm:$0xff]
      %v678 = vld [vmem:[%s3 + $0x90] sm:$0xff]
      %v679 = vld [vmem:[%s3 + $0x98] sm:$0xff]
      %v680 = vld [vmem:[%s3 + $0xa0] sm:$0xff]
      %v681 = vld [vmem:[%s3 + $0xa8] sm:$0xff]
      %v682 = vld [vmem:[%s3 + $0xb0] sm:$0xff]
      %v683 = vld [vmem:[%s3 + $0xb8] sm:$0xff]
      %v684 = vld [vmem:[%s3 + $0xc0] sm:$0xff]
      %v685 = vld [vmem:[%s3 + $0xc8] sm:$0xff]
      %v686 = vld [vmem:[%s3 + $0xd0] sm:$0xff]
      %v687 = vld [vmem:[%s3 + $0xd8] sm:$0xff]
      %v688 = vld [vmem:[%s3 + $0xe0] sm:$0xff]
      %v689 = vld [vmem:[%s3 + $0xe8] sm:$0xff]
      %v690 = vld [vmem:[%s3 + $0xf0] sm:$0xff]
      %v691 = vld [vmem:[%s3 + $0xf8] sm:$0xff]
      %v692 = vld [vmem:[%s4] sm:$0xff]
      %v693 = vld [vmem:[%s4 + $0x8] sm:$0xff]
      %v694 = vld [vmem:[%s4 + $0x10] sm:$0xff]
      %v695 = vld [vmem:[%s4 + $0x18] sm:$0xff]
      %v696 = vld [vmem:[%s4 + $0x20] sm:$0xff]
      %v697 = vld [vmem:[%s4 + $0x28] sm:$0xff]
      %v698 = vld [vmem:[%s4 + $0x30] sm:$0xff]
      %v699 = vld [vmem:[%s4 + $0x38] sm:$0xff]
      %v700 = vld [vmem:[%s4 + $0x40] sm:$0xff]
      %v701 = vld [vmem:[%s4 + $0x48] sm:$0xff]
      %v702 = vld [vmem:[%s4 + $0x50] sm:$0xff]
      %v703 = vld [vmem:[%s4 + $0x58] sm:$0xff]
      %v704 = vld [vmem:[%s4 + $0x60] sm:$0xff]
      %v705 = vld [vmem:[%s4 + $0x68] sm:$0xff]
      %v706 = vld [vmem:[%s4 + $0x70] sm:$0xff]
      %v707 = vld [vmem:[%s4 + $0x78] sm:$0xff]
      %v708 = vld [vmem:[%s4 + $0x80] sm:$0xff]
      %v709 = vld [vmem:[%s4 + $0x88] sm:$0xff]
      %v710 = vld [vmem:[%s4 + $0x90] sm:$0xff]
      %v711 = vld [vmem:[%s4 + $0x98] sm:$0xff]
      %v712 = vld [vmem:[%s4 + $0xa0] sm:$0xff]
      %v713 = vld [vmem:[%s4 + $0xa8] sm:$0xff]
      %v714 = vld [vmem:[%s4 + $0xb0] sm:$0xff]
      %v715 = vld [vmem:[%s4 + $0xb8] sm:$0xff]
      %v716 = vld [vmem:[%s4 + $0xc0] sm:$0xff]
      %v717 = vld [vmem:[%s4 + $0xc8] sm:$0xff]
      %v718 = vld [vmem:[%s4 + $0xd0] sm:$0xff]
      %v719 = vld [vmem:[%s4 + $0xd8] sm:$0xff]
      %v720 = vld [vmem:[%s4 + $0xe0] sm:$0xff]
      %v721 = vld [vmem:[%s4 + $0xe8] sm:$0xff]
      %v722 = vld [vmem:[%s4 + $0xf0] sm:$0xff]
      %v723 = vld [vmem:[%s4 + $0xf8] sm:$0xff]
      %725 = vset.pattern.permute.xlu0 0
      %726 = vperm.xlu0 %725, %v692
      %v727 = vpop.permute.xlu0 %726
      %730 = vset.pattern.permute.xlu0 0
      %731 = vperm.xlu0 %730, %v693
      %v732 = vpop.permute.xlu0 %731
      %735 = vset.pattern.permute.xlu0 0
      %736 = vperm.xlu0 %735, %v694
      %v737 = vpop.permute.xlu0 %736
      %740 = vset.pattern.permute.xlu0 0
      %741 = vperm.xlu0 %740, %v695
      %v742 = vpop.permute.xlu0 %741
      %745 = vset.pattern.permute.xlu0 0
      %746 = vperm.xlu0 %745, %v696
      %v747 = vpop.permute.xlu0 %746
      %750 = vset.pattern.permute.xlu0 0
      %751 = vperm.xlu0 %750, %v697
      %v752 = vpop.permute.xlu0 %751
      %755 = vset.pattern.permute.xlu0 0
      %756 = vperm.xlu0 %755, %v698
      %v757 = vpop.permute.xlu0 %756
      %760 = vset.pattern.permute.xlu0 0
      %761 = vperm.xlu0 %760, %v699
      %v762 = vpop.permute.xlu0 %761
      %765 = vset.pattern.permute.xlu0 0
      %766 = vperm.xlu0 %765, %v700
      %v767 = vpop.permute.xlu0 %766
      %770 = vset.pattern.permute.xlu0 0
      %771 = vperm.xlu0 %770, %v701
      %v772 = vpop.permute.xlu0 %771
      %775 = vset.pattern.permute.xlu0 0
      %776 = vperm.xlu0 %775, %v702
      %v777 = vpop.permute.xlu0 %776
      %780 = vset.pattern.permute.xlu0 0
      %781 = vperm.xlu0 %780, %v703
      %v782 = vpop.permute.xlu0 %781
      %785 = vset.pattern.permute.xlu0 0
      %786 = vperm.xlu0 %785, %v704
      %v787 = vpop.permute.xlu0 %786
      %790 = vset.pattern.permute.xlu0 0
      %791 = vperm.xlu0 %790, %v705
      %v792 = vpop.permute.xlu0 %791
      %795 = vset.pattern.permute.xlu0 0
      %796 = vperm.xlu0 %795, %v706
      %v797 = vpop.permute.xlu0 %796
      %800 = vset.pattern.permute.xlu0 0
      %801 = vperm.xlu0 %800, %v707
      %v802 = vpop.permute.xlu0 %801
      %805 = vset.pattern.permute.xlu0 0
      %806 = vperm.xlu0 %805, %v708
      %v807 = vpop.permute.xlu0 %806
      %810 = vset.pattern.permute.xlu0 0
      %811 = vperm.xlu0 %810, %v709
      %v812 = vpop.permute.xlu0 %811
      %815 = vset.pattern.permute.xlu0 0
      %816 = vperm.xlu0 %815, %v710
      %v817 = vpop.permute.xlu0 %816
      %820 = vset.pattern.permute.xlu0 0
      %821 = vperm.xlu0 %820, %v711
      %v822 = vpop.permute.xlu0 %821
      %825 = vset.pattern.permute.xlu0 0
      %826 = vperm.xlu0 %825, %v712
      %v827 = vpop.permute.xlu0 %826
      %830 = vset.pattern.permute.xlu0 0
      %831 = vperm.xlu0 %830, %v713
      %v832 = vpop.permute.xlu0 %831
      %835 = vset.pattern.permute.xlu0 0
      %836 = vperm.xlu0 %835, %v714
      %v837 = vpop.permute.xlu0 %836
      %840 = vset.pattern.permute.xlu0 0
      %841 = vperm.xlu0 %840, %v715
      %v842 = vpop.permute.xlu0 %841
      %845 = vset.pattern.permute.xlu0 0
      %846 = vperm.xlu0 %845, %v716
      %v847 = vpop.permute.xlu0 %846
      %850 = vset.pattern.permute.xlu0 0
      %851 = vperm.xlu0 %850, %v717
      %v852 = vpop.permute.xlu0 %851
      %855 = vset.pattern.permute.xlu0 0
      %856 = vperm.xlu0 %855, %v718
      %v857 = vpop.permute.xlu0 %856
      %860 = vset.pattern.permute.xlu0 0
      %861 = vperm.xlu0 %860, %v719
      %v862 = vpop.permute.xlu0 %861
      %865 = vset.pattern.permute.xlu0 0
      %866 = vperm.xlu0 %865, %v720
      %v867 = vpop.permute.xlu0 %866
      %870 = vset.pattern.permute.xlu0 0
      %871 = vperm.xlu0 %870, %v721
      %v872 = vpop.permute.xlu0 %871
      %875 = vset.pattern.permute.xlu0 0
      %876 = vperm.xlu0 %875, %v722
      %v877 = vpop.permute.xlu0 %876
      %880 = vset.pattern.permute.xlu0 0
      %881 = vperm.xlu0 %880, %v723
      %v882 = vpop.permute.xlu0 %881
      %v885 = vsel %vm450, %v660, 0
      %v888 = vsel %vm450, %v661, 0
      %v891 = vsel %vm450, %v662, 0
      %v894 = vsel %vm450, %v663, 0
      %v897 = vsel %vm450, %v664, 0
      %v900 = vsel %vm450, %v665, 0
      %v903 = vsel %vm450, %v666, 0
      %v906 = vsel %vm450, %v667, 0
      %v909 = vsel %vm450, %v668, 0
      %v912 = vsel %vm450, %v669, 0
      %v915 = vsel %vm450, %v670, 0
      %v918 = vsel %vm450, %v671, 0
      %v921 = vsel %vm450, %v672, 0
      %v924 = vsel %vm450, %v673, 0
      %v927 = vsel %vm450, %v674, 0
      %v930 = vsel %vm450, %v675, 0
      %v933 = vsel %vm450, %v676, 0
      %v936 = vsel %vm450, %v677, 0
      %v939 = vsel %vm450, %v678, 0
      %v942 = vsel %vm450, %v679, 0
      %v945 = vsel %vm450, %v680, 0
      %v948 = vsel %vm450, %v681, 0
      %v951 = vsel %vm450, %v682, 0
      %v954 = vsel %vm450, %v683, 0
      %v957 = vsel %vm450, %v684, 0
      %v960 = vsel %vm450, %v685, 0
      %v963 = vsel %vm450, %v686, 0
      %v966 = vsel %vm450, %v687, 0
      %v969 = vsel %vm450, %v688, 0
      %v972 = vsel %vm450, %v689, 0
      %v975 = vsel %vm450, %v690, 0
      %v978 = vsel %vm450, %v691, 0
      %980 = vmatprep.subr.mxu0 0.0
      %981 = vmatpush1.msra.mxu0 0.0
      %982 = vmatprep.subr.mxu0 0.0
      %983 = vmatpush1.msra.mxu0 0.0
      %984 = vmatprep.subr.mxu0 0.0
      %985 = vmatpush1.msra.mxu0 0.0
      %986 = vmatprep.subr.mxu0 0.0
      %987 = vmatpush1.msra.mxu0 0.0
      %988 = vmatprep.subr.mxu0 0.0
      %989 = vmatpush1.msra.mxu0 0.0
      %990 = vmatprep.subr.mxu0 0.0
      %991 = vmatpush1.msra.mxu0 0.0
      %992 = vmatprep.subr.mxu0 0.0
      %993 = vmatpush1.msra.mxu0 0.0
      %994 = vmatprep.subr.mxu0 0.0
      %995 = vmatpush1.msra.mxu0 0.0
      %996 = vmatprep.subr.mxu0 0.0
      %997 = vmatpush1.msra.mxu0 0.0
      %998 = vmatprep.subr.mxu0 0.0
      %999 = vmatpush1.msra.mxu0 0.0
      %1000 = vmatprep.subr.mxu0 %v337
      %1001 = vmatpush1.msra.mxu0 %v336
      %1002 = vmatprep.subr.mxu0 %v335
      %1003 = vmatpush1.msra.mxu0 %v334
      %1004 = vmatprep.subr.mxu0 %v333
      %1005 = vmatpush1.msra.mxu0 %v332
      %1006 = vmatprep.subr.mxu0 %v331
      %1007 = vmatpush1.msra.mxu0 %v330
      %1008 = vmatprep.subr.mxu0 %v329
      %1009 = vmatpush1.msra.mxu0 %v328
      %1010 = vmatprep.subr.mxu0 %v327
      %1011 = vmatpush1.msra.mxu0 %v326
      %1012 = vmatprep.subr.mxu0 0.0
      %1013 = vmatpush2.msra.mxu0 0.0
      %1014 = vmatprep.subr.mxu0 0.0
      %1015 = vmatpush2.msra.mxu0 0.0
      %1016 = vmatprep.subr.mxu0 0.0
      %1017 = vmatpush2.msra.mxu0 0.0
      %1018 = vmatprep.subr.mxu0 0.0
      %1019 = vmatpush2.msra.mxu0 0.0
      %1020 = vmatprep.subr.mxu0 0.0
      %1021 = vmatpush2.msra.mxu0 0.0
      %1022 = vmatprep.subr.mxu0 0.0
      %1023 = vmatpush2.msra.mxu0 0.0
      %1024 = vmatprep.subr.mxu0 0.0
      %1025 = vmatpush2.msra.mxu0 0.0
      %1026 = vmatprep.subr.mxu0 0.0
      %1027 = vmatpush2.msra.mxu0 0.0
      %1028 = vmatprep.subr.mxu0 0.0
      %1029 = vmatpush2.msra.mxu0 0.0
      %1030 = vmatprep.subr.mxu0 0.0
      %1031 = vmatpush2.msra.mxu0 0.0
      %1032 = vmatprep.subr.mxu0 0.0
      %1033 = vmatpush2.msra.mxu0 0.0
      %1034 = vmatprep.subr.mxu0 0.0
      %1035 = vmatpush2.msra.mxu0 0.0
      %1036 = vmatprep.subr.mxu0 0.0
      %1037 = vmatpush2.msra.mxu0 0.0
      %1038 = vmatprep.subr.mxu0 0.0
      %1039 = vmatpush2.msra.mxu0 0.0
      %1040 = vmatprep.subr.mxu0 0.0
      %1041 = vmatpush2.msra.mxu0 0.0
      %1042 = vmatprep.subr.mxu0 0.0
      %1043 = vmatpush2.msra.mxu0 0.0
      %1044 = vmatprep.mubr.f32.mxu0 0.0
      %1045 = vmatmul.mubr.f32.gmra.mxu0 %v885
      %v1046 = vpop.f32.mrf.mxu0
      %v1047 = vadd.f32 %v727, %v1046
      %v1048 = vpop.f32.mrf.mxu0
      %v1049 = vadd.f32 %v727, %v1048
      %1050 = vmatprep.mubr.f32.mxu0 0.0
      %1051 = vmatmul.mubr.f32.gmra.mxu0 %v888
      %v1052 = vpop.f32.mrf.mxu0
      %v1053 = vadd.f32 %v732, %v1052
      %v1054 = vpop.f32.mrf.mxu0
      %v1055 = vadd.f32 %v732, %v1054
      %1056 = vmatprep.mubr.f32.mxu0 0.0
      %1057 = vmatmul.mubr.f32.gmra.mxu0 %v891
      %v1058 = vpop.f32.mrf.mxu0
      %v1059 = vadd.f32 %v737, %v1058
      %v1060 = vpop.f32.mrf.mxu0
      %v1061 = vadd.f32 %v737, %v1060
      %1062 = vmatprep.mubr.f32.mxu0 0.0
      %1063 = vmatmul.mubr.f32.gmra.mxu0 %v894
      %v1064 = vpop.f32.mrf.mxu0
      %v1065 = vadd.f32 %v742, %v1064
      %v1066 = vpop.f32.mrf.mxu0
      %v1067 = vadd.f32 %v742, %v1066
      %1068 = vmatprep.mubr.f32.mxu0 0.0
      %1069 = vmatmul.mubr.f32.gmra.mxu0 %v897
      %v1070 = vpop.f32.mrf.mxu0
      %v1071 = vadd.f32 %v747, %v1070
      %v1072 = vpop.f32.mrf.mxu0
      %v1073 = vadd.f32 %v747, %v1072
      %1074 = vmatprep.mubr.f32.mxu0 0.0
      %1075 = vmatmul.mubr.f32.gmra.mxu0 %v900
      %v1076 = vpop.f32.mrf.mxu0
      %v1077 = vadd.f32 %v752, %v1076
      %v1078 = vpop.f32.mrf.mxu0
      %v1079 = vadd.f32 %v752, %v1078
      %1080 = vmatprep.mubr.f32.mxu0 0.0
      %1081 = vmatmul.mubr.f32.gmra.mxu0 %v903
      %v1082 = vpop.f32.mrf.mxu0
      %v1083 = vadd.f32 %v757, %v1082
      %v1084 = vpop.f32.mrf.mxu0
      %v1085 = vadd.f32 %v757, %v1084
      %1086 = vmatprep.mubr.f32.mxu0 0.0
      %1087 = vmatmul.mubr.f32.gmra.mxu0 %v906
      %v1088 = vpop.f32.mrf.mxu0
      %v1089 = vadd.f32 %v762, %v1088
      %v1090 = vpop.f32.mrf.mxu0
      %v1091 = vadd.f32 %v762, %v1090
      %1092 = vmatprep.mubr.f32.mxu0 0.0
      %1093 = vmatmul.mubr.f32.gmra.mxu0 %v909
      %v1094 = vpop.f32.mrf.mxu0
      %v1095 = vadd.f32 %v767, %v1094
      %v1096 = vpop.f32.mrf.mxu0
      %v1097 = vadd.f32 %v767, %v1096
      %1098 = vmatprep.mubr.f32.mxu0 0.0
      %1099 = vmatmul.mubr.f32.gmra.mxu0 %v912
      %v1100 = vpop.f32.mrf.mxu0
      %v1101 = vadd.f32 %v772, %v1100
      %v1102 = vpop.f32.mrf.mxu0
      %v1103 = vadd.f32 %v772, %v1102
      %1104 = vmatprep.mubr.f32.mxu0 0.0
      %1105 = vmatmul.mubr.f32.gmra.mxu0 %v915
      %v1106 = vpop.f32.mrf.mxu0
      %v1107 = vadd.f32 %v777, %v1106
      %v1108 = vpop.f32.mrf.mxu0
      %v1109 = vadd.f32 %v777, %v1108
      %1110 = vmatprep.mubr.f32.mxu0 0.0
      %1111 = vmatmul.mubr.f32.gmra.mxu0 %v918
      %v1112 = vpop.f32.mrf.mxu0
      %v1113 = vadd.f32 %v782, %v1112
      %v1114 = vpop.f32.mrf.mxu0
      %v1115 = vadd.f32 %v782, %v1114
      %1116 = vmatprep.mubr.f32.mxu0 0.0
      %1117 = vmatmul.mubr.f32.gmra.mxu0 %v921
      %v1118 = vpop.f32.mrf.mxu0
      %v1119 = vadd.f32 %v787, %v1118
      %v1120 = vpop.f32.mrf.mxu0
      %v1121 = vadd.f32 %v787, %v1120
      %1122 = vmatprep.mubr.f32.mxu0 0.0
      %1123 = vmatmul.mubr.f32.gmra.mxu0 %v924
      %v1124 = vpop.f32.mrf.mxu0
      %v1125 = vadd.f32 %v792, %v1124
      %v1126 = vpop.f32.mrf.mxu0
      %v1127 = vadd.f32 %v792, %v1126
      %1128 = vmatprep.mubr.f32.mxu0 0.0
      %1129 = vmatmul.mubr.f32.gmra.mxu0 %v927
      %v1130 = vpop.f32.mrf.mxu0
      %v1131 = vadd.f32 %v797, %v1130
      %v1132 = vpop.f32.mrf.mxu0
      %v1133 = vadd.f32 %v797, %v1132
      %1134 = vmatprep.mubr.f32.mxu0 0.0
      %1135 = vmatmul.mubr.f32.gmra.mxu0 %v930
      %v1136 = vpop.f32.mrf.mxu0
      %v1137 = vadd.f32 %v802, %v1136
      %v1138 = vpop.f32.mrf.mxu0
      %v1139 = vadd.f32 %v802, %v1138
      %1140 = vmatprep.mubr.f32.mxu0 0.0
      %1141 = vmatmul.mubr.f32.gmra.mxu0 %v933
      %v1142 = vpop.f32.mrf.mxu0
      %v1143 = vadd.f32 %v807, %v1142
      %v1144 = vpop.f32.mrf.mxu0
      %v1145 = vadd.f32 %v807, %v1144
      %1146 = vmatprep.mubr.f32.mxu0 0.0
      %1147 = vmatmul.mubr.f32.gmra.mxu0 %v936
      %v1148 = vpop.f32.mrf.mxu0
      %v1149 = vadd.f32 %v812, %v1148
      %v1150 = vpop.f32.mrf.mxu0
      %v1151 = vadd.f32 %v812, %v1150
      %1152 = vmatprep.mubr.f32.mxu0 0.0
      %1153 = vmatmul.mubr.f32.gmra.mxu0 %v939
      %v1154 = vpop.f32.mrf.mxu0
      %v1155 = vadd.f32 %v817, %v1154
      %v1156 = vpop.f32.mrf.mxu0
      %v1157 = vadd.f32 %v817, %v1156
      %1158 = vmatprep.mubr.f32.mxu0 0.0
      %1159 = vmatmul.mubr.f32.gmra.mxu0 %v942
      %v1160 = vpop.f32.mrf.mxu0
      %v1161 = vadd.f32 %v822, %v1160
      %v1162 = vpop.f32.mrf.mxu0
      %v1163 = vadd.f32 %v822, %v1162
      %1164 = vmatprep.mubr.f32.mxu0 0.0
      %1165 = vmatmul.mubr.f32.gmra.mxu0 %v945
      %v1166 = vpop.f32.mrf.mxu0
      %v1167 = vadd.f32 %v827, %v1166
      %v1168 = vpop.f32.mrf.mxu0
      %v1169 = vadd.f32 %v827, %v1168
      %1170 = vmatprep.mubr.f32.mxu0 0.0
      %1171 = vmatmul.mubr.f32.gmra.mxu0 %v948
      %v1172 = vpop.f32.mrf.mxu0
      %v1173 = vadd.f32 %v832, %v1172
      %v1174 = vpop.f32.mrf.mxu0
      %v1175 = vadd.f32 %v832, %v1174
      %1176 = vmatprep.mubr.f32.mxu0 0.0
      %1177 = vmatmul.mubr.f32.gmra.mxu0 %v951
      %v1178 = vpop.f32.mrf.mxu0
      %v1179 = vadd.f32 %v837, %v1178
      %v1180 = vpop.f32.mrf.mxu0
      %v1181 = vadd.f32 %v837, %v1180
      %1182 = vmatprep.mubr.f32.mxu0 0.0
      %1183 = vmatmul.mubr.f32.gmra.mxu0 %v954
      %v1184 = vpop.f32.mrf.mxu0
      %v1185 = vadd.f32 %v842, %v1184
      %v1186 = vpop.f32.mrf.mxu0
      %v1187 = vadd.f32 %v842, %v1186
      %1188 = vmatprep.mubr.f32.mxu0 0.0
      %1189 = vmatmul.mubr.f32.gmra.mxu0 %v957
      %v1190 = vpop.f32.mrf.mxu0
      %v1191 = vadd.f32 %v847, %v1190
      %v1192 = vpop.f32.mrf.mxu0
      %v1193 = vadd.f32 %v847, %v1192
      %1194 = vmatprep.mubr.f32.mxu0 0.0
      %1195 = vmatmul.mubr.f32.gmra.mxu0 %v960
      %v1196 = vpop.f32.mrf.mxu0
      %v1197 = vadd.f32 %v852, %v1196
      %v1198 = vpop.f32.mrf.mxu0
      %v1199 = vadd.f32 %v852, %v1198
      %1200 = vmatprep.mubr.f32.mxu0 0.0
      %1201 = vmatmul.mubr.f32.gmra.mxu0 %v963
      %v1202 = vpop.f32.mrf.mxu0
      %v1203 = vadd.f32 %v857, %v1202
      %v1204 = vpop.f32.mrf.mxu0
      %v1205 = vadd.f32 %v857, %v1204
      %1206 = vmatprep.mubr.f32.mxu0 0.0
      %1207 = vmatmul.mubr.f32.gmra.mxu0 %v966
      %v1208 = vpop.f32.mrf.mxu0
      %v1209 = vadd.f32 %v862, %v1208
      %v1210 = vpop.f32.mrf.mxu0
      %v1211 = vadd.f32 %v862, %v1210
      %1212 = vmatprep.mubr.f32.mxu0 0.0
      %1213 = vmatmul.mubr.f32.gmra.mxu0 %v969
      %v1214 = vpop.f32.mrf.mxu0
      %v1215 = vadd.f32 %v867, %v1214
      %v1216 = vpop.f32.mrf.mxu0
      %v1217 = vadd.f32 %v867, %v1216
      %1218 = vmatprep.mubr.f32.mxu0 0.0
      %1219 = vmatmul.mubr.f32.gmra.mxu0 %v972
      %v1220 = vpop.f32.mrf.mxu0
      %v1221 = vadd.f32 %v872, %v1220
      %v1222 = vpop.f32.mrf.mxu0
      %v1223 = vadd.f32 %v872, %v1222
      %1224 = vmatprep.mubr.f32.mxu0 0.0
      %1225 = vmatmul.mubr.f32.gmra.mxu0 %v975
      %v1226 = vpop.f32.mrf.mxu0
      %v1227 = vadd.f32 %v877, %v1226
      %v1228 = vpop.f32.mrf.mxu0
      %v1229 = vadd.f32 %v877, %v1228
      %1230 = vmatprep.mubr.f32.mxu0 0.0
      %1231 = vmatmul.mubr.f32.gmra.mxu0 %v978
      %v1232 = vpop.f32.mrf.mxu0
      %v1233 = vadd.f32 %v882, %v1232
      %v1234 = vpop.f32.mrf.mxu0
      %v1235 = vadd.f32 %v882, %v1234
      %1236 = vdwg.mxu0
      %v1237 = vmax.f32 %v566, 0.0
      %v1238 = vmax.f32 %v568, 0.0
      %v1239 = vmax.f32 %v572, 0.0
      %v1240 = vmax.f32 %v574, 0.0
      %v1241 = vmax.f32 %v578, 0.0
      %v1242 = vmax.f32 %v580, 0.0
      %v1243 = vmax.f32 %v584, 0.0
      %v1244 = vmax.f32 %v586, 0.0
      %v1245 = vmax.f32 %v590, 0.0
      %v1246 = vmax.f32 %v592, 0.0
      %v1247 = vmax.f32 %v596, 0.0
      %v1248 = vmax.f32 %v598, 0.0
      %v1249 = vmax.f32 %v602, 0.0
      %v1250 = vmax.f32 %v604, 0.0
      %v1251 = vmax.f32 %v608, 0.0
      %v1252 = vmax.f32 %v610, 0.0
      %v1253 = vmax.f32 %v614, 0.0
      %v1254 = vmax.f32 %v616, 0.0
      %v1255 = vmax.f32 %v620, 0.0
      %v1256 = vmax.f32 %v622, 0.0
      %v1257 = vmax.f32 %v626, 0.0
      %v1258 = vmax.f32 %v628, 0.0
      %v1259 = vmax.f32 %v632, 0.0
      %v1260 = vmax.f32 %v634, 0.0
      %v1261 = vmax.f32 %v638, 0.0
      %v1262 = vmax.f32 %v640, 0.0
      %v1263 = vmax.f32 %v644, 0.0
      %v1264 = vmax.f32 %v646, 0.0
      %v1265 = vmax.f32 %v650, 0.0
      %v1266 = vmax.f32 %v652, 0.0
      %v1267 = vmax.f32 %v656, 0.0
      %v1268 = vmax.f32 %v658, 0.0
      %v1269 = vmax.f32 %v1047, 0.0
      %v1270 = vmax.f32 %v1049, 0.0
      %v1271 = vmax.f32 %v1053, 0.0
      %v1272 = vmax.f32 %v1055, 0.0
      %v1273 = vmax.f32 %v1059, 0.0
      %v1274 = vmax.f32 %v1061, 0.0
      %v1275 = vmax.f32 %v1065, 0.0
      %v1276 = vmax.f32 %v1067, 0.0
      %v1277 = vmax.f32 %v1071, 0.0
      %v1278 = vmax.f32 %v1073, 0.0
      %v1279 = vmax.f32 %v1077, 0.0
      %v1280 = vmax.f32 %v1079, 0.0
      %v1281 = vmax.f32 %v1083, 0.0
      %v1282 = vmax.f32 %v1085, 0.0
      %v1283 = vmax.f32 %v1089, 0.0
      %v1284 = vmax.f32 %v1091, 0.0
      %v1285 = vmax.f32 %v1143, 0.0
      %v1286 = vmax.f32 %v1145, 0.0
      %v1287 = vmax.f32 %v1149, 0.0
      %v1288 = vmax.f32 %v1151, 0.0
      %v1289 = vmax.f32 %v1155, 0.0
      %v1290 = vmax.f32 %v1157, 0.0
      %v1291 = vmax.f32 %v1161, 0.0
      %v1292 = vmax.f32 %v1163, 0.0
      %v1293 = vmax.f32 %v1167, 0.0
      %v1294 = vmax.f32 %v1169, 0.0
      %v1295 = vmax.f32 %v1173, 0.0
      %v1296 = vmax.f32 %v1175, 0.0
      %v1297 = vmax.f32 %v1179, 0.0
      %v1298 = vmax.f32 %v1181, 0.0
      %v1299 = vmax.f32 %v1185, 0.0
      %v1300 = vmax.f32 %v1187, 0.0
      %1301 = vmatprep.subr.mxu0 0.0
      %1302 = vmatpush1.xpose.msra.mxu0 0.0
      %1303 = vmatprep.subr.mxu0 0.0
      %1304 = vmatpush1.xpose.msra.mxu0 0.0
      %1305 = vmatprep.subr.mxu0 0.0
      %1306 = vmatpush1.xpose.msra.mxu0 0.0
      %1307 = vmatprep.subr.mxu0 0.0
      %1308 = vmatpush1.xpose.msra.mxu0 0.0
      %1309 = vmatprep.subr.mxu0 0.0
      %1310 = vmatpush1.xpose.msra.mxu0 0.0
      %1311 = vmatprep.subr.mxu0 0.0
      %1312 = vmatpush1.xpose.msra.mxu0 0.0
      %1313 = vmatprep.subr.mxu0 0.0
      %1314 = vmatpush1.xpose.msra.mxu0 0.0
      %1315 = vmatprep.subr.mxu0 0.0
      %1316 = vmatpush1.xpose.msra.mxu0 0.0
      %1317 = vmatprep.subr.mxu0 %v1284
      %1318 = vmatpush1.xpose.msra.mxu0 %v1283
      %1319 = vmatprep.subr.mxu0 %v1282
      %1320 = vmatpush1.xpose.msra.mxu0 %v1281
      %1321 = vmatprep.subr.mxu0 %v1280
      %1322 = vmatpush1.xpose.msra.mxu0 %v1279
      %1323 = vmatprep.subr.mxu0 %v1278
      %1324 = vmatpush1.xpose.msra.mxu0 %v1277
      %1325 = vmatprep.subr.mxu0 %v1276
      %1326 = vmatpush1.xpose.msra.mxu0 %v1275
      %1327 = vmatprep.subr.mxu0 %v1274
      %1328 = vmatpush1.xpose.msra.mxu0 %v1273
      %1329 = vmatprep.subr.mxu0 %v1272
      %1330 = vmatpush1.xpose.msra.mxu0 %v1271
      %1331 = vmatprep.subr.mxu0 %v1270
      %1332 = vmatpush1.xpose.msra.mxu0 %v1269
      %1333 = vmatprep.subr.mxu0 0.0
      %1334 = vmatpush2.xpose.msra.mxu0 0.0
      %1335 = vmatprep.subr.mxu0 0.0
      %1336 = vmatpush2.xpose.msra.mxu0 0.0
      %1337 = vmatprep.subr.mxu0 0.0
      %1338 = vmatpush2.xpose.msra.mxu0 0.0
      %1339 = vmatprep.subr.mxu0 0.0
      %1340 = vmatpush2.xpose.msra.mxu0 0.0
      %1341 = vmatprep.subr.mxu0 0.0
      %1342 = vmatpush2.xpose.msra.mxu0 0.0
      %1343 = vmatprep.subr.mxu0 0.0
      %1344 = vmatpush2.xpose.msra.mxu0 0.0
      %1345 = vmatprep.subr.mxu0 0.0
      %1346 = vmatpush2.xpose.msra.mxu0 0.0
      %1347 = vmatprep.subr.mxu0 0.0
      %1348 = vmatpush2.xpose.msra.mxu0 0.0
      %1349 = vmatprep.subr.mxu0 0.0
      %1350 = vmatpush2.xpose.msra.mxu0 0.0
      %1351 = vmatprep.subr.mxu0 0.0
      %1352 = vmatpush2.xpose.msra.mxu0 0.0
      %1353 = vmatprep.subr.mxu0 0.0
      %1354 = vmatpush2.xpose.msra.mxu0 0.0
      %1355 = vmatprep.subr.mxu0 0.0
      %1356 = vmatpush2.xpose.msra.mxu0 0.0
      %1357 = vmatprep.subr.mxu0 0.0
      %1358 = vmatpush2.xpose.msra.mxu0 0.0
      %1359 = vmatprep.subr.mxu0 0.0
      %1360 = vmatpush2.xpose.msra.mxu0 0.0
      %1361 = vmatprep.subr.mxu0 0.0
      %1362 = vmatpush2.xpose.msra.mxu0 0.0
      %1363 = vmatprep.subr.mxu0 0.0
      %1364 = vmatpush2.xpose.msra.mxu0 0.0
      %1365 = vmatprep.mubr.f32.mxu0 %v1097
      %1366 = vmatmul.mubr.f32.gmra.mxu0 %v1095
      %v1367 = vpop.f32.mrf.mxu0
      %v1368 = vadd.f32 0.0, %v1367
      %v1369 = vpop.f32.mrf.mxu0
      %1370 = vmatprep.mubr.f32.mxu0 %v1103
      %1371 = vmatmul.mubr.f32.gmra.mxu0 %v1101
      %v1372 = vpop.f32.mrf.mxu0
      %v1373 = vadd.f32 0.0, %v1372
      %v1374 = vpop.f32.mrf.mxu0
      %1375 = vmatprep.mubr.f32.mxu0 %v1109
      %1376 = vmatmul.mubr.f32.gmra.mxu0 %v1107
      %v1377 = vpop.f32.mrf.mxu0
      %v1378 = vadd.f32 0.0, %v1377
      %v1379 = vpop.f32.mrf.mxu0
      %1380 = vmatprep.mubr.f32.mxu0 %v1115
      %1381 = vmatmul.mubr.f32.gmra.mxu0 %v1113
      %v1382 = vpop.f32.mrf.mxu0
      %v1383 = vadd.f32 0.0, %v1382
      %v1384 = vpop.f32.mrf.mxu0
      %1385 = vmatprep.mubr.f32.mxu0 %v1121
      %1386 = vmatmul.mubr.f32.gmra.mxu0 %v1119
      %v1387 = vpop.f32.mrf.mxu0
      %v1388 = vadd.f32 0.0, %v1387
      %v1389 = vpop.f32.mrf.mxu0
      %1390 = vmatprep.mubr.f32.mxu0 %v1127
      %1391 = vmatmul.mubr.f32.gmra.mxu0 %v1125
      %v1392 = vpop.f32.mrf.mxu0
      %v1393 = vadd.f32 0.0, %v1392
      %v1394 = vpop.f32.mrf.mxu0
      %1395 = vmatprep.mubr.f32.mxu0 %v1133
      %1396 = vmatmul.mubr.f32.gmra.mxu0 %v1131
      %v1397 = vpop.f32.mrf.mxu0
      %v1398 = vadd.f32 0.0, %v1397
      %v1399 = vpop.f32.mrf.mxu0
      %1400 = vmatprep.mubr.f32.mxu0 %v1139
      %1401 = vmatmul.mubr.f32.gmra.mxu0 %v1137
      %v1402 = vpop.f32.mrf.mxu0
      %v1403 = vadd.f32 0.0, %v1402
      %v1404 = vpop.f32.mrf.mxu0
      %1405 = vdwg.mxu0
      %1406 = vmatprep.subr.mxu0 0.0
      %1407 = vmatpush1.xpose.msra.mxu0 0.0
      %1408 = vmatprep.subr.mxu0 0.0
      %1409 = vmatpush1.xpose.msra.mxu0 0.0
      %1410 = vmatprep.subr.mxu0 0.0
      %1411 = vmatpush1.xpose.msra.mxu0 0.0
      %1412 = vmatprep.subr.mxu0 0.0
      %1413 = vmatpush1.xpose.msra.mxu0 0.0
      %1414 = vmatprep.subr.mxu0 0.0
      %1415 = vmatpush1.xpose.msra.mxu0 0.0
      %1416 = vmatprep.subr.mxu0 0.0
      %1417 = vmatpush1.xpose.msra.mxu0 0.0
      %1418 = vmatprep.subr.mxu0 0.0
      %1419 = vmatpush1.xpose.msra.mxu0 0.0
      %1420 = vmatprep.subr.mxu0 0.0
      %1421 = vmatpush1.xpose.msra.mxu0 0.0
      %1422 = vmatprep.subr.mxu0 %v1300
      %1423 = vmatpush1.xpose.msra.mxu0 %v1299
      %1424 = vmatprep.subr.mxu0 %v1298
      %1425 = vmatpush1.xpose.msra.mxu0 %v1297
      %1426 = vmatprep.subr.mxu0 %v1296
      %1427 = vmatpush1.xpose.msra.mxu0 %v1295
      %1428 = vmatprep.subr.mxu0 %v1294
      %1429 = vmatpush1.xpose.msra.mxu0 %v1293
      %1430 = vmatprep.subr.mxu0 %v1292
      %1431 = vmatpush1.xpose.msra.mxu0 %v1291
      %1432 = vmatprep.subr.mxu0 %v1290
      %1433 = vmatpush1.xpose.msra.mxu0 %v1289
      %1434 = vmatprep.subr.mxu0 %v1288
      %1435 = vmatpush1.xpose.msra.mxu0 %v1287
      %1436 = vmatprep.subr.mxu0 %v1286
      %1437 = vmatpush1.xpose.msra.mxu0 %v1285
      %1438 = vmatprep.subr.mxu0 0.0
      %1439 = vmatpush2.xpose.msra.mxu0 0.0
      %1440 = vmatprep.subr.mxu0 0.0
      %1441 = vmatpush2.xpose.msra.mxu0 0.0
      %1442 = vmatprep.subr.mxu0 0.0
      %1443 = vmatpush2.xpose.msra.mxu0 0.0
      %1444 = vmatprep.subr.mxu0 0.0
      %1445 = vmatpush2.xpose.msra.mxu0 0.0
      %1446 = vmatprep.subr.mxu0 0.0
      %1447 = vmatpush2.xpose.msra.mxu0 0.0
      %1448 = vmatprep.subr.mxu0 0.0
      %1449 = vmatpush2.xpose.msra.mxu0 0.0
      %1450 = vmatprep.subr.mxu0 0.0
      %1451 = vmatpush2.xpose.msra.mxu0 0.0
      %1452 = vmatprep.subr.mxu0 0.0
      %1453 = vmatpush2.xpose.msra.mxu0 0.0
      %1454 = vmatprep.subr.mxu0 0.0
      %1455 = vmatpush2.xpose.msra.mxu0 0.0
      %1456 = vmatprep.subr.mxu0 0.0
      %1457 = vmatpush2.xpose.msra.mxu0 0.0
      %1458 = vmatprep.subr.mxu0 0.0
      %1459 = vmatpush2.xpose.msra.mxu0 0.0
      %1460 = vmatprep.subr.mxu0 0.0
      %1461 = vmatpush2.xpose.msra.mxu0 0.0
      %1462 = vmatprep.subr.mxu0 0.0
      %1463 = vmatpush2.xpose.msra.mxu0 0.0
      %1464 = vmatprep.subr.mxu0 0.0
      %1465 = vmatpush2.xpose.msra.mxu0 0.0
      %1466 = vmatprep.subr.mxu0 0.0
      %1467 = vmatpush2.xpose.msra.mxu0 0.0
      %1468 = vmatprep.subr.mxu0 0.0
      %1469 = vmatpush2.xpose.msra.mxu0 0.0
      %1470 = vmatprep.mubr.f32.mxu0 %v1193
      %1471 = vmatmul.mubr.f32.gmra.mxu0 %v1191
      %v1472 = vpop.f32.mrf.mxu0
      %v1473 = vadd.f32 0.0, %v1472
      %v1474 = vpop.f32.mrf.mxu0
      %1475 = vmatprep.mubr.f32.mxu0 %v1199
      %1476 = vmatmul.mubr.f32.gmra.mxu0 %v1197
      %v1477 = vpop.f32.mrf.mxu0
      %v1478 = vadd.f32 0.0, %v1477
      %v1479 = vpop.f32.mrf.mxu0
      %1480 = vmatprep.mubr.f32.mxu0 %v1205
      %1481 = vmatmul.mubr.f32.gmra.mxu0 %v1203
      %v1482 = vpop.f32.mrf.mxu0
      %v1483 = vadd.f32 0.0, %v1482
      %v1484 = vpop.f32.mrf.mxu0
      %1485 = vmatprep.mubr.f32.mxu0 %v1211
      %1486 = vmatmul.mubr.f32.gmra.mxu0 %v1209
      %v1487 = vpop.f32.mrf.mxu0
      %v1488 = vadd.f32 0.0, %v1487
      %v1489 = vpop.f32.mrf.mxu0
      %1490 = vmatprep.mubr.f32.mxu0 %v1217
      %1491 = vmatmul.mubr.f32.gmra.mxu0 %v1215
      %v1492 = vpop.f32.mrf.mxu0
      %v1493 = vadd.f32 0.0, %v1492
      %v1494 = vpop.f32.mrf.mxu0
      %1495 = vmatprep.mubr.f32.mxu0 %v1223
      %1496 = vmatmul.mubr.f32.gmra.mxu0 %v1221
      %v1497 = vpop.f32.mrf.mxu0
      %v1498 = vadd.f32 0.0, %v1497
      %v1499 = vpop.f32.mrf.mxu0
      %1500 = vmatprep.mubr.f32.mxu0 %v1229
      %1501 = vmatmul.mubr.f32.gmra.mxu0 %v1227
      %v1502 = vpop.f32.mrf.mxu0
      %v1503 = vadd.f32 0.0, %v1502
      %v1504 = vpop.f32.mrf.mxu0
      %1505 = vmatprep.mubr.f32.mxu0 %v1235
      %1506 = vmatmul.mubr.f32.gmra.mxu0 %v1233
      %v1507 = vpop.f32.mrf.mxu0
      %v1508 = vadd.f32 0.0, %v1507
      %v1509 = vpop.f32.mrf.mxu0
      %1510 = vdwg.mxu0
      %v1511 = vadd.f32 %v1269, %v1270
      %1512 = vadd.xlane.f32.xlu0 %v1511
      %v1513 = vpop.xlane.xlu0 %1512
      %v1514 = vadd.f32 %v1271, %v1272
      %1515 = vadd.xlane.f32.xlu0 %v1514
      %v1516 = vpop.xlane.xlu0 %1515
      %v1517 = vadd.f32 %v1273, %v1274
      %1518 = vadd.xlane.f32.xlu0 %v1517
      %v1519 = vpop.xlane.xlu0 %1518
      %v1520 = vadd.f32 %v1275, %v1276
      %1521 = vadd.xlane.f32.xlu0 %v1520
      %v1522 = vpop.xlane.xlu0 %1521
      %v1523 = vadd.f32 %v1277, %v1278
      %1524 = vadd.xlane.f32.xlu0 %v1523
      %v1525 = vpop.xlane.xlu0 %1524
      %v1526 = vadd.f32 %v1279, %v1280
      %1527 = vadd.xlane.f32.xlu0 %v1526
      %v1528 = vpop.xlane.xlu0 %1527
      %v1529 = vadd.f32 %v1281, %v1282
      %1530 = vadd.xlane.f32.xlu0 %v1529
      %v1531 = vpop.xlane.xlu0 %1530
      %v1532 = vadd.f32 %v1283, %v1284
      %1533 = vadd.xlane.f32.xlu0 %v1532
      %v1534 = vpop.xlane.xlu0 %1533
      %v1535 = vadd.f32 %v1285, %v1286
      %1536 = vadd.xlane.f32.xlu0 %v1535
      %v1537 = vpop.xlane.xlu0 %1536
      %v1538 = vadd.f32 %v1287, %v1288
      %1539 = vadd.xlane.f32.xlu0 %v1538
      %v1540 = vpop.xlane.xlu0 %1539
      %v1541 = vadd.f32 %v1289, %v1290
      %1542 = vadd.xlane.f32.xlu0 %v1541
      %v1543 = vpop.xlane.xlu0 %1542
      %v1544 = vadd.f32 %v1291, %v1292
      %1545 = vadd.xlane.f32.xlu0 %v1544
      %v1546 = vpop.xlane.xlu0 %1545
      %v1547 = vadd.f32 %v1293, %v1294
      %1548 = vadd.xlane.f32.xlu0 %v1547
      %v1549 = vpop.xlane.xlu0 %1548
      %v1550 = vadd.f32 %v1295, %v1296
      %1551 = vadd.xlane.f32.xlu0 %v1550
      %v1552 = vpop.xlane.xlu0 %1551
      %v1553 = vadd.f32 %v1297, %v1298
      %1554 = vadd.xlane.f32.xlu0 %v1553
      %v1555 = vpop.xlane.xlu0 %1554
      %v1556 = vadd.f32 %v1299, %v1300
      %1557 = vadd.xlane.f32.xlu0 %v1556
      %v1558 = vpop.xlane.xlu0 %1557
      %vm1559 = vcmask 523264
      %v1561 = vsel %vm1559, %v1368, 0
      %v1564 = vsel %vm1559, %v1373, 0
      %v1567 = vsel %vm1559, %v1378, 0
      %v1570 = vsel %vm1559, %v1383, 0
      %v1573 = vsel %vm1559, %v1388, 0
      %v1576 = vsel %vm1559, %v1393, 0
      %v1579 = vsel %vm1559, %v1398, 0
      %v1582 = vsel %vm1559, %v1403, 0
      %1584 = vmatprep.subr.mxu0 0.0
      %1585 = vmatpush1.msra.mxu0 0.0
      %1586 = vmatprep.subr.mxu0 0.0
      %1587 = vmatpush1.msra.mxu0 0.0
      %1588 = vmatprep.subr.mxu0 0.0
      %1589 = vmatpush1.msra.mxu0 0.0
      %1590 = vmatprep.subr.mxu0 0.0
      %1591 = vmatpush1.msra.mxu0 0.0
      %1592 = vmatprep.subr.mxu0 0.0
      %1593 = vmatpush1.msra.mxu0 0.0
      %1594 = vmatprep.subr.mxu0 0.0
      %1595 = vmatpush1.msra.mxu0 0.0
      %1596 = vmatprep.subr.mxu0 0.0
      %1597 = vmatpush1.msra.mxu0 0.0
      %1598 = vmatprep.subr.mxu0 0.0
      %1599 = vmatpush1.msra.mxu0 0.0
      %1600 = vmatprep.subr.mxu0 %v1252
      %1601 = vmatpush1.msra.mxu0 %v1251
      %1602 = vmatprep.subr.mxu0 %v1250
      %1603 = vmatpush1.msra.mxu0 %v1249
      %1604 = vmatprep.subr.mxu0 %v1248
      %1605 = vmatpush1.msra.mxu0 %v1247
      %1606 = vmatprep.subr.mxu0 %v1246
      %1607 = vmatpush1.msra.mxu0 %v1245
      %1608 = vmatprep.subr.mxu0 %v1244
      %1609 = vmatpush1.msra.mxu0 %v1243
      %1610 = vmatprep.subr.mxu0 %v1242
      %1611 = vmatpush1.msra.mxu0 %v1241
      %1612 = vmatprep.subr.mxu0 %v1240
      %1613 = vmatpush1.msra.mxu0 %v1239
      %1614 = vmatprep.subr.mxu0 %v1238
      %1615 = vmatpush1.msra.mxu0 %v1237
      %1616 = vmatprep.subr.mxu0 0.0
      %1617 = vmatpush2.msra.mxu0 0.0
      %1618 = vmatprep.subr.mxu0 0.0
      %1619 = vmatpush2.msra.mxu0 0.0
      %1620 = vmatprep.subr.mxu0 0.0
      %1621 = vmatpush2.msra.mxu0 0.0
      %1622 = vmatprep.subr.mxu0 0.0
      %1623 = vmatpush2.msra.mxu0 0.0
      %1624 = vmatprep.subr.mxu0 0.0
      %1625 = vmatpush2.msra.mxu0 0.0
      %1626 = vmatprep.subr.mxu0 0.0
      %1627 = vmatpush2.msra.mxu0 0.0
      %1628 = vmatprep.subr.mxu0 0.0
      %1629 = vmatpush2.msra.mxu0 0.0
      %1630 = vmatprep.subr.mxu0 0.0
      %1631 = vmatpush2.msra.mxu0 0.0
      %1632 = vmatprep.subr.mxu0 0.0
      %1633 = vmatpush2.msra.mxu0 0.0
      %1634 = vmatprep.subr.mxu0 0.0
      %1635 = vmatpush2.msra.mxu0 0.0
      %1636 = vmatprep.subr.mxu0 0.0
      %1637 = vmatpush2.msra.mxu0 0.0
      %1638 = vmatprep.subr.mxu0 0.0
      %1639 = vmatpush2.msra.mxu0 0.0
      %1640 = vmatprep.subr.mxu0 0.0
      %1641 = vmatpush2.msra.mxu0 0.0
      %1642 = vmatprep.subr.mxu0 0.0
      %1643 = vmatpush2.msra.mxu0 0.0
      %1644 = vmatprep.subr.mxu0 0.0
      %1645 = vmatpush2.msra.mxu0 0.0
      %1646 = vmatprep.subr.mxu0 0.0
      %1647 = vmatpush2.msra.mxu0 0.0
      %1648 = vmatprep.mubr.f32.mxu0 0.0
      %1649 = vmatmul.mubr.f32.gmra.mxu0 %v1561
      %v1650 = vpop.f32.mrf.mxu0
      %v1651 = vadd.f32 0.0, %v1650
      %v1652 = vpop.f32.mrf.mxu0
      %v1653 = vadd.f32 0.0, %v1652
      %1654 = vmatprep.mubr.f32.mxu0 0.0
      %1655 = vmatmul.mubr.f32.gmra.mxu0 %v1564
      %v1656 = vpop.f32.mrf.mxu0
      %v1657 = vadd.f32 0.0, %v1656
      %v1658 = vpop.f32.mrf.mxu0
      %v1659 = vadd.f32 0.0, %v1658
      %1660 = vmatprep.mubr.f32.mxu0 0.0
      %1661 = vmatmul.mubr.f32.gmra.mxu0 %v1567
      %v1662 = vpop.f32.mrf.mxu0
      %v1663 = vadd.f32 0.0, %v1662
      %v1664 = vpop.f32.mrf.mxu0
      %v1665 = vadd.f32 0.0, %v1664
      %1666 = vmatprep.mubr.f32.mxu0 0.0
      %1667 = vmatmul.mubr.f32.gmra.mxu0 %v1570
      %v1668 = vpop.f32.mrf.mxu0
      %v1669 = vadd.f32 0.0, %v1668
      %v1670 = vpop.f32.mrf.mxu0
      %v1671 = vadd.f32 0.0, %v1670
      %1672 = vmatprep.mubr.f32.mxu0 0.0
      %1673 = vmatmul.mubr.f32.gmra.mxu0 %v1573
      %v1674 = vpop.f32.mrf.mxu0
      %v1675 = vadd.f32 0.0, %v1674
      %v1676 = vpop.f32.mrf.mxu0
      %v1677 = vadd.f32 0.0, %v1676
      %1678 = vmatprep.mubr.f32.mxu0 0.0
      %1679 = vmatmul.mubr.f32.gmra.mxu0 %v1576
      %v1680 = vpop.f32.mrf.mxu0
      %v1681 = vadd.f32 0.0, %v1680
      %v1682 = vpop.f32.mrf.mxu0
      %v1683 = vadd.f32 0.0, %v1682
      %1684 = vmatprep.mubr.f32.mxu0 0.0
      %1685 = vmatmul.mubr.f32.gmra.mxu0 %v1579
      %v1686 = vpop.f32.mrf.mxu0
      %v1687 = vadd.f32 0.0, %v1686
      %v1688 = vpop.f32.mrf.mxu0
      %v1689 = vadd.f32 0.0, %v1688
      %1690 = vmatprep.mubr.f32.mxu0 0.0
      %1691 = vmatmul.mubr.f32.gmra.mxu0 %v1582
      %v1692 = vpop.f32.mrf.mxu0
      %v1693 = vadd.f32 0.0, %v1692
      %v1694 = vpop.f32.mrf.mxu0
      %v1695 = vadd.f32 0.0, %v1694
      %1696 = vdwg.mxu0
      %v1698 = vsel %vm1559, %v1473, 0
      %v1701 = vsel %vm1559, %v1478, 0
      %v1704 = vsel %vm1559, %v1483, 0
      %v1707 = vsel %vm1559, %v1488, 0
      %v1710 = vsel %vm1559, %v1493, 0
      %v1713 = vsel %vm1559, %v1498, 0
      %v1716 = vsel %vm1559, %v1503, 0
      %v1719 = vsel %vm1559, %v1508, 0
      %1721 = vmatprep.subr.mxu0 0.0
      %1722 = vmatpush1.msra.mxu0 0.0
      %1723 = vmatprep.subr.mxu0 0.0
      %1724 = vmatpush1.msra.mxu0 0.0
      %1725 = vmatprep.subr.mxu0 0.0
      %1726 = vmatpush1.msra.mxu0 0.0
      %1727 = vmatprep.subr.mxu0 0.0
      %1728 = vmatpush1.msra.mxu0 0.0
      %1729 = vmatprep.subr.mxu0 0.0
      %1730 = vmatpush1.msra.mxu0 0.0
      %1731 = vmatprep.subr.mxu0 0.0
      %1732 = vmatpush1.msra.mxu0 0.0
      %1733 = vmatprep.subr.mxu0 0.0
      %1734 = vmatpush1.msra.mxu0 0.0
      %1735 = vmatprep.subr.mxu0 0.0
      %1736 = vmatpush1.msra.mxu0 0.0
      %1737 = vmatprep.subr.mxu0 %v1268
      %1738 = vmatpush1.msra.mxu0 %v1267
      %1739 = vmatprep.subr.mxu0 %v1266
      %1740 = vmatpush1.msra.mxu0 %v1265
      %1741 = vmatprep.subr.mxu0 %v1264
      %1742 = vmatpush1.msra.mxu0 %v1263
      %1743 = vmatprep.subr.mxu0 %v1262
      %1744 = vmatpush1.msra.mxu0 %v1261
      %1745 = vmatprep.subr.mxu0 %v1260
      %1746 = vmatpush1.msra.mxu0 %v1259
      %1747 = vmatprep.subr.mxu0 %v1258
      %1748 = vmatpush1.msra.mxu0 %v1257
      %1749 = vmatprep.subr.mxu0 %v1256
      %1750 = vmatpush1.msra.mxu0 %v1255
      %1751 = vmatprep.subr.mxu0 %v1254
      %1752 = vmatpush1.msra.mxu0 %v1253
      %1753 = vmatprep.subr.mxu0 0.0
      %1754 = vmatpush2.msra.mxu0 0.0
      %1755 = vmatprep.subr.mxu0 0.0
      %1756 = vmatpush2.msra.mxu0 0.0
      %1757 = vmatprep.subr.mxu0 0.0
      %1758 = vmatpush2.msra.mxu0 0.0
      %1759 = vmatprep.subr.mxu0 0.0
      %1760 = vmatpush2.msra.mxu0 0.0
      %1761 = vmatprep.subr.mxu0 0.0
      %1762 = vmatpush2.msra.mxu0 0.0
      %1763 = vmatprep.subr.mxu0 0.0
      %1764 = vmatpush2.msra.mxu0 0.0
      %1765 = vmatprep.subr.mxu0 0.0
      %1766 = vmatpush2.msra.mxu0 0.0
      %1767 = vmatprep.subr.mxu0 0.0
      %1768 = vmatpush2.msra.mxu0 0.0
      %1769 = vmatprep.subr.mxu0 0.0
      %1770 = vmatpush2.msra.mxu0 0.0
      %1771 = vmatprep.subr.mxu0 0.0
      %1772 = vmatpush2.msra.mxu0 0.0
      %1773 = vmatprep.subr.mxu0 0.0
      %1774 = vmatpush2.msra.mxu0 0.0
      %1775 = vmatprep.subr.mxu0 0.0
      %1776 = vmatpush2.msra.mxu0 0.0
      %1777 = vmatprep.subr.mxu0 0.0
      %1778 = vmatpush2.msra.mxu0 0.0
      %1779 = vmatprep.subr.mxu0 0.0
      %1780 = vmatpush2.msra.mxu0 0.0
      %1781 = vmatprep.subr.mxu0 0.0
      %1782 = vmatpush2.msra.mxu0 0.0
      %1783 = vmatprep.subr.mxu0 0.0
      %1784 = vmatpush2.msra.mxu0 0.0
      %1785 = vmatprep.mubr.f32.mxu0 0.0
      %1786 = vmatmul.mubr.f32.gmra.mxu0 %v1698
      %v1787 = vpop.f32.mrf.mxu0
      %v1788 = vadd.f32 0.0, %v1787
      %v1789 = vpop.f32.mrf.mxu0
      %v1790 = vadd.f32 0.0, %v1789
      %1791 = vmatprep.mubr.f32.mxu0 0.0
      %1792 = vmatmul.mubr.f32.gmra.mxu0 %v1701
      %v1793 = vpop.f32.mrf.mxu0
      %v1794 = vadd.f32 0.0, %v1793
      %v1795 = vpop.f32.mrf.mxu0
      %v1796 = vadd.f32 0.0, %v1795
      %1797 = vmatprep.mubr.f32.mxu0 0.0
      %1798 = vmatmul.mubr.f32.gmra.mxu0 %v1704
      %v1799 = vpop.f32.mrf.mxu0
      %v1800 = vadd.f32 0.0, %v1799
      %v1801 = vpop.f32.mrf.mxu0
      %v1802 = vadd.f32 0.0, %v1801
      %1803 = vmatprep.mubr.f32.mxu0 0.0
      %1804 = vmatmul.mubr.f32.gmra.mxu0 %v1707
      %v1805 = vpop.f32.mrf.mxu0
      %v1806 = vadd.f32 0.0, %v1805
      %v1807 = vpop.f32.mrf.mxu0
      %v1808 = vadd.f32 0.0, %v1807
      %1809 = vmatprep.mubr.f32.mxu0 0.0
      %1810 = vmatmul.mubr.f32.gmra.mxu0 %v1710
      %v1811 = vpop.f32.mrf.mxu0
      %v1812 = vadd.f32 0.0, %v1811
      %v1813 = vpop.f32.mrf.mxu0
      %v1814 = vadd.f32 0.0, %v1813
      %1815 = vmatprep.mubr.f32.mxu0 0.0
      %1816 = vmatmul.mubr.f32.gmra.mxu0 %v1713
      %v1817 = vpop.f32.mrf.mxu0
      %v1818 = vadd.f32 0.0, %v1817
      %v1819 = vpop.f32.mrf.mxu0
      %v1820 = vadd.f32 0.0, %v1819
      %1821 = vmatprep.mubr.f32.mxu0 0.0
      %1822 = vmatmul.mubr.f32.gmra.mxu0 %v1716
      %v1823 = vpop.f32.mrf.mxu0
      %v1824 = vadd.f32 0.0, %v1823
      %v1825 = vpop.f32.mrf.mxu0
      %v1826 = vadd.f32 0.0, %v1825
      %1827 = vmatprep.mubr.f32.mxu0 0.0
      %1828 = vmatmul.mubr.f32.gmra.mxu0 %v1719
      %v1829 = vpop.f32.mrf.mxu0
      %v1830 = vadd.f32 0.0, %v1829
      %v1831 = vpop.f32.mrf.mxu0
      %v1832 = vadd.f32 0.0, %v1831
      %1833 = vdwg.mxu0
      %v1834 = vmul.f32 %v1237, %v1513
      %v1835 = vmul.f32 %v1238, %v1513
      %v1836 = vmul.f32 %v1239, %v1516
      %v1837 = vmul.f32 %v1240, %v1516
      %v1838 = vmul.f32 %v1241, %v1519
      %v1839 = vmul.f32 %v1242, %v1519
      %v1840 = vmul.f32 %v1243, %v1522
      %v1841 = vmul.f32 %v1244, %v1522
      %v1842 = vmul.f32 %v1245, %v1525
      %v1843 = vmul.f32 %v1246, %v1525
      %v1844 = vmul.f32 %v1247, %v1528
      %v1845 = vmul.f32 %v1248, %v1528
      %v1846 = vmul.f32 %v1249, %v1531
      %v1847 = vmul.f32 %v1250, %v1531
      %v1848 = vmul.f32 %v1251, %v1534
      %v1849 = vmul.f32 %v1252, %v1534
      %v1850 = vmul.f32 %v1253, %v1537
      %v1851 = vmul.f32 %v1254, %v1537
      %v1852 = vmul.f32 %v1255, %v1540
      %v1853 = vmul.f32 %v1256, %v1540
      %v1854 = vmul.f32 %v1257, %v1543
      %v1855 = vmul.f32 %v1258, %v1543
      %v1856 = vmul.f32 %v1259, %v1546
      %v1857 = vmul.f32 %v1260, %v1546
      %v1858 = vmul.f32 %v1261, %v1549
      %v1859 = vmul.f32 %v1262, %v1549
      %v1860 = vmul.f32 %v1263, %v1552
      %v1861 = vmul.f32 %v1264, %v1552
      %v1862 = vmul.f32 %v1265, %v1555
      %v1863 = vmul.f32 %v1266, %v1555
      %v1864 = vmul.f32 %v1267, %v1558
      %v1865 = vmul.f32 %v1268, %v1558
      %v1866 = vadd.f32 %v1834, %v1836
      %v1867 = vadd.f32 %v1866, %v1838
      %v1868 = vadd.f32 %v1867, %v1840
      %v1869 = vadd.f32 %v1868, %v1842
      %v1870 = vadd.f32 %v1869, %v1844
      %v1871 = vadd.f32 %v1870, %v1846
      %v1872 = vadd.f32 %v1871, %v1848
      %v1873 = vrot.slane %v1872, 4
      %v1874 = vadd.f32 %v1872, %v1873
      %v1875 = vrot.slane %v1874, 2
      %v1876 = vadd.f32 %v1874, %v1875
      %v1877 = vrot.slane %v1876, 1
      %v1878 = vadd.f32 %v1876, %v1877
      %v1879 = vadd.f32 %v1835, %v1837
      %v1880 = vadd.f32 %v1879, %v1839
      %v1881 = vadd.f32 %v1880, %v1841
      %v1882 = vadd.f32 %v1881, %v1843
      %v1883 = vadd.f32 %v1882, %v1845
      %v1884 = vadd.f32 %v1883, %v1847
      %v1885 = vadd.f32 %v1884, %v1849
      %v1886 = vrot.slane %v1885, 4
      %v1887 = vadd.f32 %v1885, %v1886
      %v1888 = vrot.slane %v1887, 2
      %v1889 = vadd.f32 %v1887, %v1888
      %v1890 = vrot.slane %v1889, 1
      %v1891 = vadd.f32 %v1889, %v1890
      %v1892 = vadd.f32 %v1850, %v1852
      %v1893 = vadd.f32 %v1892, %v1854
      %v1894 = vadd.f32 %v1893, %v1856
      %v1895 = vadd.f32 %v1894, %v1858
      %v1896 = vadd.f32 %v1895, %v1860
      %v1897 = vadd.f32 %v1896, %v1862
      %v1898 = vadd.f32 %v1897, %v1864
      %v1899 = vrot.slane %v1898, 4
      %v1900 = vadd.f32 %v1898, %v1899
      %v1901 = vrot.slane %v1900, 2
      %v1902 = vadd.f32 %v1900, %v1901
      %v1903 = vrot.slane %v1902, 1
      %v1904 = vadd.f32 %v1902, %v1903
      %v1905 = vadd.f32 %v1851, %v1853
      %v1906 = vadd.f32 %v1905, %v1855
      %v1907 = vadd.f32 %v1906, %v1857
      %v1908 = vadd.f32 %v1907, %v1859
      %v1909 = vadd.f32 %v1908, %v1861
      %v1910 = vadd.f32 %v1909, %v1863
      %v1911 = vadd.f32 %v1910, %v1865
      %v1912 = vrot.slane %v1911, 4
      %v1913 = vadd.f32 %v1911, %v1912
      %v1914 = vrot.slane %v1913, 2
      %v1915 = vadd.f32 %v1913, %v1914
      %v1916 = vrot.slane %v1915, 1
      %v1917 = vadd.f32 %v1915, %v1916
      %v1918 = vadd.f32 %v1878, 1e-15
      %v1919 = vadd.f32 %v1891, 1e-15
      %v1920 = vadd.f32 %v1904, 1e-15
      %v1921 = vadd.f32 %v1917, 1e-15
      %v1922 = vrcp.pop %v1918
      %v1923 = vrcp.pop %v1919
      %v1924 = vrcp.pop %v1920
      %v1925 = vrcp.pop %v1921
      %v1926 = vmul.f32 %v1651, %v1922
      %v1927 = vmul.f32 %v1653, %v1923
      %v1928 = vmul.f32 %v1657, %v1922
      %v1929 = vmul.f32 %v1659, %v1923
      %v1930 = vmul.f32 %v1663, %v1922
      %v1931 = vmul.f32 %v1665, %v1923
      %v1932 = vmul.f32 %v1669, %v1922
      %v1933 = vmul.f32 %v1671, %v1923
      %v1934 = vmul.f32 %v1675, %v1922
      %v1935 = vmul.f32 %v1677, %v1923
      %v1936 = vmul.f32 %v1681, %v1922
      %v1937 = vmul.f32 %v1683, %v1923
      %v1938 = vmul.f32 %v1687, %v1922
      %v1939 = vmul.f32 %v1689, %v1923
      %v1940 = vmul.f32 %v1693, %v1922
      %v1941 = vmul.f32 %v1695, %v1923
      %v1942 = vmul.f32 %v1788, %v1924
      %v1943 = vmul.f32 %v1790, %v1925
      %v1944 = vmul.f32 %v1794, %v1924
      %v1945 = vmul.f32 %v1796, %v1925
      %v1946 = vmul.f32 %v1800, %v1924
      %v1947 = vmul.f32 %v1802, %v1925
      %v1948 = vmul.f32 %v1806, %v1924
      %v1949 = vmul.f32 %v1808, %v1925
      %v1950 = vmul.f32 %v1812, %v1924
      %v1951 = vmul.f32 %v1814, %v1925
      %v1952 = vmul.f32 %v1818, %v1924
      %v1953 = vmul.f32 %v1820, %v1925
      %v1954 = vmul.f32 %v1824, %v1924
      %v1955 = vmul.f32 %v1826, %v1925
      %v1956 = vmul.f32 %v1830, %v1924
      %v1957 = vmul.f32 %v1832, %v1925
      %v1958 = vld [vmem:[%s5] sm:$0xff]
      %v1959 = vld [vmem:[%s5 + $0x8] sm:$0xff]
      %v1960 = vld [vmem:[%s6] sm:$0xff]
      %v1961 = vld [vmem:[%s6 + $0x8] sm:$0xff]
      %1963 = vset.pattern.permute.xlu0 0
      %1964 = vperm.xlu0 %1963, %v1960
      %v1965 = vpop.permute.xlu0 %1964
      %1968 = vset.pattern.permute.xlu0 0
      %1969 = vperm.xlu0 %1968, %v1961
      %v1970 = vpop.permute.xlu0 %1969
      %1972 = vmatprep.subr.mxu0 %v1957
      %1973 = vmatpush1.msra.mxu0 %v1956
      %1974 = vmatprep.subr.mxu0 %v1955
      %1975 = vmatpush1.msra.mxu0 %v1954
      %1976 = vmatprep.subr.mxu0 %v1953
      %1977 = vmatpush1.msra.mxu0 %v1952
      %1978 = vmatprep.subr.mxu0 %v1951
      %1979 = vmatpush1.msra.mxu0 %v1950
      %1980 = vmatprep.subr.mxu0 %v1949
      %1981 = vmatpush1.msra.mxu0 %v1948
      %1982 = vmatprep.subr.mxu0 %v1947
      %1983 = vmatpush1.msra.mxu0 %v1946
      %1984 = vmatprep.subr.mxu0 %v1945
      %1985 = vmatpush1.msra.mxu0 %v1944
      %1986 = vmatprep.subr.mxu0 %v1943
      %1987 = vmatpush1.msra.mxu0 %v1942
      %1988 = vmatprep.subr.mxu0 %v1941
      %1989 = vmatpush1.msra.mxu0 %v1940
      %1990 = vmatprep.subr.mxu0 %v1939
      %1991 = vmatpush1.msra.mxu0 %v1938
      %1992 = vmatprep.subr.mxu0 %v1937
      %1993 = vmatpush1.msra.mxu0 %v1936
      %1994 = vmatprep.subr.mxu0 %v1935
      %1995 = vmatpush1.msra.mxu0 %v1934
      %1996 = vmatprep.subr.mxu0 %v1933
      %1997 = vmatpush1.msra.mxu0 %v1932
      %1998 = vmatprep.subr.mxu0 %v1931
      %1999 = vmatpush1.msra.mxu0 %v1930
      %2000 = vmatprep.subr.mxu0 %v1929
      %2001 = vmatpush1.msra.mxu0 %v1928
      %2002 = vmatprep.subr.mxu0 %v1927
      %2003 = vmatpush1.msra.mxu0 %v1926
      %2004 = vmatprep.subr.mxu0 0.0
      %2005 = vmatpush2.msra.mxu0 0.0
      %2006 = vmatprep.subr.mxu0 0.0
      %2007 = vmatpush2.msra.mxu0 0.0
      %2008 = vmatprep.subr.mxu0 0.0
      %2009 = vmatpush2.msra.mxu0 0.0
      %2010 = vmatprep.subr.mxu0 0.0
      %2011 = vmatpush2.msra.mxu0 0.0
      %2012 = vmatprep.subr.mxu0 0.0
      %2013 = vmatpush2.msra.mxu0 0.0
      %2014 = vmatprep.subr.mxu0 0.0
      %2015 = vmatpush2.msra.mxu0 0.0
      %2016 = vmatprep.subr.mxu0 0.0
      %2017 = vmatpush2.msra.mxu0 0.0
      %2018 = vmatprep.subr.mxu0 0.0
      %2019 = vmatpush2.msra.mxu0 0.0
      %2020 = vmatprep.subr.mxu0 0.0
      %2021 = vmatpush2.msra.mxu0 0.0
      %2022 = vmatprep.subr.mxu0 0.0
      %2023 = vmatpush2.msra.mxu0 0.0
      %2024 = vmatprep.subr.mxu0 0.0
      %2025 = vmatpush2.msra.mxu0 0.0
      %2026 = vmatprep.subr.mxu0 0.0
      %2027 = vmatpush2.msra.mxu0 0.0
      %2028 = vmatprep.subr.mxu0 0.0
      %2029 = vmatpush2.msra.mxu0 0.0
      %2030 = vmatprep.subr.mxu0 0.0
      %2031 = vmatpush2.msra.mxu0 0.0
      %2032 = vmatprep.subr.mxu0 0.0
      %2033 = vmatpush2.msra.mxu0 0.0
      %2034 = vmatprep.subr.mxu0 0.0
      %2035 = vmatpush2.msra.mxu0 0.0
      %2036 = vmatprep.mubr.f32.mxu0 0.0
      %2037 = vmatmul.mubr.f32.gmra.mxu0 %v1958
      %v2038 = vpop.f32.mrf.mxu0
      %v2039 = vadd.f32 %v1965, %v2038
      %v2040 = vpop.f32.mrf.mxu0
      %v2041 = vadd.f32 %v1965, %v2040
      %2042 = vmatprep.mubr.f32.mxu0 0.0
      %2043 = vmatmul.mubr.f32.gmra.mxu0 %v1959
      %v2044 = vpop.f32.mrf.mxu0
      %v2045 = vadd.f32 %v1970, %v2044
      %v2046 = vpop.f32.mrf.mxu0
      %v2047 = vadd.f32 %v1970, %v2046
      %2048 = vdwg.mxu0
      %v2049 = vld [vmem:[%s320] sm:$0xff]
      %v2050 = vld [vmem:[%s320 + $0x8] sm:$0xff]
      %v2051 = vld [vmem:[%s320 + $0x10] sm:$0xff]
      %v2052 = vld [vmem:[%s320 + $0x18] sm:$0xff]
      %v2053 = vadd.f32 %v2039, %v2049
      %v2054 = vadd.f32 %v2041, %v2050
      %v2055 = vadd.f32 %v2045, %v2051
      %v2056 = vadd.f32 %v2047, %v2052
      %2057 = vst [vmem:[%s325] sm:$0xff] %v2053
      %2058 = vst [vmem:[%s325 + $0x8] sm:$0xff] %v2054
      %2059 = vst [vmem:[%s325 + $0x10] sm:$0xff] %v2055
      %2060 = vst [vmem:[%s325 + $0x18] sm:$0xff] %v2056
      %p2061 = scmp.lt.s32.totalorder %s19, 1
      %s2062 = scalar_select %p2061, %s19, 1
      %s2063 = smul.addr %s2062, 4
      %s2064 = smul.addr %s2063, 8
      %s2065 = scalar_lea.vmem %s8, %s2064
      // Predicated region
      $region53: #{lite_mla_forward.5} parent=51 // pred_check
        %p2066 = pneg %p215
      $region54: #{lite_mla_forward.5} parent=51 // pred_check_branch
        %2068 = sbr.rel (%p2066) target = $region56
      $region55: #{lite_mla_forward.5} parent=51 // pred_region
        _
      $region56: #{lite_mla_forward.5} parent=51 // pred_fallthru
        _
    $region52: #{lite_mla_forward.5} parent=5 // pred_fallthru
      _
    %p2069 = scmp.le.s32.totalorder 2, %s14
    // Predicated region
    $region57: #{lite_mla_forward.5} parent=5 // pred_check
      %p2070 = pneg %p2069
    $region58: #{lite_mla_forward.5} parent=5 // pred_check_branch
      %2072 = sbr.rel (%p2070) target = $region60
    $region59: #{lite_mla_forward.5} parent=5 // pred_region
      %s2073 = ssub.s32 %s14, 2
      // Predicated region
      $region61: #{lite_mla_forward.5} parent=59 // pred_check
        %p2074 = pneg %p221
      $region62: #{lite_mla_forward.5} parent=59 // pred_check_branch
        %2076 = sbr.rel (%p2074) target = $region64
      $region63: #{lite_mla_forward.5} parent=59 // pred_region
        %p2077 = scmp.lt.s32.totalorder %s20, 1
        %s2078 = scalar_select %p2077, %s20, 1
        %s2079 = smul.addr %s2078, 4
        %s2080 = smul.addr %s2079, 8
        %s2081 = scalar_lea.vmem %s8, %s2080
      $region64: #{lite_mla_forward.5} parent=59 // pred_fallthru
        _
    $region60: #{lite_mla_forward.5} parent=5 // pred_fallthru
      _
  $region6: #{lite_mla_forward.5} parent=0 // loop_footer
    %s18 = sadd.s32 1, %s14
  $region7: #{lite_mla_forward.5} parent=0 // loop_footer_branch
    %13 = sbr.rel target = $region3
  $region8: #{lite_mla_forward.5} parent=0 // loop_exit
    _

</llo_original>
